<compile_context>
chip_gen: v6e
topology: v6e:2x2x1
jax: 0.10.0
libtpu: 0.0.40
codegen_flags: <defaults>
</compile_context>

<pallas_src>
import jax
import jax.numpy as jnp
from jax import lax
from jax.experimental import pallas as pl
from jax.experimental.pallas import tpu as pltpu


def _round_up(v, m):
    return (v + m - 1) // m * m


def _pad_gate_cols(w, h, hp):
    """Pad each of the 3 PyTorch gate blocks [r|z|n] along the last axis from h to hp (zeros)."""
    parts = []
    for g in range(3):
        blk = w[..., g * h:(g + 1) * h]
        pad = [(0, 0)] * (blk.ndim - 1) + [(0, hp - h)]
        parts.append(jnp.pad(blk, pad))
    return jnp.concatenate(parts, axis=-1)


def _choose_batch_chunking(batch):
    """Pad batch to a bf16-friendly multiple of 16 and split into >=2 grid chunks
    (so the 'parallel' axis can use both v7x TensorCores); cap per-chunk M at 128."""
    bp = max(_round_up(batch, 16), 32)
    for cand in (128, 112, 96, 80, 64, 48, 32, 16):
        if bp % cand == 0 and bp // cand >= 2:
            return bp, cand
    return bp, 16  # unreachable: bp is a multiple of 16 and >= 32


def _choose_time_chunk(T):
    """Chunk length for the hoisted gi projection (bounds the f32 gi scratch)."""
    if T <= 64:
        return T
    for cand in range(64, 1, -1):
        if T % cand == 0:
            return cand
    return T  # prime T > 64: keep whole sequence resident


def _vmem_limit_bytes():
    cap = 128 * 1024 * 1024
    try:
        cap = int(pltpu.get_tpu_info().vmem_capacity_bytes)
    except Exception:
        pass
    return min(cap * 3 // 4, 100 * 1024 * 1024)


def _const_spec(shape):
    """BlockSpec for an input whose block is constant across the grid: single-buffered."""
    ndim = len(shape)
    index_map = lambda j: (0,) * ndim
    try:
        return pl.BlockSpec(shape, index_map, pipeline_mode=pl.Buffered(1))
    except TypeError:  # older BlockSpec without pipeline_mode kwarg
        return pl.BlockSpec(shape, index_map)


# ------------------------------------------------------------------ fused GRU + heads kernel
def _gru_fused_kernel(x_ref, wih0_ref, wihr_ref, whh_ref, bgi_ref, bhn_ref,
                      whead_ref, bhead_ref, out_ref, act_ref, gi_ref):
    """One batch chunk: all GRU layers over the whole sequence + fused dense heads.

    x_ref:     (T*BB, F)        time-major flattened padded input chunk (bf16)
    wih0_ref:  (F, 3Hp)         layer-0 W_ih^T, gate order [r,z,n], bf16
    wihr_ref:  (max(L-1,1), Hp, 3Hp)  W_ih^T of layers >= 1 (dummy if L == 1), bf16
    whh_ref:   (L, Hp, 3Hp)     stacked W_hh^T, bf16
    bgi_ref:   (L, 1, 3Hp)      b_ih (+ b_hh folded for r,z gates), f32
    bhn_ref:   (L, 1, Hp)       b_hh of the n gate, f32
    whead_ref: (Hp, HOUT)       fused [soh | rul] head weights, bf16
    bhead_ref: (1, HOUT)        fused head bias, f32
    out_ref:   (BB, HOUT)       fused head output (f32)
    act_ref:   (T*BB or 16, Hp) VMEM scratch, inter-layer activations (bf16)
    gi_ref:    (Tc*BB, 3Hp)     VMEM scratch, hoisted input projection of one time chunk (f32)
    """
    L = whh_ref.shape[0]
    Hp = whh_ref.shape[1]
    BB = out_ref.shape[0]
    T = x_ref.shape[0] // BB
    Tc = gi_ref.shape[0] // BB
    num_chunks = T // Tc

    h = jnp.zeros((BB, Hp), jnp.float32)
    for l in range(L):
        whh_l = whh_ref[l]                                    # (Hp, 3Hp) bf16
        bgi_l = bgi_ref[l]                                    # (1, 3Hp)  f32
        bhn_l = jnp.broadcast_to(bhn_ref[l], (BB, Hp))        # hoisted broadcast, f32
        write_act = (l != L - 1)

        def gru_step(gi, gh, h_in, _bhn=bhn_l):
            # r consumed immediately; blend rewritten as n + z*(h - n) to cut live temps.
            r = jax.nn.sigmoid(gi[:, 0:Hp] + gh[:, 0:Hp])
            n = jnp.tanh(gi[:, 2 * Hp:3 * Hp] + r * (gh[:, 2 * Hp:3 * Hp] + _bhn))
            z = jax.nn.sigmoid(gi[:, Hp:2 * Hp] + gh[:, Hp:2 * Hp])
            return n + z * (h_in - n)

        h = jnp.zeros((BB, Hp), jnp.float32)
        for c in range(num_chunks):
            base = c * Tc * BB                                # static, multiple of BB (>=16)

            # Hoisted input-to-hidden projection for this time chunk: one MXU GEMM,
            # bf16 operands, f32 accumulate, biases folded in (added once, not per step).
            if l == 0:
                inp = x_ref[base:base + Tc * BB, :]           # (Tc*BB, F) bf16
                wih_l = wih0_ref[...]                         # (F, 3Hp)
            else:
                inp = act_ref[base:base + Tc * BB, :]         # (Tc*BB, Hp) bf16
                wih_l = wihr_ref[l - 1]                       # (Hp, 3Hp)
            gi_ref[...] = jnp.dot(inp, wih_l,
                                  preferred_element_type=jnp.float32) + bgi_l

            if Tc <= 16:
                # Short chunk: fully unrolled (static offsets, lane/sublane aligned).
                for t in range(Tc):
                    r0 = t * BB
                    gi = gi_ref[r0:r0 + BB, :]
                    gh = jnp.dot(h.astype(jnp.bfloat16), whh_l,
                                 preferred_element_type=jnp.float32)
                    h = gru_step(gi, gh, h)
                    if write_act:
                        act_ref[base + r0:base + r0 + BB, :] = h.astype(act_ref.dtype)
            else:
                # Longer chunk: bounded-unroll fori_loop to keep vreg live ranges in check.
                def body(t, h_in, _base=base, _whh=whh_l, _write=write_act):
                    r0 = pl.multiple_of(t * BB, BB)
                    gi = gi_ref[pl.ds(r0, BB), :]
                    gh = jnp.dot(h_in.astype(jnp.bfloat16), _whh,
                                 preferred_element_type=jnp.float32)
                    h_new = gru_step(gi, gh, h_in)
                    if _write:
                        act_ref[pl.ds(pl.multiple_of(_base + t * BB, BB), BB), :] = (
                            h_new.astype(act_ref.dtype))
                    return h_new

                h = lax.fori_loop(0, Tc, body, h, unroll=4)

    # Fused dense heads ([soh | rul] in one lane-padded GEMM) as the last-layer epilogue.
    out_ref[...] = (
        jnp.dot(h.astype(jnp.bfloat16), whead_ref[...],
                preferred_element_type=jnp.float32)
        + bhead_ref[...]
    )


# ------------------------------------------------------------------ parameter packing
def pack_params(params):
    """Pad/stack PyTorch-layout GRU + head params into TPU tile-aligned bf16 matmul operands.

    NOTE: every padded weight/bias entry is exactly zero (via jnp.pad / jnp.zeros); the kernel's
    padded-lane correctness relies on this invariant.
    """
    layers = params["gru_layers"]
    L = len(layers)
    H = layers[0]["whh_t"].shape[0]
    I0 = layers[0]["wih_t"].shape[0]
    P = params["wsoh_t"].shape[1]

    Hp = _round_up(H, 128)
    F = _round_up(I0, 128)
    HOUT = _round_up(P + 1, 128)

    def pack_layer(lyr, in_rows):
        wih = _pad_gate_cols(lyr["wih_t"], H, Hp)              # (in, 3Hp)
        wih = jnp.pad(wih, ((0, in_rows - wih.shape[0]), (0, 0)))
        whh = _pad_gate_cols(lyr["whh_t"], H, Hp)
        whh = jnp.pad(whh, ((0, Hp - H), (0, 0)))              # (Hp, 3Hp)
        bih, bhh = lyr["bih"], lyr["bhh"]                      # (1, 3H) each
        # fold b_hh into b_ih for the r,z gates (they only ever see gi+gh); keep b_hh_n separate
        b_comb = bih + jnp.concatenate(
            [bhh[:, :2 * H], jnp.zeros((1, H), bhh.dtype)], axis=-1)
        bgi = _pad_gate_cols(b_comb, H, Hp)                    # (1, 3Hp)
        bhn = jnp.pad(bhh[:, 2 * H:], ((0, 0), (0, Hp - H)))   # (1, Hp)
        return wih, whh, bgi, bhn

    wih0, whh0, bgi0, bhn0 = pack_layer(layers[0], F)
    whh_all, bgi_all, bhn_all = [whh0], [bgi0], [bhn0]
    wihr_all = []
    for lyr in layers[1:]:
        wih, whh, bgi, bhn = pack_layer(lyr, Hp)
        wihr_all.append(wih)
        whh_all.append(whh)
        bgi_all.append(bgi)
        bhn_all.append(bhn)
    if not wihr_all:                                           # L == 1: dummy, never read
        wihr_all.append(jnp.zeros((Hp, 3 * Hp), jnp.float32))

    whead = jnp.zeros((Hp, HOUT), jnp.float32)
    whead = whead.at[:H, :P].set(params["wsoh_t"])
    whead = whead.at[:H, P:P + 1].set(params["wrul_t"])
    bhead = jnp.zeros((1, HOUT), jnp.float32)
    bhead = bhead.at[:, :P].set(params["bsoh"])
    bhead = bhead.at[:, P:P + 1].set(params["brul"])

    return {
        "wih0": wih0.astype(jnp.bfloat16),                     # (F, 3Hp)
        "wihr": jnp.stack(wihr_all).astype(jnp.bfloat16),      # (max(L-1,1), Hp, 3Hp)
        "whh": jnp.stack(whh_all).astype(jnp.bfloat16),        # (L, Hp, 3Hp)
        "bgi": jnp.stack(bgi_all),                             # (L, 1, 3Hp) f32
        "bhn": jnp.stack(bhn_all),                             # (L, 1, Hp)  f32
        "whead": whead.astype(jnp.bfloat16),                   # (Hp, HOUT)
        "bhead": bhead,                                        # (1, HOUT)   f32
        "num_layers": L,
    }


# ------------------------------------------------------------------ forward wrapper
def gru_forward_packed(x, packed, pred_len):
    """x: (B, T, input_size) batch_first. Returns (soh (B, pred_len), rul (B,))."""
    B, T, I = x.shape
    F, G = packed["wih0"].shape
    L, Hp, _ = packed["whh"].shape
    Lr = packed["wihr"].shape[0]
    HOUT = packed["whead"].shape[1]
    P = pred_len

    Bp, BB = _choose_batch_chunking(B)
    nc = Bp // BB
    Tc = _choose_time_chunk(T)

    # batch_first -> per-chunk time-major, bf16, padded; flattened so per-step slices are
    # sublane-aligned:  row = chunk*(T*BB) + t*BB + local_batch
    xp = jnp.pad(x, ((0, Bp - B), (0, 0), (0, F - I))).astype(jnp.bfloat16)
    xp = xp.reshape(nc, BB, T, F).transpose(0, 2, 1, 3).reshape(nc * T * BB, F)

    act_rows = T * BB if L > 1 else 16

    flops = (2 * T * Bp * G * (F + Hp * (L - 1))    # hoisted input projections
             + 2 * T * Bp * G * Hp * L              # recurrent matmuls
             + 2 * Bp * Hp * HOUT)                  # fused heads
    transcendentals = 3 * L * T * Bp * Hp
    bytes_accessed = (xp.size * 2
                      + packed["wih0"].size * 2 + packed["wihr"].size * 2
                      + packed["whh"].size * 2 + packed["whead"].size * 2
                      + packed["bgi"].size * 4 + packed["bhn"].size * 4
                      + packed["bhead"].size * 4 + Bp * HOUT * 4)

    head = pl.pallas_call(
        _gru_fused_kernel,
        out_shape=jax.ShapeDtypeStruct((Bp, HOUT), jnp.float32),
        grid=(nc,),
        in_specs=[
            pl.BlockSpec((T * BB, F), lambda j: (j, 0)),       # x (one batch chunk)
            _const_spec((F, G)),                               # layer-0 W_ih^T
            _const_spec((Lr, Hp, G)),                          # layers>0 W_ih^T
            _const_spec((L, Hp, G)),                           # W_hh^T (stacked)
            _const_spec((L, 1, G)),                            # folded gi bias
            _const_spec((L, 1, Hp)),                           # b_hh (n gate)
            _const_spec((Hp, HOUT)),                           # fused head weight
            _const_spec((1, HOUT)),                            # fused head bias
        ],
        out_specs=pl.BlockSpec((BB, HOUT), lambda j: (j, 0)),
        scratch_shapes=[
            pltpu.VMEM((act_rows, Hp), jnp.bfloat16),          # inter-layer activations (bf16)
            pltpu.VMEM((Tc * BB, G), jnp.float32),             # hoisted gi of one time chunk
        ],
        compiler_params=pltpu.CompilerParams(
            dimension_semantics=("parallel",),                 # batch chunks -> 2 TCs on v7x
            vmem_limit_bytes=_vmem_limit_bytes()),
        cost_estimate=pl.CostEstimate(flops=flops,
                                      transcendentals=transcendentals,
                                      bytes_accessed=bytes_accessed),
    )(xp, packed["wih0"], packed["wihr"], packed["whh"], packed["bgi"],
      packed["bhn"], packed["whead"], packed["bhead"])

    soh = head[:B, :P]
    rul = head[:B, P]
    return soh, rul


# ------------------------------------------------------------------ pure-JAX reference
def gru_model_reference(x, params):
    """Mirrors the kernel's numerics: bf16 matmul operands, f32 accumulate, f32 gate math."""
    def bdot(a, b):
        return jnp.dot(a.astype(jnp.bfloat16), b.astype(jnp.bfloat16),
                       preferred_element_type=jnp.float32)

    B, T, _ = x.shape
    inp = x
    for layer in params["gru_layers"]:
        H = layer["whh_t"].shape[0]
        h = jnp.zeros((B, H), jnp.float32)
        outs = []
        for t in range(T):
            gi = bdot(inp[:, t, :], layer["wih_t"]) + layer["bih"]
            gh = bdot(h, layer["whh_t"]) + layer["bhh"]
            r = jax.nn.sigmoid(gi[:, 0:H] + gh[:, 0:H])
            z = jax.nn.sigmoid(gi[:, H:2 * H] + gh[:, H:2 * H])
            n = jnp.tanh(gi[:, 2 * H:3 * H] + r * gh[:, 2 * H:3 * H])
            h = (1.0 - z) * n + z * h
            outs.append(h)
        inp = jnp.stack(outs, axis=1)
    h_last = inp[:, -1, :]
    soh = bdot(h_last, params["wsoh_t"]) + params["bsoh"]
    rul = bdot(h_last, params["wrul_t"]) + params["brul"]
    return soh, jnp.squeeze(rul, axis=-1)


# ------------------------------------------------------------------ parameter init
def init_params(key, input_size, hidden_size, pred_len, num_layers):
    params = {"gru_layers": []}
    k = 1.0 / jnp.sqrt(hidden_size)
    for l in range(num_layers):
        in_sz = input_size if l == 0 else hidden_size
        key, k1, k2, k3, k4 = jax.random.split(key, 5)
        params["gru_layers"].append({
            # stored already transposed: (in, 3H) / (H, 3H), gate order [r, z, n]
            "wih_t": jax.random.uniform(k1, (in_sz, 3 * hidden_size), jnp.float32, -k, k),
            "whh_t": jax.random.uniform(k2, (hidden_size, 3 * hidden_size), jnp.float32, -k, k),
            "bih": jax.random.uniform(k3, (1, 3 * hidden_size), jnp.float32, -k, k),
            "bhh": jax.random.uniform(k4, (1, 3 * hidden_size), jnp.float32, -k, k),
        })
    key, k5, k6, k7, k8 = jax.random.split(key, 5)
    params["wsoh_t"] = jax.random.uniform(k5, (hidden_size, pred_len), jnp.float32, -k, k)
    params["bsoh"] = jax.random.uniform(k6, (1, pred_len), jnp.float32, -k, k)
    params["wrul_t"] = jax.random.uniform(k7, (hidden_size, 1), jnp.float32, -k, k)
    params["brul"] = jax.random.uniform(k8, (1, 1), jnp.float32, -k, k)
    return params


if __name__ == "__main__":
    # Small shapes consistent with the module's forward:
    batch, seq, input_size = 2, 8, 4
    hidden_size, pred_len, num_layers = 32, 4, 2

    key = jax.random.PRNGKey(0)
    key, kx = jax.random.split(key)
    x = jax.random.normal(kx, (batch, seq, input_size), jnp.float32)
    params = init_params(key, input_size, hidden_size, pred_len, num_layers)

    packed = pack_params(params)
    packed.pop("num_layers")  # not needed by the wrapper (kept pytree leaf-only)
    fwd = jax.jit(gru_forward_packed, static_argnames=("pred_len",))
    soh, rul = fwd(x, packed, pred_len=pred_len)
    soh = jax.block_until_ready(soh)
    rul = jax.block_until_ready(rul)

    soh_ref, rul_ref = gru_model_reference(x, params)
    assert soh.shape == (batch, pred_len) and rul.shape == (batch,)
    assert jnp.allclose(soh, soh_ref, atol=5e-3, rtol=5e-3), (
        "soh max abs diff: %g" % float(jnp.max(jnp.abs(soh - soh_ref))))
    assert jnp.allclose(rul, rul_ref, atol=5e-3, rtol=5e-3), (
        "rul max abs diff: %g" % float(jnp.max(jnp.abs(rul - rul_ref))))

    print("KERNEL_OK")
</pallas_src>

<mosaic_0001>
module attributes {stable_mosaic.version = 11 : i64} {
  func.func @_gru_fused_kernel(%arg0: i32, %arg1: memref<128x128xbf16, #tpu.memory_space<vmem>>, %arg2: memref<128x384xbf16, #tpu.memory_space<vmem>>, %arg3: memref<1x128x384xbf16, #tpu.memory_space<vmem>>, %arg4: memref<2x128x384xbf16, #tpu.memory_space<vmem>>, %arg5: memref<2x1x384xf32, #tpu.memory_space<vmem>>, %arg6: memref<2x1x128xf32, #tpu.memory_space<vmem>>, %arg7: memref<128x128xbf16, #tpu.memory_space<vmem>>, %arg8: memref<1x128xf32, #tpu.memory_space<vmem>>, %arg9: memref<16x128xf32, #tpu.memory_space<vmem>>, %arg10: memref<128x128xbf16, #tpu.memory_space<vmem>>, %arg11: memref<128x384xf32, #tpu.memory_space<vmem>>) attributes {dimension_semantics = [#tpu.dimension_semantics<parallel>], iteration_bounds = array<i64: 2>, scalar_prefetch = 0 : i64, scratch_operands = 2 : i64, tpu.core_type = #tpu.core_type<tc>, window_params = [{transform_indices = @transform_0, window_bounds = array<i64: 128, 128>}, {pipeline_mode = #tpu.pipeline_mode<synchronous>, transform_indices = @transform_1, window_bounds = array<i64: 128, 384>}, {pipeline_mode = #tpu.pipeline_mode<synchronous>, transform_indices = @transform_2, window_bounds = array<i64: 1, 128, 384>}, {pipeline_mode = #tpu.pipeline_mode<synchronous>, transform_indices = @transform_3, window_bounds = array<i64: 2, 128, 384>}, {pipeline_mode = #tpu.pipeline_mode<synchronous>, transform_indices = @transform_4, window_bounds = array<i64: 2, 1, 384>}, {pipeline_mode = #tpu.pipeline_mode<synchronous>, transform_indices = @transform_5, window_bounds = array<i64: 2, 1, 128>}, {pipeline_mode = #tpu.pipeline_mode<synchronous>, transform_indices = @transform_6, window_bounds = array<i64: 128, 128>}, {pipeline_mode = #tpu.pipeline_mode<synchronous>, transform_indices = @transform_7, window_bounds = array<i64: 1, 128>}, {transform_indices = @transform_8, window_bounds = array<i64: 16, 128>}]} {
    %c0 = arith.constant 0 : index
    %c0_0 = arith.constant 0 : index
    %c0_1 = arith.constant 0 : index
    %0 = vector.load %arg4[%c0, %c0_0, %c0_1] : memref<2x128x384xbf16, #tpu.memory_space<vmem>>, vector<1x128x384xbf16>
    %1 = vector.shape_cast %0 : vector<1x128x384xbf16> to vector<128x384xbf16>
    %c0_2 = arith.constant 0 : index
    %c0_3 = arith.constant 0 : index
    %c0_4 = arith.constant 0 : index
    %2 = vector.load %arg5[%c0_2, %c0_3, %c0_4] : memref<2x1x384xf32, #tpu.memory_space<vmem>>, vector<1x1x384xf32>
    %3 = vector.shape_cast %2 : vector<1x1x384xf32> to vector<1x384xf32>
    %c0_5 = arith.constant 0 : index
    %c0_6 = arith.constant 0 : index
    %c0_7 = arith.constant 0 : index
    %4 = vector.load %arg6[%c0_5, %c0_6, %c0_7] : memref<2x1x128xf32, #tpu.memory_space<vmem>>, vector<1x1x128xf32>
    %5 = vector.shape_cast %4 : vector<1x1x128xf32> to vector<1x128xf32>
    %6 = vector.shape_cast %5 : vector<1x128xf32> to vector<1x128xf32>
    %7 = vector.broadcast %6 : vector<1x128xf32> to vector<16x128xf32>
    %cst = arith.constant 0.000000e+00 : f32
    %8 = vector.broadcast %cst : f32 to vector<16x128xf32>
    %c0_8 = arith.constant 0 : index
    %c0_9 = arith.constant 0 : index
    %9 = vector.load %arg1[%c0_8, %c0_9] : memref<128x128xbf16, #tpu.memory_space<vmem>>, vector<128x128xbf16>
    %c0_10 = arith.constant 0 : index
    %c0_11 = arith.constant 0 : index
    %10 = vector.load %arg2[%c0_10, %c0_11] : memref<128x384xbf16, #tpu.memory_space<vmem>>, vector<128x384xbf16>
    %cst_12 = arith.constant dense<0.000000e+00> : vector<128x384xf32>
    %11 = tpu.matmul %9, %10, %cst_12 {dimension_numbers = #tpu.dot_dimension_numbers<[1], [0], [0], [1], [0, 0, 1, 1], [], []>} : vector<128x128xbf16>, vector<128x384xbf16>, vector<128x384xf32> -> vector<128x384xf32>
    %12 = vector.broadcast %3 : vector<1x384xf32> to vector<128x384xf32>
    %13 = arith.addf %11, %12 : vector<128x384xf32>
    %c0_13 = arith.constant 0 : index
    %c0_14 = arith.constant 0 : index
    %14 = vector.load %arg11[%c0_13, %c0_14] : memref<128x384xf32, #tpu.memory_space<vmem>>, vector<128x384xf32>
    tpu.vector_store %arg11[%c0_13, %c0_14], %13 {strides = array<i32>} : memref<128x384xf32, #tpu.memory_space<vmem>>, vector<128x384xf32>,
    %c0_15 = arith.constant 0 : index
    %c0_16 = arith.constant 0 : index
    %15 = vector.load %arg11[%c0_15, %c0_16] : memref<128x384xf32, #tpu.memory_space<vmem>>, vector<16x384xf32>
    %16 = arith.truncf %8 : vector<16x128xf32> to vector<16x128xbf16>
    %cst_17 = arith.constant dense<0.000000e+00> : vector<16x384xf32>
    %17 = tpu.matmul %16, %1, %cst_17 {dimension_numbers = #tpu.dot_dimension_numbers<[1], [0], [0], [1], [0, 0, 1, 1], [], []>} : vector<16x128xbf16>, vector<128x384xbf16>, vector<16x384xf32> -> vector<16x384xf32>
    %18 = vector.extract_strided_slice %15 {offsets = [0, 0], sizes = [16, 128], strides = [1, 1]} : vector<16x384xf32> to vector<16x128xf32>
    %19 = vector.extract_strided_slice %17 {offsets = [0, 0], sizes = [16, 128], strides = [1, 1]} : vector<16x384xf32> to vector<16x128xf32>
    %20 = arith.addf %18, %19 : vector<16x128xf32>
    %21 = arith.negf %20 : vector<16x128xf32>
    %22 = math.exp %21 : vector<16x128xf32>
    %cst_18 = arith.constant 1.000000e+00 : f32
    %23 = vector.broadcast %cst_18 : f32 to vector<16x128xf32>
    %24 = arith.addf %23, %22 : vector<16x128xf32>
    %25 = arith.divf %23, %24 : vector<16x128xf32>
    %26 = vector.extract_strided_slice %15 {offsets = [0, 256], sizes = [16, 128], strides = [1, 1]} : vector<16x384xf32> to vector<16x128xf32>
    %27 = vector.extract_strided_slice %17 {offsets = [0, 256], sizes = [16, 128], strides = [1, 1]} : vector<16x384xf32> to vector<16x128xf32>
    %28 = arith.addf %27, %7 : vector<16x128xf32>
    %29 = arith.mulf %25, %28 : vector<16x128xf32>
    %30 = arith.addf %26, %29 : vector<16x128xf32>
    %31 = math.tanh %30 : vector<16x128xf32>
    %32 = vector.extract_strided_slice %15 {offsets = [0, 128], sizes = [16, 128], strides = [1, 1]} : vector<16x384xf32> to vector<16x128xf32>
    %33 = vector.extract_strided_slice %17 {offsets = [0, 128], sizes = [16, 128], strides = [1, 1]} : vector<16x384xf32> to vector<16x128xf32>
    %34 = arith.addf %32, %33 : vector<16x128xf32>
    %35 = arith.negf %34 : vector<16x128xf32>
    %36 = math.exp %35 : vector<16x128xf32>
    %cst_19 = arith.constant 1.000000e+00 : f32
    %37 = vector.broadcast %cst_19 : f32 to vector<16x128xf32>
    %38 = arith.addf %37, %36 : vector<16x128xf32>
    %39 = arith.divf %37, %38 : vector<16x128xf32>
    %40 = arith.subf %8, %31 : vector<16x128xf32>
    %41 = arith.mulf %39, %40 : vector<16x128xf32>
    %42 = arith.addf %31, %41 : vector<16x128xf32>
    %43 = arith.truncf %42 : vector<16x128xf32> to vector<16x128xbf16>
    %c0_20 = arith.constant 0 : index
    %c0_21 = arith.constant 0 : index
    %44 = vector.load %arg10[%c0_20, %c0_21] : memref<128x128xbf16, #tpu.memory_space<vmem>>, vector<16x128xbf16>
    tpu.vector_store %arg10[%c0_20, %c0_21], %43 {strides = array<i32>} : memref<128x128xbf16, #tpu.memory_space<vmem>>, vector<16x128xbf16>,
    %c16 = arith.constant 16 : index
    %c0_22 = arith.constant 0 : index
    %45 = vector.load %arg11[%c16, %c0_22] : memref<128x384xf32, #tpu.memory_space<vmem>>, vector<16x384xf32>
    %46 = arith.truncf %42 : vector<16x128xf32> to vector<16x128xbf16>
    %cst_23 = arith.constant dense<0.000000e+00> : vector<16x384xf32>
    %47 = tpu.matmul %46, %1, %cst_23 {dimension_numbers = #tpu.dot_dimension_numbers<[1], [0], [0], [1], [0, 0, 1, 1], [], []>} : vector<16x128xbf16>, vector<128x384xbf16>, vector<16x384xf32> -> vector<16x384xf32>
    %48 = vector.extract_strided_slice %45 {offsets = [0, 0], sizes = [16, 128], strides = [1, 1]} : vector<16x384xf32> to vector<16x128xf32>
    %49 = vector.extract_strided_slice %47 {offsets = [0, 0], sizes = [16, 128], strides = [1, 1]} : vector<16x384xf32> to vector<16x128xf32>
    %50 = arith.addf %48, %49 : vector<16x128xf32>
    %51 = arith.negf %50 : vector<16x128xf32>
    %52 = math.exp %51 : vector<16x128xf32>
    %cst_24 = arith.constant 1.000000e+00 : f32
    %53 = vector.broadcast %cst_24 : f32 to vector<16x128xf32>
    %54 = arith.addf %53, %52 : vector<16x128xf32>
    %55 = arith.divf %53, %54 : vector<16x128xf32>
    %56 = vector.extract_strided_slice %45 {offsets = [0, 256], sizes = [16, 128], strides = [1, 1]} : vector<16x384xf32> to vector<16x128xf32>
    %57 = vector.extract_strided_slice %47 {offsets = [0, 256], sizes = [16, 128], strides = [1, 1]} : vector<16x384xf32> to vector<16x128xf32>
    %58 = arith.addf %57, %7 : vector<16x128xf32>
    %59 = arith.mulf %55, %58 : vector<16x128xf32>
    %60 = arith.addf %56, %59 : vector<16x128xf32>
    %61 = math.tanh %60 : vector<16x128xf32>
    %62 = vector.extract_strided_slice %45 {offsets = [0, 128], sizes = [16, 128], strides = [1, 1]} : vector<16x384xf32> to vector<16x128xf32>
    %63 = vector.extract_strided_slice %47 {offsets = [0, 128], sizes = [16, 128], strides = [1, 1]} : vector<16x384xf32> to vector<16x128xf32>
    %64 = arith.addf %62, %63 : vector<16x128xf32>
    %65 = arith.negf %64 : vector<16x128xf32>
    %66 = math.exp %65 : vector<16x128xf32>
    %cst_25 = arith.constant 1.000000e+00 : f32
    %67 = vector.broadcast %cst_25 : f32 to vector<16x128xf32>
    %68 = arith.addf %67, %66 : vector<16x128xf32>
    %69 = arith.divf %67, %68 : vector<16x128xf32>
    %70 = arith.subf %42, %61 : vector<16x128xf32>
    %71 = arith.mulf %69, %70 : vector<16x128xf32>
    %72 = arith.addf %61, %71 : vector<16x128xf32>
    %73 = arith.truncf %72 : vector<16x128xf32> to vector<16x128xbf16>
    %c16_26 = arith.constant 16 : index
    %c0_27 = arith.constant 0 : index
    %74 = vector.load %arg10[%c16_26, %c0_27] : memref<128x128xbf16, #tpu.memory_space<vmem>>, vector<16x128xbf16>
    tpu.vector_store %arg10[%c16_26, %c0_27], %73 {strides = array<i32>} : memref<128x128xbf16, #tpu.memory_space<vmem>>, vector<16x128xbf16>,
    %c32 = arith.constant 32 : index
    %c0_28 = arith.constant 0 : index
    %75 = vector.load %arg11[%c32, %c0_28] : memref<128x384xf32, #tpu.memory_space<vmem>>, vector<16x384xf32>
    %76 = arith.truncf %72 : vector<16x128xf32> to vector<16x128xbf16>
    %cst_29 = arith.constant dense<0.000000e+00> : vector<16x384xf32>
    %77 = tpu.matmul %76, %1, %cst_29 {dimension_numbers = #tpu.dot_dimension_numbers<[1], [0], [0], [1], [0, 0, 1, 1], [], []>} : vector<16x128xbf16>, vector<128x384xbf16>, vector<16x384xf32> -> vector<16x384xf32>
    %78 = vector.extract_strided_slice %75 {offsets = [0, 0], sizes = [16, 128], strides = [1, 1]} : vector<16x384xf32> to vector<16x128xf32>
    %79 = vector.extract_strided_slice %77 {offsets = [0, 0], sizes = [16, 128], strides = [1, 1]} : vector<16x384xf32> to vector<16x128xf32>
    %80 = arith.addf %78, %79 : vector<16x128xf32>
    %81 = arith.negf %80 : vector<16x128xf32>
    %82 = math.exp %81 : vector<16x128xf32>
    %cst_30 = arith.constant 1.000000e+00 : f32
    %83 = vector.broadcast %cst_30 : f32 to vector<16x128xf32>
    %84 = arith.addf %83, %82 : vector<16x128xf32>
    %85 = arith.divf %83, %84 : vector<16x128xf32>
    %86 = vector.extract_strided_slice %75 {offsets = [0, 256], sizes = [16, 128], strides = [1, 1]} : vector<16x384xf32> to vector<16x128xf32>
    %87 = vector.extract_strided_slice %77 {offsets = [0, 256], sizes = [16, 128], strides = [1, 1]} : vector<16x384xf32> to vector<16x128xf32>
    %88 = arith.addf %87, %7 : vector<16x128xf32>
    %89 = arith.mulf %85, %88 : vector<16x128xf32>
    %90 = arith.addf %86, %89 : vector<16x128xf32>
    %91 = math.tanh %90 : vector<16x128xf32>
    %92 = vector.extract_strided_slice %75 {offsets = [0, 128], sizes = [16, 128], strides = [1, 1]} : vector<16x384xf32> to vector<16x128xf32>
    %93 = vector.extract_strided_slice %77 {offsets = [0, 128], sizes = [16, 128], strides = [1, 1]} : vector<16x384xf32> to vector<16x128xf32>
    %94 = arith.addf %92, %93 : vector<16x128xf32>
    %95 = arith.negf %94 : vector<16x128xf32>
    %96 = math.exp %95 : vector<16x128xf32>
    %cst_31 = arith.constant 1.000000e+00 : f32
    %97 = vector.broadcast %cst_31 : f32 to vector<16x128xf32>
    %98 = arith.addf %97, %96 : vector<16x128xf32>
    %99 = arith.divf %97, %98 : vector<16x128xf32>
    %100 = arith.subf %72, %91 : vector<16x128xf32>
    %101 = arith.mulf %99, %100 : vector<16x128xf32>
    %102 = arith.addf %91, %101 : vector<16x128xf32>
    %103 = arith.truncf %102 : vector<16x128xf32> to vector<16x128xbf16>
    %c32_32 = arith.constant 32 : index
    %c0_33 = arith.constant 0 : index
    %104 = vector.load %arg10[%c32_32, %c0_33] : memref<128x128xbf16, #tpu.memory_space<vmem>>, vector<16x128xbf16>
    tpu.vector_store %arg10[%c32_32, %c0_33], %103 {strides = array<i32>} : memref<128x128xbf16, #tpu.memory_space<vmem>>, vector<16x128xbf16>,
    %c48 = arith.constant 48 : index
    %c0_34 = arith.constant 0 : index
    %105 = vector.load %arg11[%c48, %c0_34] : memref<128x384xf32, #tpu.memory_space<vmem>>, vector<16x384xf32>
    %106 = arith.truncf %102 : vector<16x128xf32> to vector<16x128xbf16>
    %cst_35 = arith.constant dense<0.000000e+00> : vector<16x384xf32>
    %107 = tpu.matmul %106, %1, %cst_35 {dimension_numbers = #tpu.dot_dimension_numbers<[1], [0], [0], [1], [0, 0, 1, 1], [], []>} : vector<16x128xbf16>, vector<128x384xbf16>, vector<16x384xf32> -> vector<16x384xf32>
    %108 = vector.extract_strided_slice %105 {offsets = [0, 0], sizes = [16, 128], strides = [1, 1]} : vector<16x384xf32> to vector<16x128xf32>
    %109 = vector.extract_strided_slice %107 {offsets = [0, 0], sizes = [16, 128], strides = [1, 1]} : vector<16x384xf32> to vector<16x128xf32>
    %110 = arith.addf %108, %109 : vector<16x128xf32>
    %111 = arith.negf %110 : vector<16x128xf32>
    %112 = math.exp %111 : vector<16x128xf32>
    %cst_36 = arith.constant 1.000000e+00 : f32
    %113 = vector.broadcast %cst_36 : f32 to vector<16x128xf32>
    %114 = arith.addf %113, %112 : vector<16x128xf32>
    %115 = arith.divf %113, %114 : vector<16x128xf32>
    %116 = vector.extract_strided_slice %105 {offsets = [0, 256], sizes = [16, 128], strides = [1, 1]} : vector<16x384xf32> to vector<16x128xf32>
    %117 = vector.extract_strided_slice %107 {offsets = [0, 256], sizes = [16, 128], strides = [1, 1]} : vector<16x384xf32> to vector<16x128xf32>
    %118 = arith.addf %117, %7 : vector<16x128xf32>
    %119 = arith.mulf %115, %118 : vector<16x128xf32>
    %120 = arith.addf %116, %119 : vector<16x128xf32>
    %121 = math.tanh %120 : vector<16x128xf32>
    %122 = vector.extract_strided_slice %105 {offsets = [0, 128], sizes = [16, 128], strides = [1, 1]} : vector<16x384xf32> to vector<16x128xf32>
    %123 = vector.extract_strided_slice %107 {offsets = [0, 128], sizes = [16, 128], strides = [1, 1]} : vector<16x384xf32> to vector<16x128xf32>
    %124 = arith.addf %122, %123 : vector<16x128xf32>
    %125 = arith.negf %124 : vector<16x128xf32>
    %126 = math.exp %125 : vector<16x128xf32>
    %cst_37 = arith.constant 1.000000e+00 : f32
    %127 = vector.broadcast %cst_37 : f32 to vector<16x128xf32>
    %128 = arith.addf %127, %126 : vector<16x128xf32>
    %129 = arith.divf %127, %128 : vector<16x128xf32>
    %130 = arith.subf %102, %121 : vector<16x128xf32>
    %131 = arith.mulf %129, %130 : vector<16x128xf32>
    %132 = arith.addf %121, %131 : vector<16x128xf32>
    %133 = arith.truncf %132 : vector<16x128xf32> to vector<16x128xbf16>
    %c48_38 = arith.constant 48 : index
    %c0_39 = arith.constant 0 : index
    %134 = vector.load %arg10[%c48_38, %c0_39] : memref<128x128xbf16, #tpu.memory_space<vmem>>, vector<16x128xbf16>
    tpu.vector_store %arg10[%c48_38, %c0_39], %133 {strides = array<i32>} : memref<128x128xbf16, #tpu.memory_space<vmem>>, vector<16x128xbf16>,
    %c64 = arith.constant 64 : index
    %c0_40 = arith.constant 0 : index
    %135 = vector.load %arg11[%c64, %c0_40] : memref<128x384xf32, #tpu.memory_space<vmem>>, vector<16x384xf32>
    %136 = arith.truncf %132 : vector<16x128xf32> to vector<16x128xbf16>
    %cst_41 = arith.constant dense<0.000000e+00> : vector<16x384xf32>
    %137 = tpu.matmul %136, %1, %cst_41 {dimension_numbers = #tpu.dot_dimension_numbers<[1], [0], [0], [1], [0, 0, 1, 1], [], []>} : vector<16x128xbf16>, vector<128x384xbf16>, vector<16x384xf32> -> vector<16x384xf32>
    %138 = vector.extract_strided_slice %135 {offsets = [0, 0], sizes = [16, 128], strides = [1, 1]} : vector<16x384xf32> to vector<16x128xf32>
    %139 = vector.extract_strided_slice %137 {offsets = [0, 0], sizes = [16, 128], strides = [1, 1]} : vector<16x384xf32> to vector<16x128xf32>
    %140 = arith.addf %138, %139 : vector<16x128xf32>
    %141 = arith.negf %140 : vector<16x128xf32>
    %142 = math.exp %141 : vector<16x128xf32>
    %cst_42 = arith.constant 1.000000e+00 : f32
    %143 = vector.broadcast %cst_42 : f32 to vector<16x128xf32>
    %144 = arith.addf %143, %142 : vector<16x128xf32>
    %145 = arith.divf %143, %144 : vector<16x128xf32>
    %146 = vector.extract_strided_slice %135 {offsets = [0, 256], sizes = [16, 128], strides = [1, 1]} : vector<16x384xf32> to vector<16x128xf32>
    %147 = vector.extract_strided_slice %137 {offsets = [0, 256], sizes = [16, 128], strides = [1, 1]} : vector<16x384xf32> to vector<16x128xf32>
    %148 = arith.addf %147, %7 : vector<16x128xf32>
    %149 = arith.mulf %145, %148 : vector<16x128xf32>
    %150 = arith.addf %146, %149 : vector<16x128xf32>
    %151 = math.tanh %150 : vector<16x128xf32>
    %152 = vector.extract_strided_slice %135 {offsets = [0, 128], sizes = [16, 128], strides = [1, 1]} : vector<16x384xf32> to vector<16x128xf32>
    %153 = vector.extract_strided_slice %137 {offsets = [0, 128], sizes = [16, 128], strides = [1, 1]} : vector<16x384xf32> to vector<16x128xf32>
    %154 = arith.addf %152, %153 : vector<16x128xf32>
    %155 = arith.negf %154 : vector<16x128xf32>
    %156 = math.exp %155 : vector<16x128xf32>
    %cst_43 = arith.constant 1.000000e+00 : f32
    %157 = vector.broadcast %cst_43 : f32 to vector<16x128xf32>
    %158 = arith.addf %157, %156 : vector<16x128xf32>
    %159 = arith.divf %157, %158 : vector<16x128xf32>
    %160 = arith.subf %132, %151 : vector<16x128xf32>
    %161 = arith.mulf %159, %160 : vector<16x128xf32>
    %162 = arith.addf %151, %161 : vector<16x128xf32>
    %163 = arith.truncf %162 : vector<16x128xf32> to vector<16x128xbf16>
    %c64_44 = arith.constant 64 : index
    %c0_45 = arith.constant 0 : index
    %164 = vector.load %arg10[%c64_44, %c0_45] : memref<128x128xbf16, #tpu.memory_space<vmem>>, vector<16x128xbf16>
    tpu.vector_store %arg10[%c64_44, %c0_45], %163 {strides = array<i32>} : memref<128x128xbf16, #tpu.memory_space<vmem>>, vector<16x128xbf16>,
    %c80 = arith.constant 80 : index
    %c0_46 = arith.constant 0 : index
    %165 = vector.load %arg11[%c80, %c0_46] : memref<128x384xf32, #tpu.memory_space<vmem>>, vector<16x384xf32>
    %166 = arith.truncf %162 : vector<16x128xf32> to vector<16x128xbf16>
    %cst_47 = arith.constant dense<0.000000e+00> : vector<16x384xf32>
    %167 = tpu.matmul %166, %1, %cst_47 {dimension_numbers = #tpu.dot_dimension_numbers<[1], [0], [0], [1], [0, 0, 1, 1], [], []>} : vector<16x128xbf16>, vector<128x384xbf16>, vector<16x384xf32> -> vector<16x384xf32>
    %168 = vector.extract_strided_slice %165 {offsets = [0, 0], sizes = [16, 128], strides = [1, 1]} : vector<16x384xf32> to vector<16x128xf32>
    %169 = vector.extract_strided_slice %167 {offsets = [0, 0], sizes = [16, 128], strides = [1, 1]} : vector<16x384xf32> to vector<16x128xf32>
    %170 = arith.addf %168, %169 : vector<16x128xf32>
    %171 = arith.negf %170 : vector<16x128xf32>
    %172 = math.exp %171 : vector<16x128xf32>
    %cst_48 = arith.constant 1.000000e+00 : f32
    %173 = vector.broadcast %cst_48 : f32 to vector<16x128xf32>
    %174 = arith.addf %173, %172 : vector<16x128xf32>
    %175 = arith.divf %173, %174 : vector<16x128xf32>
    %176 = vector.extract_strided_slice %165 {offsets = [0, 256], sizes = [16, 128], strides = [1, 1]} : vector<16x384xf32> to vector<16x128xf32>
    %177 = vector.extract_strided_slice %167 {offsets = [0, 256], sizes = [16, 128], strides = [1, 1]} : vector<16x384xf32> to vector<16x128xf32>
    %178 = arith.addf %177, %7 : vector<16x128xf32>
    %179 = arith.mulf %175, %178 : vector<16x128xf32>
    %180 = arith.addf %176, %179 : vector<16x128xf32>
    %181 = math.tanh %180 : vector<16x128xf32>
    %182 = vector.extract_strided_slice %165 {offsets = [0, 128], sizes = [16, 128], strides = [1, 1]} : vector<16x384xf32> to vector<16x128xf32>
    %183 = vector.extract_strided_slice %167 {offsets = [0, 128], sizes = [16, 128], strides = [1, 1]} : vector<16x384xf32> to vector<16x128xf32>
    %184 = arith.addf %182, %183 : vector<16x128xf32>
    %185 = arith.negf %184 : vector<16x128xf32>
    %186 = math.exp %185 : vector<16x128xf32>
    %cst_49 = arith.constant 1.000000e+00 : f32
    %187 = vector.broadcast %cst_49 : f32 to vector<16x128xf32>
    %188 = arith.addf %187, %186 : vector<16x128xf32>
    %189 = arith.divf %187, %188 : vector<16x128xf32>
    %190 = arith.subf %162, %181 : vector<16x128xf32>
    %191 = arith.mulf %189, %190 : vector<16x128xf32>
    %192 = arith.addf %181, %191 : vector<16x128xf32>
    %193 = arith.truncf %192 : vector<16x128xf32> to vector<16x128xbf16>
    %c80_50 = arith.constant 80 : index
    %c0_51 = arith.constant 0 : index
    %194 = vector.load %arg10[%c80_50, %c0_51] : memref<128x128xbf16, #tpu.memory_space<vmem>>, vector<16x128xbf16>
    tpu.vector_store %arg10[%c80_50, %c0_51], %193 {strides = array<i32>} : memref<128x128xbf16, #tpu.memory_space<vmem>>, vector<16x128xbf16>,
    %c96 = arith.constant 96 : index
    %c0_52 = arith.constant 0 : index
    %195 = vector.load %arg11[%c96, %c0_52] : memref<128x384xf32, #tpu.memory_space<vmem>>, vector<16x384xf32>
    %196 = arith.truncf %192 : vector<16x128xf32> to vector<16x128xbf16>
    %cst_53 = arith.constant dense<0.000000e+00> : vector<16x384xf32>
    %197 = tpu.matmul %196, %1, %cst_53 {dimension_numbers = #tpu.dot_dimension_numbers<[1], [0], [0], [1], [0, 0, 1, 1], [], []>} : vector<16x128xbf16>, vector<128x384xbf16>, vector<16x384xf32> -> vector<16x384xf32>
    %198 = vector.extract_strided_slice %195 {offsets = [0, 0], sizes = [16, 128], strides = [1, 1]} : vector<16x384xf32> to vector<16x128xf32>
    %199 = vector.extract_strided_slice %197 {offsets = [0, 0], sizes = [16, 128], strides = [1, 1]} : vector<16x384xf32> to vector<16x128xf32>
    %200 = arith.addf %198, %199 : vector<16x128xf32>
    %201 = arith.negf %200 : vector<16x128xf32>
    %202 = math.exp %201 : vector<16x128xf32>
    %cst_54 = arith.constant 1.000000e+00 : f32
    %203 = vector.broadcast %cst_54 : f32 to vector<16x128xf32>
    %204 = arith.addf %203, %202 : vector<16x128xf32>
    %205 = arith.divf %203, %204 : vector<16x128xf32>
    %206 = vector.extract_strided_slice %195 {offsets = [0, 256], sizes = [16, 128], strides = [1, 1]} : vector<16x384xf32> to vector<16x128xf32>
    %207 = vector.extract_strided_slice %197 {offsets = [0, 256], sizes = [16, 128], strides = [1, 1]} : vector<16x384xf32> to vector<16x128xf32>
    %208 = arith.addf %207, %7 : vector<16x128xf32>
    %209 = arith.mulf %205, %208 : vector<16x128xf32>
    %210 = arith.addf %206, %209 : vector<16x128xf32>
    %211 = math.tanh %210 : vector<16x128xf32>
    %212 = vector.extract_strided_slice %195 {offsets = [0, 128], sizes = [16, 128], strides = [1, 1]} : vector<16x384xf32> to vector<16x128xf32>
    %213 = vector.extract_strided_slice %197 {offsets = [0, 128], sizes = [16, 128], strides = [1, 1]} : vector<16x384xf32> to vector<16x128xf32>
    %214 = arith.addf %212, %213 : vector<16x128xf32>
    %215 = arith.negf %214 : vector<16x128xf32>
    %216 = math.exp %215 : vector<16x128xf32>
    %cst_55 = arith.constant 1.000000e+00 : f32
    %217 = vector.broadcast %cst_55 : f32 to vector<16x128xf32>
    %218 = arith.addf %217, %216 : vector<16x128xf32>
    %219 = arith.divf %217, %218 : vector<16x128xf32>
    %220 = arith.subf %192, %211 : vector<16x128xf32>
    %221 = arith.mulf %219, %220 : vector<16x128xf32>
    %222 = arith.addf %211, %221 : vector<16x128xf32>
    %223 = arith.truncf %222 : vector<16x128xf32> to vector<16x128xbf16>
    %c96_56 = arith.constant 96 : index
    %c0_57 = arith.constant 0 : index
    %224 = vector.load %arg10[%c96_56, %c0_57] : memref<128x128xbf16, #tpu.memory_space<vmem>>, vector<16x128xbf16>
    tpu.vector_store %arg10[%c96_56, %c0_57], %223 {strides = array<i32>} : memref<128x128xbf16, #tpu.memory_space<vmem>>, vector<16x128xbf16>,
    %c112 = arith.constant 112 : index
    %c0_58 = arith.constant 0 : index
    %225 = vector.load %arg11[%c112, %c0_58] : memref<128x384xf32, #tpu.memory_space<vmem>>, vector<16x384xf32>
    %226 = arith.truncf %222 : vector<16x128xf32> to vector<16x128xbf16>
    %cst_59 = arith.constant dense<0.000000e+00> : vector<16x384xf32>
    %227 = tpu.matmul %226, %1, %cst_59 {dimension_numbers = #tpu.dot_dimension_numbers<[1], [0], [0], [1], [0, 0, 1, 1], [], []>} : vector<16x128xbf16>, vector<128x384xbf16>, vector<16x384xf32> -> vector<16x384xf32>
    %228 = vector.extract_strided_slice %225 {offsets = [0, 0], sizes = [16, 128], strides = [1, 1]} : vector<16x384xf32> to vector<16x128xf32>
    %229 = vector.extract_strided_slice %227 {offsets = [0, 0], sizes = [16, 128], strides = [1, 1]} : vector<16x384xf32> to vector<16x128xf32>
    %230 = arith.addf %228, %229 : vector<16x128xf32>
    %231 = arith.negf %230 : vector<16x128xf32>
    %232 = math.exp %231 : vector<16x128xf32>
    %cst_60 = arith.constant 1.000000e+00 : f32
    %233 = vector.broadcast %cst_60 : f32 to vector<16x128xf32>
    %234 = arith.addf %233, %232 : vector<16x128xf32>
    %235 = arith.divf %233, %234 : vector<16x128xf32>
    %236 = vector.extract_strided_slice %225 {offsets = [0, 256], sizes = [16, 128], strides = [1, 1]} : vector<16x384xf32> to vector<16x128xf32>
    %237 = vector.extract_strided_slice %227 {offsets = [0, 256], sizes = [16, 128], strides = [1, 1]} : vector<16x384xf32> to vector<16x128xf32>
    %238 = arith.addf %237, %7 : vector<16x128xf32>
    %239 = arith.mulf %235, %238 : vector<16x128xf32>
    %240 = arith.addf %236, %239 : vector<16x128xf32>
    %241 = math.tanh %240 : vector<16x128xf32>
    %242 = vector.extract_strided_slice %225 {offsets = [0, 128], sizes = [16, 128], strides = [1, 1]} : vector<16x384xf32> to vector<16x128xf32>
    %243 = vector.extract_strided_slice %227 {offsets = [0, 128], sizes = [16, 128], strides = [1, 1]} : vector<16x384xf32> to vector<16x128xf32>
    %244 = arith.addf %242, %243 : vector<16x128xf32>
    %245 = arith.negf %244 : vector<16x128xf32>
    %246 = math.exp %245 : vector<16x128xf32>
    %cst_61 = arith.constant 1.000000e+00 : f32
    %247 = vector.broadcast %cst_61 : f32 to vector<16x128xf32>
    %248 = arith.addf %247, %246 : vector<16x128xf32>
    %249 = arith.divf %247, %248 : vector<16x128xf32>
    %250 = arith.subf %222, %241 : vector<16x128xf32>
    %251 = arith.mulf %249, %250 : vector<16x128xf32>
    %252 = arith.addf %241, %251 : vector<16x128xf32>
    %253 = arith.truncf %252 : vector<16x128xf32> to vector<16x128xbf16>
    %c112_62 = arith.constant 112 : index
    %c0_63 = arith.constant 0 : index
    %254 = vector.load %arg10[%c112_62, %c0_63] : memref<128x128xbf16, #tpu.memory_space<vmem>>, vector<16x128xbf16>
    tpu.vector_store %arg10[%c112_62, %c0_63], %253 {strides = array<i32>} : memref<128x128xbf16, #tpu.memory_space<vmem>>, vector<16x128xbf16>,
    %c1 = arith.constant 1 : index
    %c0_64 = arith.constant 0 : index
    %c0_65 = arith.constant 0 : index
    %255 = vector.load %arg4[%c1, %c0_64, %c0_65] : memref<2x128x384xbf16, #tpu.memory_space<vmem>>, vector<1x128x384xbf16>
    %256 = vector.shape_cast %255 : vector<1x128x384xbf16> to vector<128x384xbf16>
    %c1_66 = arith.constant 1 : index
    %c0_67 = arith.constant 0 : index
    %c0_68 = arith.constant 0 : index
    %257 = vector.load %arg5[%c1_66, %c0_67, %c0_68] : memref<2x1x384xf32, #tpu.memory_space<vmem>>, vector<1x1x384xf32>
    %258 = vector.shape_cast %257 : vector<1x1x384xf32> to vector<1x384xf32>
    %c1_69 = arith.constant 1 : index
    %c0_70 = arith.constant 0 : index
    %c0_71 = arith.constant 0 : index
    %259 = vector.load %arg6[%c1_69, %c0_70, %c0_71] : memref<2x1x128xf32, #tpu.memory_space<vmem>>, vector<1x1x128xf32>
    %260 = vector.shape_cast %259 : vector<1x1x128xf32> to vector<1x128xf32>
    %261 = vector.shape_cast %260 : vector<1x128xf32> to vector<1x128xf32>
    %262 = vector.broadcast %261 : vector<1x128xf32> to vector<16x128xf32>
    %cst_72 = arith.constant 0.000000e+00 : f32
    %263 = vector.broadcast %cst_72 : f32 to vector<16x128xf32>
    %c0_73 = arith.constant 0 : index
    %c0_74 = arith.constant 0 : index
    %264 = vector.load %arg10[%c0_73, %c0_74] : memref<128x128xbf16, #tpu.memory_space<vmem>>, vector<128x128xbf16>
    %c0_75 = arith.constant 0 : index
    %c0_76 = arith.constant 0 : index
    %c0_77 = arith.constant 0 : index
    %265 = vector.load %arg3[%c0_75, %c0_76, %c0_77] : memref<1x128x384xbf16, #tpu.memory_space<vmem>>, vector<1x128x384xbf16>
    %266 = vector.shape_cast %265 : vector<1x128x384xbf16> to vector<128x384xbf16>
    %cst_78 = arith.constant dense<0.000000e+00> : vector<128x384xf32>
    %267 = tpu.matmul %264, %266, %cst_78 {dimension_numbers = #tpu.dot_dimension_numbers<[1], [0], [0], [1], [0, 0, 1, 1], [], []>} : vector<128x128xbf16>, vector<128x384xbf16>, vector<128x384xf32> -> vector<128x384xf32>
    %268 = vector.broadcast %258 : vector<1x384xf32> to vector<128x384xf32>
    %269 = arith.addf %267, %268 : vector<128x384xf32>
    %c0_79 = arith.constant 0 : index
    %c0_80 = arith.constant 0 : index
    %270 = vector.load %arg11[%c0_79, %c0_80] : memref<128x384xf32, #tpu.memory_space<vmem>>, vector<128x384xf32>
    tpu.vector_store %arg11[%c0_79, %c0_80], %269 {strides = array<i32>} : memref<128x384xf32, #tpu.memory_space<vmem>>, vector<128x384xf32>,
    %c0_81 = arith.constant 0 : index
    %c0_82 = arith.constant 0 : index
    %271 = vector.load %arg11[%c0_81, %c0_82] : memref<128x384xf32, #tpu.memory_space<vmem>>, vector<16x384xf32>
    %272 = arith.truncf %263 : vector<16x128xf32> to vector<16x128xbf16>
    %cst_83 = arith.constant dense<0.000000e+00> : vector<16x384xf32>
    %273 = tpu.matmul %272, %256, %cst_83 {dimension_numbers = #tpu.dot_dimension_numbers<[1], [0], [0], [1], [0, 0, 1, 1], [], []>} : vector<16x128xbf16>, vector<128x384xbf16>, vector<16x384xf32> -> vector<16x384xf32>
    %274 = vector.extract_strided_slice %271 {offsets = [0, 0], sizes = [16, 128], strides = [1, 1]} : vector<16x384xf32> to vector<16x128xf32>
    %275 = vector.extract_strided_slice %273 {offsets = [0, 0], sizes = [16, 128], strides = [1, 1]} : vector<16x384xf32> to vector<16x128xf32>
    %276 = arith.addf %274, %275 : vector<16x128xf32>
    %277 = arith.negf %276 : vector<16x128xf32>
    %278 = math.exp %277 : vector<16x128xf32>
    %cst_84 = arith.constant 1.000000e+00 : f32
    %279 = vector.broadcast %cst_84 : f32 to vector<16x128xf32>
    %280 = arith.addf %279, %278 : vector<16x128xf32>
    %281 = arith.divf %279, %280 : vector<16x128xf32>
    %282 = vector.extract_strided_slice %271 {offsets = [0, 256], sizes = [16, 128], strides = [1, 1]} : vector<16x384xf32> to vector<16x128xf32>
    %283 = vector.extract_strided_slice %273 {offsets = [0, 256], sizes = [16, 128], strides = [1, 1]} : vector<16x384xf32> to vector<16x128xf32>
    %284 = arith.addf %283, %262 : vector<16x128xf32>
    %285 = arith.mulf %281, %284 : vector<16x128xf32>
    %286 = arith.addf %282, %285 : vector<16x128xf32>
    %287 = math.tanh %286 : vector<16x128xf32>
    %288 = vector.extract_strided_slice %271 {offsets = [0, 128], sizes = [16, 128], strides = [1, 1]} : vector<16x384xf32> to vector<16x128xf32>
    %289 = vector.extract_strided_slice %273 {offsets = [0, 128], sizes = [16, 128], strides = [1, 1]} : vector<16x384xf32> to vector<16x128xf32>
    %290 = arith.addf %288, %289 : vector<16x128xf32>
    %291 = arith.negf %290 : vector<16x128xf32>
    %292 = math.exp %291 : vector<16x128xf32>
    %cst_85 = arith.constant 1.000000e+00 : f32
    %293 = vector.broadcast %cst_85 : f32 to vector<16x128xf32>
    %294 = arith.addf %293, %292 : vector<16x128xf32>
    %295 = arith.divf %293, %294 : vector<16x128xf32>
    %296 = arith.subf %263, %287 : vector<16x128xf32>
    %297 = arith.mulf %295, %296 : vector<16x128xf32>
    %298 = arith.addf %287, %297 : vector<16x128xf32>
    %c16_86 = arith.constant 16 : index
    %c0_87 = arith.constant 0 : index
    %299 = vector.load %arg11[%c16_86, %c0_87] : memref<128x384xf32, #tpu.memory_space<vmem>>, vector<16x384xf32>
    %300 = arith.truncf %298 : vector<16x128xf32> to vector<16x128xbf16>
    %cst_88 = arith.constant dense<0.000000e+00> : vector<16x384xf32>
    %301 = tpu.matmul %300, %256, %cst_88 {dimension_numbers = #tpu.dot_dimension_numbers<[1], [0], [0], [1], [0, 0, 1, 1], [], []>} : vector<16x128xbf16>, vector<128x384xbf16>, vector<16x384xf32> -> vector<16x384xf32>
    %302 = vector.extract_strided_slice %299 {offsets = [0, 0], sizes = [16, 128], strides = [1, 1]} : vector<16x384xf32> to vector<16x128xf32>
    %303 = vector.extract_strided_slice %301 {offsets = [0, 0], sizes = [16, 128], strides = [1, 1]} : vector<16x384xf32> to vector<16x128xf32>
    %304 = arith.addf %302, %303 : vector<16x128xf32>
    %305 = arith.negf %304 : vector<16x128xf32>
    %306 = math.exp %305 : vector<16x128xf32>
    %cst_89 = arith.constant 1.000000e+00 : f32
    %307 = vector.broadcast %cst_89 : f32 to vector<16x128xf32>
    %308 = arith.addf %307, %306 : vector<16x128xf32>
    %309 = arith.divf %307, %308 : vector<16x128xf32>
    %310 = vector.extract_strided_slice %299 {offsets = [0, 256], sizes = [16, 128], strides = [1, 1]} : vector<16x384xf32> to vector<16x128xf32>
    %311 = vector.extract_strided_slice %301 {offsets = [0, 256], sizes = [16, 128], strides = [1, 1]} : vector<16x384xf32> to vector<16x128xf32>
    %312 = arith.addf %311, %262 : vector<16x128xf32>
    %313 = arith.mulf %309, %312 : vector<16x128xf32>
    %314 = arith.addf %310, %313 : vector<16x128xf32>
    %315 = math.tanh %314 : vector<16x128xf32>
    %316 = vector.extract_strided_slice %299 {offsets = [0, 128], sizes = [16, 128], strides = [1, 1]} : vector<16x384xf32> to vector<16x128xf32>
    %317 = vector.extract_strided_slice %301 {offsets = [0, 128], sizes = [16, 128], strides = [1, 1]} : vector<16x384xf32> to vector<16x128xf32>
    %318 = arith.addf %316, %317 : vector<16x128xf32>
    %319 = arith.negf %318 : vector<16x128xf32>
    %320 = math.exp %319 : vector<16x128xf32>
    %cst_90 = arith.constant 1.000000e+00 : f32
    %321 = vector.broadcast %cst_90 : f32 to vector<16x128xf32>
    %322 = arith.addf %321, %320 : vector<16x128xf32>
    %323 = arith.divf %321, %322 : vector<16x128xf32>
    %324 = arith.subf %298, %315 : vector<16x128xf32>
    %325 = arith.mulf %323, %324 : vector<16x128xf32>
    %326 = arith.addf %315, %325 : vector<16x128xf32>
    %c32_91 = arith.constant 32 : index
    %c0_92 = arith.constant 0 : index
    %327 = vector.load %arg11[%c32_91, %c0_92] : memref<128x384xf32, #tpu.memory_space<vmem>>, vector<16x384xf32>
    %328 = arith.truncf %326 : vector<16x128xf32> to vector<16x128xbf16>
    %cst_93 = arith.constant dense<0.000000e+00> : vector<16x384xf32>
    %329 = tpu.matmul %328, %256, %cst_93 {dimension_numbers = #tpu.dot_dimension_numbers<[1], [0], [0], [1], [0, 0, 1, 1], [], []>} : vector<16x128xbf16>, vector<128x384xbf16>, vector<16x384xf32> -> vector<16x384xf32>
    %330 = vector.extract_strided_slice %327 {offsets = [0, 0], sizes = [16, 128], strides = [1, 1]} : vector<16x384xf32> to vector<16x128xf32>
    %331 = vector.extract_strided_slice %329 {offsets = [0, 0], sizes = [16, 128], strides = [1, 1]} : vector<16x384xf32> to vector<16x128xf32>
    %332 = arith.addf %330, %331 : vector<16x128xf32>
    %333 = arith.negf %332 : vector<16x128xf32>
    %334 = math.exp %333 : vector<16x128xf32>
    %cst_94 = arith.constant 1.000000e+00 : f32
    %335 = vector.broadcast %cst_94 : f32 to vector<16x128xf32>
    %336 = arith.addf %335, %334 : vector<16x128xf32>
    %337 = arith.divf %335, %336 : vector<16x128xf32>
    %338 = vector.extract_strided_slice %327 {offsets = [0, 256], sizes = [16, 128], strides = [1, 1]} : vector<16x384xf32> to vector<16x128xf32>
    %339 = vector.extract_strided_slice %329 {offsets = [0, 256], sizes = [16, 128], strides = [1, 1]} : vector<16x384xf32> to vector<16x128xf32>
    %340 = arith.addf %339, %262 : vector<16x128xf32>
    %341 = arith.mulf %337, %340 : vector<16x128xf32>
    %342 = arith.addf %338, %341 : vector<16x128xf32>
    %343 = math.tanh %342 : vector<16x128xf32>
    %344 = vector.extract_strided_slice %327 {offsets = [0, 128], sizes = [16, 128], strides = [1, 1]} : vector<16x384xf32> to vector<16x128xf32>
    %345 = vector.extract_strided_slice %329 {offsets = [0, 128], sizes = [16, 128], strides = [1, 1]} : vector<16x384xf32> to vector<16x128xf32>
    %346 = arith.addf %344, %345 : vector<16x128xf32>
    %347 = arith.negf %346 : vector<16x128xf32>
    %348 = math.exp %347 : vector<16x128xf32>
    %cst_95 = arith.constant 1.000000e+00 : f32
    %349 = vector.broadcast %cst_95 : f32 to vector<16x128xf32>
    %350 = arith.addf %349, %348 : vector<16x128xf32>
    %351 = arith.divf %349, %350 : vector<16x128xf32>
    %352 = arith.subf %326, %343 : vector<16x128xf32>
    %353 = arith.mulf %351, %352 : vector<16x128xf32>
    %354 = arith.addf %343, %353 : vector<16x128xf32>
    %c48_96 = arith.constant 48 : index
    %c0_97 = arith.constant 0 : index
    %355 = vector.load %arg11[%c48_96, %c0_97] : memref<128x384xf32, #tpu.memory_space<vmem>>, vector<16x384xf32>
    %356 = arith.truncf %354 : vector<16x128xf32> to vector<16x128xbf16>
    %cst_98 = arith.constant dense<0.000000e+00> : vector<16x384xf32>
    %357 = tpu.matmul %356, %256, %cst_98 {dimension_numbers = #tpu.dot_dimension_numbers<[1], [0], [0], [1], [0, 0, 1, 1], [], []>} : vector<16x128xbf16>, vector<128x384xbf16>, vector<16x384xf32> -> vector<16x384xf32>
    %358 = vector.extract_strided_slice %355 {offsets = [0, 0], sizes = [16, 128], strides = [1, 1]} : vector<16x384xf32> to vector<16x128xf32>
    %359 = vector.extract_strided_slice %357 {offsets = [0, 0], sizes = [16, 128], strides = [1, 1]} : vector<16x384xf32> to vector<16x128xf32>
    %360 = arith.addf %358, %359 : vector<16x128xf32>
    %361 = arith.negf %360 : vector<16x128xf32>
    %362 = math.exp %361 : vector<16x128xf32>
    %cst_99 = arith.constant 1.000000e+00 : f32
    %363 = vector.broadcast %cst_99 : f32 to vector<16x128xf32>
    %364 = arith.addf %363, %362 : vector<16x128xf32>
    %365 = arith.divf %363, %364 : vector<16x128xf32>
    %366 = vector.extract_strided_slice %355 {offsets = [0, 256], sizes = [16, 128], strides = [1, 1]} : vector<16x384xf32> to vector<16x128xf32>
    %367 = vector.extract_strided_slice %357 {offsets = [0, 256], sizes = [16, 128], strides = [1, 1]} : vector<16x384xf32> to vector<16x128xf32>
    %368 = arith.addf %367, %262 : vector<16x128xf32>
    %369 = arith.mulf %365, %368 : vector<16x128xf32>
    %370 = arith.addf %366, %369 : vector<16x128xf32>
    %371 = math.tanh %370 : vector<16x128xf32>
    %372 = vector.extract_strided_slice %355 {offsets = [0, 128], sizes = [16, 128], strides = [1, 1]} : vector<16x384xf32> to vector<16x128xf32>
    %373 = vector.extract_strided_slice %357 {offsets = [0, 128], sizes = [16, 128], strides = [1, 1]} : vector<16x384xf32> to vector<16x128xf32>
    %374 = arith.addf %372, %373 : vector<16x128xf32>
    %375 = arith.negf %374 : vector<16x128xf32>
    %376 = math.exp %375 : vector<16x128xf32>
    %cst_100 = arith.constant 1.000000e+00 : f32
    %377 = vector.broadcast %cst_100 : f32 to vector<16x128xf32>
    %378 = arith.addf %377, %376 : vector<16x128xf32>
    %379 = arith.divf %377, %378 : vector<16x128xf32>
    %380 = arith.subf %354, %371 : vector<16x128xf32>
    %381 = arith.mulf %379, %380 : vector<16x128xf32>
    %382 = arith.addf %371, %381 : vector<16x128xf32>
    %c64_101 = arith.constant 64 : index
    %c0_102 = arith.constant 0 : index
    %383 = vector.load %arg11[%c64_101, %c0_102] : memref<128x384xf32, #tpu.memory_space<vmem>>, vector<16x384xf32>
    %384 = arith.truncf %382 : vector<16x128xf32> to vector<16x128xbf16>
    %cst_103 = arith.constant dense<0.000000e+00> : vector<16x384xf32>
    %385 = tpu.matmul %384, %256, %cst_103 {dimension_numbers = #tpu.dot_dimension_numbers<[1], [0], [0], [1], [0, 0, 1, 1], [], []>} : vector<16x128xbf16>, vector<128x384xbf16>, vector<16x384xf32> -> vector<16x384xf32>
    %386 = vector.extract_strided_slice %383 {offsets = [0, 0], sizes = [16, 128], strides = [1, 1]} : vector<16x384xf32> to vector<16x128xf32>
    %387 = vector.extract_strided_slice %385 {offsets = [0, 0], sizes = [16, 128], strides = [1, 1]} : vector<16x384xf32> to vector<16x128xf32>
    %388 = arith.addf %386, %387 : vector<16x128xf32>
    %389 = arith.negf %388 : vector<16x128xf32>
    %390 = math.exp %389 : vector<16x128xf32>
    %cst_104 = arith.constant 1.000000e+00 : f32
    %391 = vector.broadcast %cst_104 : f32 to vector<16x128xf32>
    %392 = arith.addf %391, %390 : vector<16x128xf32>
    %393 = arith.divf %391, %392 : vector<16x128xf32>
    %394 = vector.extract_strided_slice %383 {offsets = [0, 256], sizes = [16, 128], strides = [1, 1]} : vector<16x384xf32> to vector<16x128xf32>
    %395 = vector.extract_strided_slice %385 {offsets = [0, 256], sizes = [16, 128], strides = [1, 1]} : vector<16x384xf32> to vector<16x128xf32>
    %396 = arith.addf %395, %262 : vector<16x128xf32>
    %397 = arith.mulf %393, %396 : vector<16x128xf32>
    %398 = arith.addf %394, %397 : vector<16x128xf32>
    %399 = math.tanh %398 : vector<16x128xf32>
    %400 = vector.extract_strided_slice %383 {offsets = [0, 128], sizes = [16, 128], strides = [1, 1]} : vector<16x384xf32> to vector<16x128xf32>
    %401 = vector.extract_strided_slice %385 {offsets = [0, 128], sizes = [16, 128], strides = [1, 1]} : vector<16x384xf32> to vector<16x128xf32>
    %402 = arith.addf %400, %401 : vector<16x128xf32>
    %403 = arith.negf %402 : vector<16x128xf32>
    %404 = math.exp %403 : vector<16x128xf32>
    %cst_105 = arith.constant 1.000000e+00 : f32
    %405 = vector.broadcast %cst_105 : f32 to vector<16x128xf32>
    %406 = arith.addf %405, %404 : vector<16x128xf32>
    %407 = arith.divf %405, %406 : vector<16x128xf32>
    %408 = arith.subf %382, %399 : vector<16x128xf32>
    %409 = arith.mulf %407, %408 : vector<16x128xf32>
    %410 = arith.addf %399, %409 : vector<16x128xf32>
    %c80_106 = arith.constant 80 : index
    %c0_107 = arith.constant 0 : index
    %411 = vector.load %arg11[%c80_106, %c0_107] : memref<128x384xf32, #tpu.memory_space<vmem>>, vector<16x384xf32>
    %412 = arith.truncf %410 : vector<16x128xf32> to vector<16x128xbf16>
    %cst_108 = arith.constant dense<0.000000e+00> : vector<16x384xf32>
    %413 = tpu.matmul %412, %256, %cst_108 {dimension_numbers = #tpu.dot_dimension_numbers<[1], [0], [0], [1], [0, 0, 1, 1], [], []>} : vector<16x128xbf16>, vector<128x384xbf16>, vector<16x384xf32> -> vector<16x384xf32>
    %414 = vector.extract_strided_slice %411 {offsets = [0, 0], sizes = [16, 128], strides = [1, 1]} : vector<16x384xf32> to vector<16x128xf32>
    %415 = vector.extract_strided_slice %413 {offsets = [0, 0], sizes = [16, 128], strides = [1, 1]} : vector<16x384xf32> to vector<16x128xf32>
    %416 = arith.addf %414, %415 : vector<16x128xf32>
    %417 = arith.negf %416 : vector<16x128xf32>
    %418 = math.exp %417 : vector<16x128xf32>
    %cst_109 = arith.constant 1.000000e+00 : f32
    %419 = vector.broadcast %cst_109 : f32 to vector<16x128xf32>
    %420 = arith.addf %419, %418 : vector<16x128xf32>
    %421 = arith.divf %419, %420 : vector<16x128xf32>
    %422 = vector.extract_strided_slice %411 {offsets = [0, 256], sizes = [16, 128], strides = [1, 1]} : vector<16x384xf32> to vector<16x128xf32>
    %423 = vector.extract_strided_slice %413 {offsets = [0, 256], sizes = [16, 128], strides = [1, 1]} : vector<16x384xf32> to vector<16x128xf32>
    %424 = arith.addf %423, %262 : vector<16x128xf32>
    %425 = arith.mulf %421, %424 : vector<16x128xf32>
    %426 = arith.addf %422, %425 : vector<16x128xf32>
    %427 = math.tanh %426 : vector<16x128xf32>
    %428 = vector.extract_strided_slice %411 {offsets = [0, 128], sizes = [16, 128], strides = [1, 1]} : vector<16x384xf32> to vector<16x128xf32>
    %429 = vector.extract_strided_slice %413 {offsets = [0, 128], sizes = [16, 128], strides = [1, 1]} : vector<16x384xf32> to vector<16x128xf32>
    %430 = arith.addf %428, %429 : vector<16x128xf32>
    %431 = arith.negf %430 : vector<16x128xf32>
    %432 = math.exp %431 : vector<16x128xf32>
    %cst_110 = arith.constant 1.000000e+00 : f32
    %433 = vector.broadcast %cst_110 : f32 to vector<16x128xf32>
    %434 = arith.addf %433, %432 : vector<16x128xf32>
    %435 = arith.divf %433, %434 : vector<16x128xf32>
    %436 = arith.subf %410, %427 : vector<16x128xf32>
    %437 = arith.mulf %435, %436 : vector<16x128xf32>
    %438 = arith.addf %427, %437 : vector<16x128xf32>
    %c96_111 = arith.constant 96 : index
    %c0_112 = arith.constant 0 : index
    %439 = vector.load %arg11[%c96_111, %c0_112] : memref<128x384xf32, #tpu.memory_space<vmem>>, vector<16x384xf32>
    %440 = arith.truncf %438 : vector<16x128xf32> to vector<16x128xbf16>
    %cst_113 = arith.constant dense<0.000000e+00> : vector<16x384xf32>
    %441 = tpu.matmul %440, %256, %cst_113 {dimension_numbers = #tpu.dot_dimension_numbers<[1], [0], [0], [1], [0, 0, 1, 1], [], []>} : vector<16x128xbf16>, vector<128x384xbf16>, vector<16x384xf32> -> vector<16x384xf32>
    %442 = vector.extract_strided_slice %439 {offsets = [0, 0], sizes = [16, 128], strides = [1, 1]} : vector<16x384xf32> to vector<16x128xf32>
    %443 = vector.extract_strided_slice %441 {offsets = [0, 0], sizes = [16, 128], strides = [1, 1]} : vector<16x384xf32> to vector<16x128xf32>
    %444 = arith.addf %442, %443 : vector<16x128xf32>
    %445 = arith.negf %444 : vector<16x128xf32>
    %446 = math.exp %445 : vector<16x128xf32>
    %cst_114 = arith.constant 1.000000e+00 : f32
    %447 = vector.broadcast %cst_114 : f32 to vector<16x128xf32>
    %448 = arith.addf %447, %446 : vector<16x128xf32>
    %449 = arith.divf %447, %448 : vector<16x128xf32>
    %450 = vector.extract_strided_slice %439 {offsets = [0, 256], sizes = [16, 128], strides = [1, 1]} : vector<16x384xf32> to vector<16x128xf32>
    %451 = vector.extract_strided_slice %441 {offsets = [0, 256], sizes = [16, 128], strides = [1, 1]} : vector<16x384xf32> to vector<16x128xf32>
    %452 = arith.addf %451, %262 : vector<16x128xf32>
    %453 = arith.mulf %449, %452 : vector<16x128xf32>
    %454 = arith.addf %450, %453 : vector<16x128xf32>
    %455 = math.tanh %454 : vector<16x128xf32>
    %456 = vector.extract_strided_slice %439 {offsets = [0, 128], sizes = [16, 128], strides = [1, 1]} : vector<16x384xf32> to vector<16x128xf32>
    %457 = vector.extract_strided_slice %441 {offsets = [0, 128], sizes = [16, 128], strides = [1, 1]} : vector<16x384xf32> to vector<16x128xf32>
    %458 = arith.addf %456, %457 : vector<16x128xf32>
    %459 = arith.negf %458 : vector<16x128xf32>
    %460 = math.exp %459 : vector<16x128xf32>
    %cst_115 = arith.constant 1.000000e+00 : f32
    %461 = vector.broadcast %cst_115 : f32 to vector<16x128xf32>
    %462 = arith.addf %461, %460 : vector<16x128xf32>
    %463 = arith.divf %461, %462 : vector<16x128xf32>
    %464 = arith.subf %438, %455 : vector<16x128xf32>
    %465 = arith.mulf %463, %464 : vector<16x128xf32>
    %466 = arith.addf %455, %465 : vector<16x128xf32>
    %c112_116 = arith.constant 112 : index
    %c0_117 = arith.constant 0 : index
    %467 = vector.load %arg11[%c112_116, %c0_117] : memref<128x384xf32, #tpu.memory_space<vmem>>, vector<16x384xf32>
    %468 = arith.truncf %466 : vector<16x128xf32> to vector<16x128xbf16>
    %cst_118 = arith.constant dense<0.000000e+00> : vector<16x384xf32>
    %469 = tpu.matmul %468, %256, %cst_118 {dimension_numbers = #tpu.dot_dimension_numbers<[1], [0], [0], [1], [0, 0, 1, 1], [], []>} : vector<16x128xbf16>, vector<128x384xbf16>, vector<16x384xf32> -> vector<16x384xf32>
    %470 = vector.extract_strided_slice %467 {offsets = [0, 0], sizes = [16, 128], strides = [1, 1]} : vector<16x384xf32> to vector<16x128xf32>
    %471 = vector.extract_strided_slice %469 {offsets = [0, 0], sizes = [16, 128], strides = [1, 1]} : vector<16x384xf32> to vector<16x128xf32>
    %472 = arith.addf %470, %471 : vector<16x128xf32>
    %473 = arith.negf %472 : vector<16x128xf32>
    %474 = math.exp %473 : vector<16x128xf32>
    %cst_119 = arith.constant 1.000000e+00 : f32
    %475 = vector.broadcast %cst_119 : f32 to vector<16x128xf32>
    %476 = arith.addf %475, %474 : vector<16x128xf32>
    %477 = arith.divf %475, %476 : vector<16x128xf32>
    %478 = vector.extract_strided_slice %467 {offsets = [0, 256], sizes = [16, 128], strides = [1, 1]} : vector<16x384xf32> to vector<16x128xf32>
    %479 = vector.extract_strided_slice %469 {offsets = [0, 256], sizes = [16, 128], strides = [1, 1]} : vector<16x384xf32> to vector<16x128xf32>
    %480 = arith.addf %479, %262 : vector<16x128xf32>
    %481 = arith.mulf %477, %480 : vector<16x128xf32>
    %482 = arith.addf %478, %481 : vector<16x128xf32>
    %483 = math.tanh %482 : vector<16x128xf32>
    %484 = vector.extract_strided_slice %467 {offsets = [0, 128], sizes = [16, 128], strides = [1, 1]} : vector<16x384xf32> to vector<16x128xf32>
    %485 = vector.extract_strided_slice %469 {offsets = [0, 128], sizes = [16, 128], strides = [1, 1]} : vector<16x384xf32> to vector<16x128xf32>
    %486 = arith.addf %484, %485 : vector<16x128xf32>
    %487 = arith.negf %486 : vector<16x128xf32>
    %488 = math.exp %487 : vector<16x128xf32>
    %cst_120 = arith.constant 1.000000e+00 : f32
    %489 = vector.broadcast %cst_120 : f32 to vector<16x128xf32>
    %490 = arith.addf %489, %488 : vector<16x128xf32>
    %491 = arith.divf %489, %490 : vector<16x128xf32>
    %492 = arith.subf %466, %483 : vector<16x128xf32>
    %493 = arith.mulf %491, %492 : vector<16x128xf32>
    %494 = arith.addf %483, %493 : vector<16x128xf32>
    %495 = arith.truncf %494 : vector<16x128xf32> to vector<16x128xbf16>
    %c0_121 = arith.constant 0 : index
    %c0_122 = arith.constant 0 : index
    %496 = vector.load %arg7[%c0_121, %c0_122] : memref<128x128xbf16, #tpu.memory_space<vmem>>, vector<128x128xbf16>
    %cst_123 = arith.constant dense<0.000000e+00> : vector<16x128xf32>
    %497 = tpu.matmul %495, %496, %cst_123 {dimension_numbers = #tpu.dot_dimension_numbers<[1], [0], [0], [1], [0, 0, 1, 1], [], []>} : vector<16x128xbf16>, vector<128x128xbf16>, vector<16x128xf32> -> vector<16x128xf32>
    %c0_124 = arith.constant 0 : index
    %c0_125 = arith.constant 0 : index
    %498 = vector.load %arg8[%c0_124, %c0_125] : memref<1x128xf32, #tpu.memory_space<vmem>>, vector<1x128xf32>
    %499 = vector.broadcast %498 : vector<1x128xf32> to vector<16x128xf32>
    %500 = arith.addf %497, %499 : vector<16x128xf32>
    %c0_126 = arith.constant 0 : index
    %c0_127 = arith.constant 0 : index
    %501 = vector.load %arg9[%c0_126, %c0_127] : memref<16x128xf32, #tpu.memory_space<vmem>>, vector<16x128xf32>
    tpu.vector_store %arg9[%c0_126, %c0_127], %500 {strides = array<i32>} : memref<16x128xf32, #tpu.memory_space<vmem>>, vector<16x128xf32>,
    return
  }
  func.func @transform_0(%arg0: i32) -> (i32, i32) {
    %c0_i32 = arith.constant 0 : i32
    %c0_i32_0 = arith.constant 0 : i32
    return %arg0, %c0_i32 : i32, i32
  }
  func.func @transform_1(%arg0: i32) -> (i32, i32) {
    %c0_i32 = arith.constant 0 : i32
    %c0_i32_0 = arith.constant 0 : i32
    %c0_i32_1 = arith.constant 0 : i32
    return %c0_i32, %c0_i32_0 : i32, i32
  }
  func.func @transform_2(%arg0: i32) -> (i32, i32, i32) {
    %c0_i32 = arith.constant 0 : i32
    %c0_i32_0 = arith.constant 0 : i32
    %c0_i32_1 = arith.constant 0 : i32
    %c0_i32_2 = arith.constant 0 : i32
    return %c0_i32, %c0_i32_0, %c0_i32_1 : i32, i32, i32
  }
  func.func @transform_3(%arg0: i32) -> (i32, i32, i32) {
    %c0_i32 = arith.constant 0 : i32
    %c0_i32_0 = arith.constant 0 : i32
    %c0_i32_1 = arith.constant 0 : i32
    %c0_i32_2 = arith.constant 0 : i32
    return %c0_i32, %c0_i32_0, %c0_i32_1 : i32, i32, i32
  }
  func.func @transform_4(%arg0: i32) -> (i32, i32, i32) {
    %c0_i32 = arith.constant 0 : i32
    %c0_i32_0 = arith.constant 0 : i32
    %c0_i32_1 = arith.constant 0 : i32
    %c0_i32_2 = arith.constant 0 : i32
    return %c0_i32, %c0_i32_0, %c0_i32_1 : i32, i32, i32
  }
  func.func @transform_5(%arg0: i32) -> (i32, i32, i32) {
    %c0_i32 = arith.constant 0 : i32
    %c0_i32_0 = arith.constant 0 : i32
    %c0_i32_1 = arith.constant 0 : i32
    %c0_i32_2 = arith.constant 0 : i32
    return %c0_i32, %c0_i32_0, %c0_i32_1 : i32, i32, i32
  }
  func.func @transform_6(%arg0: i32) -> (i32, i32) {
    %c0_i32 = arith.constant 0 : i32
    %c0_i32_0 = arith.constant 0 : i32
    %c0_i32_1 = arith.constant 0 : i32
    return %c0_i32, %c0_i32_0 : i32, i32
  }
  func.func @transform_7(%arg0: i32) -> (i32, i32) {
    %c0_i32 = arith.constant 0 : i32
    %c0_i32_0 = arith.constant 0 : i32
    %c0_i32_1 = arith.constant 0 : i32
    return %c0_i32, %c0_i32_0 : i32, i32
  }
  func.func @transform_8(%arg0: i32) -> (i32, i32) {
    %c0_i32 = arith.constant 0 : i32
    %c0_i32_0 = arith.constant 0 : i32
    return %arg0, %c0_i32 : i32, i32
  }
}

</mosaic_0001>

<llo_original>
// kernel: gru_forward_packed.1
$region0: #{gru_forward_packed.1}
  #allocation0 [shape = 'u32[]', space=smem, size = 0x4, offset = 0x4, fixed_abs, tag = 'smem constant byte address 0x4 - core index']
  #allocation1 [shape = 'u32[144,128]{1,0:T(1,128)}', space=vmem, size = 0x12000, scoped, tag = 'internal scratch']
  #allocation2 [shape = 'bf16[128,128]{1,0:T(8,128)(2,1)}', space=vmem, size = 0x8000, scoped, tag = 'scratch operand']
  #allocation3 [shape = 'f32[128,384]{1,0:T(8,128)}', space=vmem, size = 0x30000, scoped, tag = 'scratch operand']
  %s0 = inlined_call_operand.vmem [shape: bf16[256,128], index: 0, kind: input, shape index: {}]
  %s1 = inlined_call_operand.vmem [shape: bf16[128,384], index: 1, kind: input, shape index: {}]
  %s2 = inlined_call_operand.vmem [shape: bf16[1,128,384], index: 2, kind: input, shape index: {}]
  %s3 = inlined_call_operand.vmem [shape: bf16[2,128,384], index: 3, kind: input, shape index: {}]
  %s4 = inlined_call_operand.vmem [shape: f32[2,1,384], index: 4, kind: input, shape index: {}]
  %s5 = inlined_call_operand.vmem [shape: f32[2,1,128], index: 5, kind: input, shape index: {}]
  %s6 = inlined_call_operand.vmem [shape: bf16[128,128], index: 6, kind: input, shape index: {}]
  %s7 = inlined_call_operand.vmem [shape: f32[1,128], index: 7, kind: input, shape index: {}]
  %s8 = inlined_call_operand.vmem [shape: f32[32,128], index: 8, kind: output, shape index: {}]
  %s9 = sld [smem:[#allocation0]]
  $region65: #{gru_forward_packed.1} parent=0
    _
  %s11 = ssub.s32 1, %s9
  %s12 = scalar_select 0, %s11, %s9
  loop: start=0, step=1, limit=4
  $region2: #{gru_forward_packed.1} parent=0 // loop_pre_header
    _
  $region3: #{gru_forward_packed.1} parent=0 // loop_header
    %s14 = sphi 0, %s18
    %p15 = scmp.ge.s32.totalorder %s14, 4
    %s24 = sphi 0, %s26
    %s27 = sphi 0, %s24
    %s28 = sphi 0, %s27
    %s44 = sphi 0, %s28
    %s48 = sphi 0, %s48
    %s50 = sphi 0, %s48
    %s51 = sphi 0, %s50
    %s65 = sphi 0, %s51
    %s69 = sphi 0, %s69
    %s71 = sphi 0, %s69
    %s72 = sphi 0, %s71
    %s86 = sphi 0, %s72
    %s90 = sphi 0, %s90
    %s92 = sphi 0, %s90
    %s93 = sphi 0, %s92
    %s107 = sphi 0, %s93
    %s111 = sphi 0, %s111
    %s113 = sphi 0, %s111
    %s114 = sphi 0, %s113
    %s128 = sphi 0, %s114
    %s132 = sphi 0, %s132
    %s134 = sphi 0, %s132
    %s135 = sphi 0, %s134
    %s149 = sphi 0, %s135
    %s153 = sphi 0, %s153
    %s155 = sphi 0, %s153
    %s156 = sphi 0, %s155
    %s170 = sphi 0, %s156
    %s174 = sphi 0, %s174
    %s176 = sphi 0, %s174
    %s177 = sphi 0, %s176
    %s191 = sphi 0, %s177
    %s197 = sphi 0, %s199
    %s200 = sphi 0, %s197
    %s201 = sphi 0, %s200
    %s217 = sphi 0, %s201
  $region4: #{gru_forward_packed.1} parent=0 // loop_header_branch
    %17 = sbr.rel (%p15) target = $region8
  $region5: #{gru_forward_packed.1} parent=0 // loop_body
    %s19 = ssub.s32 %s14, 1
    %s20 = ssub.s32 %s14, 2
    %s21 = sadd.s32 %s14, 1
    %s22 = ssub.s32 %s14, %s21
    %p23 = scmp.eq.s32.totalorder %s22, 0
    %s25 = sadd.s32 %s24, 1
    %s26 = scalar_select %p23, %s24, %s25
    %p29 = pneg %p23
    %p30 = scmp.eq.s32.totalorder %s14, 1
    %p31 = por %p29, %p30
    %p32 = scmp.ne.s32.totalorder %s24, %s27
    %p33 = scmp.eq.s32.totalorder %s14, 0
    %p34 = por %p32, %p33
    %p35 = scmp.ne.s32.totalorder %s24, %s27
    %p36 = scmp.eq.s32.totalorder %s19, 1
    %p37 = por %p35, %p36
    %p38 = scmp.ne.s32.totalorder %s27, %s28
    %p39 = scmp.eq.s32.totalorder %s19, 0
    %p40 = por %p38, %p39
    %p41 = scmp.ne.s32.totalorder %s27, %s28
    %p42 = scmp.eq.s32.totalorder %s20, 1
    %p43 = por %p41, %p42
    %p45 = scmp.ne.s32.totalorder %s28, %s44
    %p46 = scmp.eq.s32.totalorder %s20, 0
    %p47 = por %p45, %p46
    %s49 = sadd.s32 %s48, 1
    %p52 = scmp.eq.s32.totalorder %s14, 1
    %p53 = scmp.ne.s32.totalorder %s48, %s50
    %p54 = scmp.eq.s32.totalorder %s14, 0
    %p55 = por %p53, %p54
    %p56 = scmp.ne.s32.totalorder %s48, %s50
    %p57 = scmp.eq.s32.totalorder %s19, 1
    %p58 = por %p56, %p57
    %p59 = scmp.ne.s32.totalorder %s50, %s51
    %p60 = scmp.eq.s32.totalorder %s19, 0
    %p61 = por %p59, %p60
    %p62 = scmp.ne.s32.totalorder %s50, %s51
    %p63 = scmp.eq.s32.totalorder %s20, 1
    %p64 = por %p62, %p63
    %p66 = scmp.ne.s32.totalorder %s51, %s65
    %p67 = scmp.eq.s32.totalorder %s20, 0
    %p68 = por %p66, %p67
    %s70 = sadd.s32 %s69, 1
    %p73 = scmp.eq.s32.totalorder %s14, 1
    %p74 = scmp.ne.s32.totalorder %s69, %s71
    %p75 = scmp.eq.s32.totalorder %s14, 0
    %p76 = por %p74, %p75
    %p77 = scmp.ne.s32.totalorder %s69, %s71
    %p78 = scmp.eq.s32.totalorder %s19, 1
    %p79 = por %p77, %p78
    %p80 = scmp.ne.s32.totalorder %s71, %s72
    %p81 = scmp.eq.s32.totalorder %s19, 0
    %p82 = por %p80, %p81
    %p83 = scmp.ne.s32.totalorder %s71, %s72
    %p84 = scmp.eq.s32.totalorder %s20, 1
    %p85 = por %p83, %p84
    %p87 = scmp.ne.s32.totalorder %s72, %s86
    %p88 = scmp.eq.s32.totalorder %s20, 0
    %p89 = por %p87, %p88
    %s91 = sadd.s32 %s90, 1
    %p94 = scmp.eq.s32.totalorder %s14, 1
    %p95 = scmp.ne.s32.totalorder %s90, %s92
    %p96 = scmp.eq.s32.totalorder %s14, 0
    %p97 = por %p95, %p96
    %p98 = scmp.ne.s32.totalorder %s90, %s92
    %p99 = scmp.eq.s32.totalorder %s19, 1
    %p100 = por %p98, %p99
    %p101 = scmp.ne.s32.totalorder %s92, %s93
    %p102 = scmp.eq.s32.totalorder %s19, 0
    %p103 = por %p101, %p102
    %p104 = scmp.ne.s32.totalorder %s92, %s93
    %p105 = scmp.eq.s32.totalorder %s20, 1
    %p106 = por %p104, %p105
    %p108 = scmp.ne.s32.totalorder %s93, %s107
    %p109 = scmp.eq.s32.totalorder %s20, 0
    %p110 = por %p108, %p109
    %s112 = sadd.s32 %s111, 1
    %p115 = scmp.eq.s32.totalorder %s14, 1
    %p116 = scmp.ne.s32.totalorder %s111, %s113
    %p117 = scmp.eq.s32.totalorder %s14, 0
    %p118 = por %p116, %p117
    %p119 = scmp.ne.s32.totalorder %s111, %s113
    %p120 = scmp.eq.s32.totalorder %s19, 1
    %p121 = por %p119, %p120
    %p122 = scmp.ne.s32.totalorder %s113, %s114
    %p123 = scmp.eq.s32.totalorder %s19, 0
    %p124 = por %p122, %p123
    %p125 = scmp.ne.s32.totalorder %s113, %s114
    %p126 = scmp.eq.s32.totalorder %s20, 1
    %p127 = por %p125, %p126
    %p129 = scmp.ne.s32.totalorder %s114, %s128
    %p130 = scmp.eq.s32.totalorder %s20, 0
    %p131 = por %p129, %p130
    %s133 = sadd.s32 %s132, 1
    %p136 = scmp.eq.s32.totalorder %s14, 1
    %p137 = scmp.ne.s32.totalorder %s132, %s134
    %p138 = scmp.eq.s32.totalorder %s14, 0
    %p139 = por %p137, %p138
    %p140 = scmp.ne.s32.totalorder %s132, %s134
    %p141 = scmp.eq.s32.totalorder %s19, 1
    %p142 = por %p140, %p141
    %p143 = scmp.ne.s32.totalorder %s134, %s135
    %p144 = scmp.eq.s32.totalorder %s19, 0
    %p145 = por %p143, %p144
    %p146 = scmp.ne.s32.totalorder %s134, %s135
    %p147 = scmp.eq.s32.totalorder %s20, 1
    %p148 = por %p146, %p147
    %p150 = scmp.ne.s32.totalorder %s135, %s149
    %p151 = scmp.eq.s32.totalorder %s20, 0
    %p152 = por %p150, %p151
    %s154 = sadd.s32 %s153, 1
    %p157 = scmp.eq.s32.totalorder %s14, 1
    %p158 = scmp.ne.s32.totalorder %s153, %s155
    %p159 = scmp.eq.s32.totalorder %s14, 0
    %p160 = por %p158, %p159
    %p161 = scmp.ne.s32.totalorder %s153, %s155
    %p162 = scmp.eq.s32.totalorder %s19, 1
    %p163 = por %p161, %p162
    %p164 = scmp.ne.s32.totalorder %s155, %s156
    %p165 = scmp.eq.s32.totalorder %s19, 0
    %p166 = por %p164, %p165
    %p167 = scmp.ne.s32.totalorder %s155, %s156
    %p168 = scmp.eq.s32.totalorder %s20, 1
    %p169 = por %p167, %p168
    %p171 = scmp.ne.s32.totalorder %s156, %s170
    %p172 = scmp.eq.s32.totalorder %s20, 0
    %p173 = por %p171, %p172
    %s175 = sadd.s32 %s174, 1
    %p178 = scmp.eq.s32.totalorder %s14, 1
    %p179 = scmp.ne.s32.totalorder %s174, %s176
    %p180 = scmp.eq.s32.totalorder %s14, 0
    %p181 = por %p179, %p180
    %p182 = scmp.ne.s32.totalorder %s174, %s176
    %p183 = scmp.eq.s32.totalorder %s19, 1
    %p184 = por %p182, %p183
    %p185 = scmp.ne.s32.totalorder %s176, %s177
    %p186 = scmp.eq.s32.totalorder %s19, 0
    %p187 = por %p185, %p186
    %p188 = scmp.ne.s32.totalorder %s176, %s177
    %p189 = scmp.eq.s32.totalorder %s20, 1
    %p190 = por %p188, %p189
    %p192 = scmp.ne.s32.totalorder %s177, %s191
    %p193 = scmp.eq.s32.totalorder %s20, 0
    %p194 = por %p192, %p193
    %s195 = ssub.s32 %s14, %s21
    %p196 = scmp.eq.s32.totalorder %s195, 0
    %s198 = sadd.s32 %s197, 1
    %s199 = scalar_select %p196, %s197, %s198
    %p202 = pneg %p196
    %p203 = scmp.eq.s32.totalorder %s14, 1
    %p204 = por %p202, %p203
    %p205 = scmp.ne.s32.totalorder %s197, %s200
    %p206 = scmp.eq.s32.totalorder %s14, 0
    %p207 = por %p205, %p206
    %p208 = scmp.ne.s32.totalorder %s197, %s200
    %p209 = scmp.eq.s32.totalorder %s19, 1
    %p210 = por %p208, %p209
    %p211 = scmp.ne.s32.totalorder %s200, %s201
    %p212 = scmp.eq.s32.totalorder %s19, 0
    %p213 = por %p211, %p212
    %p214 = scmp.ne.s32.totalorder %s200, %s201
    %p215 = scmp.eq.s32.totalorder %s20, 1
    %p216 = por %p214, %p215
    %p218 = scmp.ne.s32.totalorder %s201, %s217
    %p219 = scmp.eq.s32.totalorder %s20, 0
    %p220 = por %p218, %p219
    %p221 = scmp.le.s32.totalorder 1, %s14
    %p222 = scmp.lt.s32.totalorder %s14, 3
    %p223 = pnand %p221, %p222
    %p224 = pneg %p223
    // Predicated region
    $region9: #{gru_forward_packed.1} parent=5 // pred_check
      _
    $region10: #{gru_forward_packed.1} parent=5 // pred_check_branch
      %226 = sbr.rel (%p223) target = $region12
    $region11: #{gru_forward_packed.1} parent=5 // pred_region
      %s227 = ssub.s32 %s14, 1
      // Predicated region
      $region13: #{gru_forward_packed.1} parent=11 // pred_check
        %p228 = pneg %p61
      $region14: #{gru_forward_packed.1} parent=11 // pred_check_branch
        %230 = sbr.rel (%p228) target = $region16
      $region15: #{gru_forward_packed.1} parent=11 // pred_region
        _
      $region16: #{gru_forward_packed.1} parent=11 // pred_fallthru
        _
      // Predicated region
      $region17: #{gru_forward_packed.1} parent=11 // pred_check
        %p231 = pneg %p82
      $region18: #{gru_forward_packed.1} parent=11 // pred_check_branch
        %233 = sbr.rel (%p231) target = $region20
      $region19: #{gru_forward_packed.1} parent=11 // pred_region
        _
      $region20: #{gru_forward_packed.1} parent=11 // pred_fallthru
        _
      // Predicated region
      $region21: #{gru_forward_packed.1} parent=11 // pred_check
        %p234 = pneg %p103
      $region22: #{gru_forward_packed.1} parent=11 // pred_check_branch
        %236 = sbr.rel (%p234) target = $region24
      $region23: #{gru_forward_packed.1} parent=11 // pred_region
        _
      $region24: #{gru_forward_packed.1} parent=11 // pred_fallthru
        _
      // Predicated region
      $region25: #{gru_forward_packed.1} parent=11 // pred_check
        %p237 = pneg %p124
      $region26: #{gru_forward_packed.1} parent=11 // pred_check_branch
        %239 = sbr.rel (%p237) target = $region28
      $region27: #{gru_forward_packed.1} parent=11 // pred_region
        _
      $region28: #{gru_forward_packed.1} parent=11 // pred_fallthru
        _
      // Predicated region
      $region29: #{gru_forward_packed.1} parent=11 // pred_check
        %p240 = pneg %p145
      $region30: #{gru_forward_packed.1} parent=11 // pred_check_branch
        %242 = sbr.rel (%p240) target = $region32
      $region31: #{gru_forward_packed.1} parent=11 // pred_region
        _
      $region32: #{gru_forward_packed.1} parent=11 // pred_fallthru
        _
      // Predicated region
      $region33: #{gru_forward_packed.1} parent=11 // pred_check
        %p243 = pneg %p166
      $region34: #{gru_forward_packed.1} parent=11 // pred_check_branch
        %245 = sbr.rel (%p243) target = $region36
      $region35: #{gru_forward_packed.1} parent=11 // pred_region
        _
      $region36: #{gru_forward_packed.1} parent=11 // pred_fallthru
        _
      // Predicated region
      $region37: #{gru_forward_packed.1} parent=11 // pred_check
        %p246 = pneg %p187
      $region38: #{gru_forward_packed.1} parent=11 // pred_check_branch
        %248 = sbr.rel (%p246) target = $region40
      $region39: #{gru_forward_packed.1} parent=11 // pred_region
        _
      $region40: #{gru_forward_packed.1} parent=11 // pred_fallthru
        _
    $region12: #{gru_forward_packed.1} parent=5 // pred_fallthru
      _
    %p249 = scmp.lt.s32.totalorder %s14, 2
    // Predicated region
    $region41: #{gru_forward_packed.1} parent=5 // pred_check
      %p250 = pneg %p249
    $region42: #{gru_forward_packed.1} parent=5 // pred_check_branch
      %252 = sbr.rel (%p250) target = $region44
    $region43: #{gru_forward_packed.1} parent=5 // pred_region
      // Predicated region
      $region45: #{gru_forward_packed.1} parent=43 // pred_check
        %p253 = pneg %p34
      $region46: #{gru_forward_packed.1} parent=43 // pred_check_branch
        %255 = sbr.rel (%p253) target = $region48
      $region47: #{gru_forward_packed.1} parent=43 // pred_region
        %s256 = smul.u32 16, %s14
        %p257 = scmp.lt.s32.totalorder %s256, 31
        %s258 = scalar_select %p257, %s256, 31
        %s259 = smul.addr %s258, 4
        %s260 = scalar_lea.vmem %s0, %s259
        %s261 = smul.u32 16, %s14
      $region48: #{gru_forward_packed.1} parent=43 // pred_fallthru
        _
    $region44: #{gru_forward_packed.1} parent=5 // pred_fallthru
      _
    %p262 = scmp.le.s32.totalorder 1, %s14
    %p263 = scmp.lt.s32.totalorder %s14, 3
    %p264 = pnand %p262, %p263
    %p265 = pneg %p264
    // Predicated region
    $region49: #{gru_forward_packed.1} parent=5 // pred_check
      _
    $region50: #{gru_forward_packed.1} parent=5 // pred_check_branch
      %267 = sbr.rel (%p264) target = $region52
    $region51: #{gru_forward_packed.1} parent=5 // pred_region
      %s268 = ssub.s32 %s14, 1
      %s269 = smul.u32 16, %s19
      %p270 = scmp.lt.s32.totalorder %s269, 31
      %s271 = scalar_select %p270, %s269, 31
      %s272 = smul.addr %s271, 4
      %s273 = scalar_lea.vmem %s0, %s272
      %p274 = pneg %p40
      %p275 = pneg %p37
      %p276 = pneg %p61
      %p277 = pneg %p58
      %p278 = pneg %p82
      %p279 = pneg %p79
      %p280 = pneg %p103
      %p281 = pneg %p100
      %p282 = pneg %p124
      %p283 = pneg %p121
      %p284 = pneg %p145
      %p285 = pneg %p142
      %p286 = pneg %p166
      %p287 = pneg %p163
      %p288 = pneg %p187
      %p289 = pneg %p184
      %p290 = pneg %p213
      %p291 = pneg %p210
      %s292 = smul.u32 2, %s19
      %p293 = scmp.lt.s32.totalorder %s292, 3
      %s294 = scalar_select %p293, %s292, 3
      %s295 = smul.addr %s294, 8
      %s296 = scalar_lea.vmem %s8, %s295
      %s297 = smul.u32 16, %s19
      %p298 = scmp.lt.s32.totalorder %s297, 31
      %s299 = scalar_select %p298, %s297, 31
      %s300 = smul.addr %s299, 4
      %s301 = scalar_lea.vmem %s0, %s300
      %s302 = smul.u32 16, %s19
      %s303 = smul.u32 2, %s19
      %p304 = scmp.lt.s32.totalorder %s303, 3
      %s305 = scalar_select %p304, %s303, 3
      %s306 = smul.addr %s305, 8
      %s307 = scalar_lea.vmem %s8, %s306
      %s308 = smul.u32 2, %s19
      %v310 = vld [vmem:[%s3] sm:$0xff]
      %v311 = vld [vmem:[%s3 + $0x8] sm:$0xf]
      %v312 = vld [vmem:[%s3 + $0xc] sm:$0xff]
      %v313 = vld [vmem:[%s3 + $0x14] sm:$0xf]
      %v314 = vld [vmem:[%s3 + $0x18] sm:$0xff]
      %v315 = vld [vmem:[%s3 + $0x20] sm:$0xf]
      %v316 = vld [vmem:[%s3 + $0x24] sm:$0xff]
      %v317 = vld [vmem:[%s3 + $0x2c] sm:$0xf]
      %v318 = vld [vmem:[%s3 + $0x30] sm:$0xff]
      %v319 = vld [vmem:[%s3 + $0x38] sm:$0xf]
      %v320 = vld [vmem:[%s3 + $0x3c] sm:$0xff]
      %v321 = vld [vmem:[%s3 + $0x44] sm:$0xf]
      %v322 = vld [vmem:[%s3 + $0x48] sm:$0xff]
      %v323 = vld [vmem:[%s3 + $0x50] sm:$0xf]
      %v324 = vld [vmem:[%s3 + $0x54] sm:$0xff]
      %v325 = vld [vmem:[%s3 + $0x5c] sm:$0xf]
      %v326 = vld [vmem:[%s3 + $0x60] sm:$0xff]
      %v327 = vld [vmem:[%s3 + $0x68] sm:$0xf]
      %v328 = vld [vmem:[%s3 + $0x6c] sm:$0xff]
      %v329 = vld [vmem:[%s3 + $0x74] sm:$0xf]
      %v330 = vld [vmem:[%s3 + $0x78] sm:$0xff]
      %v331 = vld [vmem:[%s3 + $0x80] sm:$0xf]
      %v332 = vld [vmem:[%s3 + $0x84] sm:$0xff]
      %v333 = vld [vmem:[%s3 + $0x8c] sm:$0xf]
      %v334 = vld [vmem:[%s3 + $0x90] sm:$0xff]
      %v335 = vld [vmem:[%s3 + $0x98] sm:$0xf]
      %v336 = vld [vmem:[%s3 + $0x9c] sm:$0xff]
      %v337 = vld [vmem:[%s3 + $0xa4] sm:$0xf]
      %v338 = vld [vmem:[%s3 + $0xa8] sm:$0xff]
      %v339 = vld [vmem:[%s3 + $0xb0] sm:$0xf]
      %v340 = vld [vmem:[%s3 + $0xb4] sm:$0xff]
      %v341 = vld [vmem:[%s3 + $0xbc] sm:$0xf]
      %v342 = vld [vmem:[%s4] sm:$0x7]
      %v343 = vld [vmem:[%s5] sm:$0x1]
      %v345 = vlaneseq
      %v346 = vshrl.u32 %v345, 7
      %v347 = vsub.s32 0, %v346
      %v348 = vrot.slane %v343, %v347
      %v350 = vld [vmem:[%s301] sm:$0xf]
      %v351 = vld [vmem:[%s301 + $0x4] sm:$0xf]
      %v352 = vld [vmem:[%s301 + $0x8] sm:$0xf]
      %v353 = vld [vmem:[%s301 + $0xc] sm:$0xf]
      %v354 = vld [vmem:[%s301 + $0x10] sm:$0xf]
      %v355 = vld [vmem:[%s301 + $0x14] sm:$0xf]
      %v356 = vld [vmem:[%s301 + $0x18] sm:$0xf]
      %v357 = vld [vmem:[%s301 + $0x1c] sm:$0xf]
      %v358 = vld [vmem:[%s301 + $0x20] sm:$0xf]
      %v359 = vld [vmem:[%s301 + $0x24] sm:$0xf]
      %v360 = vld [vmem:[%s301 + $0x28] sm:$0xf]
      %v361 = vld [vmem:[%s301 + $0x2c] sm:$0xf]
      %v362 = vld [vmem:[%s301 + $0x30] sm:$0xf]
      %v363 = vld [vmem:[%s301 + $0x34] sm:$0xf]
      %v364 = vld [vmem:[%s301 + $0x38] sm:$0xf]
      %v365 = vld [vmem:[%s301 + $0x3c] sm:$0xf]
      %v366 = vld [vmem:[%s1] sm:$0xff]
      %v367 = vld [vmem:[%s1 + $0x8] sm:$0xf]
      %v368 = vld [vmem:[%s1 + $0xc] sm:$0xff]
      %v369 = vld [vmem:[%s1 + $0x14] sm:$0xf]
      %v370 = vld [vmem:[%s1 + $0x18] sm:$0xff]
      %v371 = vld [vmem:[%s1 + $0x20] sm:$0xf]
      %v372 = vld [vmem:[%s1 + $0x24] sm:$0xff]
      %v373 = vld [vmem:[%s1 + $0x2c] sm:$0xf]
      %v374 = vld [vmem:[%s1 + $0x30] sm:$0xff]
      %v375 = vld [vmem:[%s1 + $0x38] sm:$0xf]
      %v376 = vld [vmem:[%s1 + $0x3c] sm:$0xff]
      %v377 = vld [vmem:[%s1 + $0x44] sm:$0xf]
      %v378 = vld [vmem:[%s1 + $0x48] sm:$0xff]
      %v379 = vld [vmem:[%s1 + $0x50] sm:$0xf]
      %v380 = vld [vmem:[%s1 + $0x54] sm:$0xff]
      %v381 = vld [vmem:[%s1 + $0x5c] sm:$0xf]
      %v382 = vld [vmem:[%s1 + $0x60] sm:$0xff]
      %v383 = vld [vmem:[%s1 + $0x68] sm:$0xf]
      %v384 = vld [vmem:[%s1 + $0x6c] sm:$0xff]
      %v385 = vld [vmem:[%s1 + $0x74] sm:$0xf]
      %v386 = vld [vmem:[%s1 + $0x78] sm:$0xff]
      %v387 = vld [vmem:[%s1 + $0x80] sm:$0xf]
      %v388 = vld [vmem:[%s1 + $0x84] sm:$0xff]
      %v389 = vld [vmem:[%s1 + $0x8c] sm:$0xf]
      %v390 = vld [vmem:[%s1 + $0x90] sm:$0xff]
      %v391 = vld [vmem:[%s1 + $0x98] sm:$0xf]
      %v392 = vld [vmem:[%s1 + $0x9c] sm:$0xff]
      %v393 = vld [vmem:[%s1 + $0xa4] sm:$0xf]
      %v394 = vld [vmem:[%s1 + $0xa8] sm:$0xff]
      %v395 = vld [vmem:[%s1 + $0xb0] sm:$0xf]
      %v396 = vld [vmem:[%s1 + $0xb4] sm:$0xff]
      %v397 = vld [vmem:[%s1 + $0xbc] sm:$0xf]
      %v399 = vlaneseq
      %v400 = vshrl.u32 %v399, 7
      %v401 = vsub.s32 0, %v400
      %v402 = vrot.slane %v342, %v401
      %v403 = vlaneseq
      %v404 = vshrl.u32 %v403, 7
      %v405 = vsub.s32 1, %v404
      %v406 = vrot.slane %v342, %v405
      %v407 = vlaneseq
      %v408 = vshrl.u32 %v407, 7
      %v409 = vsub.s32 2, %v408
      %v410 = vrot.slane %v342, %v409
      %v430 = vunpack.c.l.b16 %v350
      %v431 = vunpack.c.l.b16 %v351
      %v432 = vunpack.c.l.b16 %v352
      %v433 = vunpack.c.l.b16 %v353
      %v434 = vunpack.c.l.b16 %v354
      %v435 = vunpack.c.l.b16 %v355
      %v436 = vunpack.c.l.b16 %v356
      %v437 = vunpack.c.l.b16 %v357
      %v438 = vunpack.c.l.b16 %v358
      %v439 = vunpack.c.l.b16 %v359
      %v440 = vunpack.c.l.b16 %v360
      %v441 = vunpack.c.l.b16 %v361
      %v442 = vunpack.c.l.b16 %v362
      %v443 = vunpack.c.l.b16 %v363
      %v444 = vunpack.c.l.b16 %v364
      %v445 = vunpack.c.l.b16 %v365
      %v446 = vpack.c.b16 %v431, %v430
      %v447 = vpack.c.b16 %v433, %v432
      %v448 = vpack.c.b16 %v435, %v434
      %v449 = vpack.c.b16 %v437, %v436
      %v450 = vpack.c.b16 %v439, %v438
      %v451 = vpack.c.b16 %v441, %v440
      %v452 = vpack.c.b16 %v443, %v442
      %v453 = vpack.c.b16 %v445, %v444
      %v494 = vunpack.c.l.b16 %v366
      %v495 = vunpack.c.h.b16 %v366
      %v496 = vunpack.c.l.b16 %v367
      %v497 = vunpack.c.l.b16 %v368
      %v498 = vunpack.c.h.b16 %v368
      %v499 = vunpack.c.l.b16 %v369
      %v500 = vunpack.c.l.b16 %v370
      %v501 = vunpack.c.h.b16 %v370
      %v502 = vunpack.c.l.b16 %v371
      %v503 = vunpack.c.l.b16 %v372
      %v504 = vunpack.c.h.b16 %v372
      %v505 = vunpack.c.l.b16 %v373
      %v506 = vunpack.c.l.b16 %v374
      %v507 = vunpack.c.h.b16 %v374
      %v508 = vunpack.c.l.b16 %v375
      %v509 = vunpack.c.l.b16 %v376
      %v510 = vunpack.c.h.b16 %v376
      %v511 = vunpack.c.l.b16 %v377
      %v512 = vunpack.c.l.b16 %v378
      %v513 = vunpack.c.h.b16 %v378
      %v514 = vunpack.c.l.b16 %v379
      %v515 = vunpack.c.l.b16 %v380
      %v516 = vunpack.c.h.b16 %v380
      %v517 = vunpack.c.l.b16 %v381
      %v518 = vunpack.c.l.b16 %v382
      %v519 = vunpack.c.h.b16 %v382
      %v520 = vunpack.c.l.b16 %v383
      %v521 = vunpack.c.l.b16 %v384
      %v522 = vunpack.c.h.b16 %v384
      %v523 = vunpack.c.l.b16 %v385
      %v524 = vunpack.c.l.b16 %v386
      %v525 = vunpack.c.h.b16 %v386
      %v526 = vunpack.c.l.b16 %v387
      %v527 = vunpack.c.l.b16 %v388
      %v528 = vunpack.c.h.b16 %v388
      %v529 = vunpack.c.l.b16 %v389
      %v530 = vunpack.c.l.b16 %v390
      %v531 = vunpack.c.h.b16 %v390
      %v532 = vunpack.c.l.b16 %v391
      %v533 = vunpack.c.l.b16 %v392
      %v534 = vunpack.c.h.b16 %v392
      %v535 = vunpack.c.l.b16 %v393
      %v536 = vunpack.c.l.b16 %v394
      %v537 = vunpack.c.h.b16 %v394
      %v538 = vunpack.c.l.b16 %v395
      %v539 = vunpack.c.l.b16 %v396
      %v540 = vunpack.c.h.b16 %v396
      %v541 = vunpack.c.l.b16 %v397
      %v542 = vpack.c.b16 %v497, %v494
      %v543 = vpack.c.b16 %v498, %v495
      %v544 = vpack.c.b16 %v499, %v496
      %v545 = vpack.c.b16 %v503, %v500
      %v546 = vpack.c.b16 %v504, %v501
      %v547 = vpack.c.b16 %v505, %v502
      %v548 = vpack.c.b16 %v509, %v506
      %v549 = vpack.c.b16 %v510, %v507
      %v550 = vpack.c.b16 %v511, %v508
      %v551 = vpack.c.b16 %v515, %v512
      %v552 = vpack.c.b16 %v516, %v513
      %v553 = vpack.c.b16 %v517, %v514
      %v554 = vpack.c.b16 %v521, %v518
      %v555 = vpack.c.b16 %v522, %v519
      %v556 = vpack.c.b16 %v523, %v520
      %v557 = vpack.c.b16 %v527, %v524
      %v558 = vpack.c.b16 %v528, %v525
      %v559 = vpack.c.b16 %v529, %v526
      %v560 = vpack.c.b16 %v533, %v530
      %v561 = vpack.c.b16 %v534, %v531
      %v562 = vpack.c.b16 %v535, %v532
      %v563 = vpack.c.b16 %v539, %v536
      %v564 = vpack.c.b16 %v540, %v537
      %v565 = vpack.c.b16 %v541, %v538
      %590 = vmatprep.subr.bf16.mxu0 %v564
      %591 = vmatpush1.bf16.msra.mxu0 %v563
      %592 = vmatprep.subr.bf16.mxu0 %v561
      %593 = vmatpush1.bf16.msra.mxu0 %v560
      %594 = vmatprep.subr.bf16.mxu0 %v558
      %595 = vmatpush1.bf16.msra.mxu0 %v557
      %596 = vmatprep.subr.bf16.mxu0 %v555
      %597 = vmatpush1.bf16.msra.mxu0 %v554
      %598 = vmatprep.subr.bf16.mxu0 %v552
      %599 = vmatpush1.bf16.msra.mxu0 %v551
      %600 = vmatprep.subr.bf16.mxu0 %v549
      %601 = vmatpush1.bf16.msra.mxu0 %v548
      %602 = vmatprep.subr.bf16.mxu0 %v546
      %603 = vmatpush1.bf16.msra.mxu0 %v545
      %604 = vmatprep.subr.bf16.mxu0 %v543
      %605 = vmatpush1.bf16.msra.mxu0 %v542
      %606 = vmatprep.subr.bf16.mxu0 0
      %607 = vmatpush2.bf16.msra.mxu0 0
      %608 = vmatprep.subr.bf16.mxu0 0
      %609 = vmatpush2.bf16.msra.mxu0 0
      %610 = vmatprep.subr.bf16.mxu0 0
      %611 = vmatpush2.bf16.msra.mxu0 0
      %612 = vmatprep.subr.bf16.mxu0 0
      %613 = vmatpush2.bf16.msra.mxu0 0
      %614 = vmatprep.subr.bf16.mxu0 0
      %615 = vmatpush2.bf16.msra.mxu0 0
      %616 = vmatprep.subr.bf16.mxu0 0
      %617 = vmatpush2.bf16.msra.mxu0 0
      %618 = vmatprep.subr.bf16.mxu0 0
      %619 = vmatpush2.bf16.msra.mxu0 0
      %620 = vmatprep.subr.bf16.mxu0 0
      %621 = vmatpush2.bf16.msra.mxu0 0
      %622 = vmatprep.mubr.bf16.mxu0 0
      %623 = vmatmul.mubr.bf16.gmra.mxu0 %v446
      %v624 = vpop.f32.mrf.mxu0
      %v625 = vadd.f32 %v402, %v624
      %v626 = vpop.f32.mrf.mxu0
      %v627 = vadd.f32 %v406, %v626
      %v628 = vpop.f32.mrf.mxu0
      %v629 = vadd.f32 %v402, %v628
      %v630 = vpop.f32.mrf.mxu0
      %v631 = vadd.f32 %v406, %v630
      %632 = vmatprep.mubr.bf16.mxu0 0
      %633 = vmatmul.mubr.bf16.gmra.mxu0 %v447
      %v634 = vpop.f32.mrf.mxu0
      %v635 = vadd.f32 %v402, %v634
      %v636 = vpop.f32.mrf.mxu0
      %v637 = vadd.f32 %v406, %v636
      %v638 = vpop.f32.mrf.mxu0
      %v639 = vadd.f32 %v402, %v638
      %v640 = vpop.f32.mrf.mxu0
      %v641 = vadd.f32 %v406, %v640
      %642 = vmatprep.mubr.bf16.mxu0 0
      %643 = vmatmul.mubr.bf16.gmra.mxu0 %v448
      %v644 = vpop.f32.mrf.mxu0
      %v645 = vadd.f32 %v402, %v644
      %v646 = vpop.f32.mrf.mxu0
      %v647 = vadd.f32 %v406, %v646
      %v648 = vpop.f32.mrf.mxu0
      %v649 = vadd.f32 %v402, %v648
      %v650 = vpop.f32.mrf.mxu0
      %v651 = vadd.f32 %v406, %v650
      %652 = vmatprep.mubr.bf16.mxu0 0
      %653 = vmatmul.mubr.bf16.gmra.mxu0 %v449
      %v654 = vpop.f32.mrf.mxu0
      %v655 = vadd.f32 %v402, %v654
      %v656 = vpop.f32.mrf.mxu0
      %v657 = vadd.f32 %v406, %v656
      %v658 = vpop.f32.mrf.mxu0
      %v659 = vadd.f32 %v402, %v658
      %v660 = vpop.f32.mrf.mxu0
      %v661 = vadd.f32 %v406, %v660
      %662 = vmatprep.mubr.bf16.mxu0 0
      %663 = vmatmul.mubr.bf16.gmra.mxu0 %v450
      %v664 = vpop.f32.mrf.mxu0
      %v665 = vadd.f32 %v402, %v664
      %v666 = vpop.f32.mrf.mxu0
      %v667 = vadd.f32 %v406, %v666
      %v668 = vpop.f32.mrf.mxu0
      %v669 = vadd.f32 %v402, %v668
      %v670 = vpop.f32.mrf.mxu0
      %v671 = vadd.f32 %v406, %v670
      %672 = vmatprep.mubr.bf16.mxu0 0
      %673 = vmatmul.mubr.bf16.gmra.mxu0 %v451
      %v674 = vpop.f32.mrf.mxu0
      %v675 = vadd.f32 %v402, %v674
      %v676 = vpop.f32.mrf.mxu0
      %v677 = vadd.f32 %v406, %v676
      %v678 = vpop.f32.mrf.mxu0
      %v679 = vadd.f32 %v402, %v678
      %v680 = vpop.f32.mrf.mxu0
      %v681 = vadd.f32 %v406, %v680
      %682 = vmatprep.mubr.bf16.mxu0 0
      %683 = vmatmul.mubr.bf16.gmra.mxu0 %v452
      %v684 = vpop.f32.mrf.mxu0
      %v685 = vadd.f32 %v402, %v684
      %v686 = vpop.f32.mrf.mxu0
      %v687 = vadd.f32 %v406, %v686
      %v688 = vpop.f32.mrf.mxu0
      %v689 = vadd.f32 %v402, %v688
      %v690 = vpop.f32.mrf.mxu0
      %v691 = vadd.f32 %v406, %v690
      %692 = vmatprep.mubr.bf16.mxu0 0
      %693 = vmatmul.mubr.bf16.gmra.mxu0 %v453
      %v694 = vpop.f32.mrf.mxu0
      %v695 = vadd.f32 %v402, %v694
      %v696 = vpop.f32.mrf.mxu0
      %v697 = vadd.f32 %v406, %v696
      %v698 = vpop.f32.mrf.mxu0
      %v699 = vadd.f32 %v402, %v698
      %v700 = vpop.f32.mrf.mxu0
      %v701 = vadd.f32 %v406, %v700
      %702 = vdwg.mxu0
      %703 = vmatprep.subr.bf16.mxu0 0
      %704 = vmatpush1.bf16.msra.mxu0 %v565
      %705 = vmatprep.subr.bf16.mxu0 0
      %706 = vmatpush1.bf16.msra.mxu0 %v562
      %707 = vmatprep.subr.bf16.mxu0 0
      %708 = vmatpush1.bf16.msra.mxu0 %v559
      %709 = vmatprep.subr.bf16.mxu0 0
      %710 = vmatpush1.bf16.msra.mxu0 %v556
      %711 = vmatprep.subr.bf16.mxu0 0
      %712 = vmatpush1.bf16.msra.mxu0 %v553
      %713 = vmatprep.subr.bf16.mxu0 0
      %714 = vmatpush1.bf16.msra.mxu0 %v550
      %715 = vmatprep.subr.bf16.mxu0 0
      %716 = vmatpush1.bf16.msra.mxu0 %v547
      %717 = vmatprep.subr.bf16.mxu0 0
      %718 = vmatpush1.bf16.msra.mxu0 %v544
      %719 = vmatprep.subr.bf16.mxu0 0
      %720 = vmatpush2.bf16.msra.mxu0 0
      %721 = vmatprep.subr.bf16.mxu0 0
      %722 = vmatpush2.bf16.msra.mxu0 0
      %723 = vmatprep.subr.bf16.mxu0 0
      %724 = vmatpush2.bf16.msra.mxu0 0
      %725 = vmatprep.subr.bf16.mxu0 0
      %726 = vmatpush2.bf16.msra.mxu0 0
      %727 = vmatprep.subr.bf16.mxu0 0
      %728 = vmatpush2.bf16.msra.mxu0 0
      %729 = vmatprep.subr.bf16.mxu0 0
      %730 = vmatpush2.bf16.msra.mxu0 0
      %731 = vmatprep.subr.bf16.mxu0 0
      %732 = vmatpush2.bf16.msra.mxu0 0
      %733 = vmatprep.subr.bf16.mxu0 0
      %734 = vmatpush2.bf16.msra.mxu0 0
      %735 = vmatprep.mubr.bf16.mxu0 0
      %736 = vmatmul.mubr.bf16.gmra.mxu0 %v446
      %v737 = vpop.f32.mrf.mxu0
      %v738 = vadd.f32 %v410, %v737
      %v739 = vpop.f32.mrf.mxu0
      %v740 = vpop.f32.mrf.mxu0
      %v741 = vadd.f32 %v410, %v740
      %v742 = vpop.f32.mrf.mxu0
      %743 = vmatprep.mubr.bf16.mxu0 0
      %744 = vmatmul.mubr.bf16.gmra.mxu0 %v447
      %v745 = vpop.f32.mrf.mxu0
      %v746 = vadd.f32 %v410, %v745
      %v747 = vpop.f32.mrf.mxu0
      %v748 = vpop.f32.mrf.mxu0
      %v749 = vadd.f32 %v410, %v748
      %v750 = vpop.f32.mrf.mxu0
      %751 = vmatprep.mubr.bf16.mxu0 0
      %752 = vmatmul.mubr.bf16.gmra.mxu0 %v448
      %v753 = vpop.f32.mrf.mxu0
      %v754 = vadd.f32 %v410, %v753
      %v755 = vpop.f32.mrf.mxu0
      %v756 = vpop.f32.mrf.mxu0
      %v757 = vadd.f32 %v410, %v756
      %v758 = vpop.f32.mrf.mxu0
      %759 = vmatprep.mubr.bf16.mxu0 0
      %760 = vmatmul.mubr.bf16.gmra.mxu0 %v449
      %v761 = vpop.f32.mrf.mxu0
      %v762 = vadd.f32 %v410, %v761
      %v763 = vpop.f32.mrf.mxu0
      %v764 = vpop.f32.mrf.mxu0
      %v765 = vadd.f32 %v410, %v764
      %v766 = vpop.f32.mrf.mxu0
      %767 = vmatprep.mubr.bf16.mxu0 0
      %768 = vmatmul.mubr.bf16.gmra.mxu0 %v450
      %v769 = vpop.f32.mrf.mxu0
      %v770 = vadd.f32 %v410, %v769
      %v771 = vpop.f32.mrf.mxu0
      %v772 = vpop.f32.mrf.mxu0
      %v773 = vadd.f32 %v410, %v772
      %v774 = vpop.f32.mrf.mxu0
      %775 = vmatprep.mubr.bf16.mxu0 0
      %776 = vmatmul.mubr.bf16.gmra.mxu0 %v451
      %v777 = vpop.f32.mrf.mxu0
      %v778 = vadd.f32 %v410, %v777
      %v779 = vpop.f32.mrf.mxu0
      %v780 = vpop.f32.mrf.mxu0
      %v781 = vadd.f32 %v410, %v780
      %v782 = vpop.f32.mrf.mxu0
      %783 = vmatprep.mubr.bf16.mxu0 0
      %784 = vmatmul.mubr.bf16.gmra.mxu0 %v452
      %v785 = vpop.f32.mrf.mxu0
      %v786 = vadd.f32 %v410, %v785
      %v787 = vpop.f32.mrf.mxu0
      %v788 = vpop.f32.mrf.mxu0
      %v789 = vadd.f32 %v410, %v788
      %v790 = vpop.f32.mrf.mxu0
      %791 = vmatprep.mubr.bf16.mxu0 0
      %792 = vmatmul.mubr.bf16.gmra.mxu0 %v453
      %v793 = vpop.f32.mrf.mxu0
      %v794 = vadd.f32 %v410, %v793
      %v795 = vpop.f32.mrf.mxu0
      %v796 = vpop.f32.mrf.mxu0
      %v797 = vadd.f32 %v410, %v796
      %v798 = vpop.f32.mrf.mxu0
      %799 = vdwg.mxu0
      %800 = vst [vmem:[#allocation3] sm:$0xff] %v625
      %801 = vst [vmem:[#allocation3 + $0x8] sm:$0xff] %v627
      %802 = vst [vmem:[#allocation3 + $0x10] sm:$0xff] %v738
      %803 = vst [vmem:[#allocation3 + $0x18] sm:$0xff] %v629
      %804 = vst [vmem:[#allocation3 + $0x20] sm:$0xff] %v631
      %805 = vst [vmem:[#allocation3 + $0x28] sm:$0xff] %v741
      %806 = vst [vmem:[#allocation3 + $0x30] sm:$0xff] %v635
      %807 = vst [vmem:[#allocation3 + $0x38] sm:$0xff] %v637
      %808 = vst [vmem:[#allocation3 + $0x40] sm:$0xff] %v746
      %809 = vst [vmem:[#allocation3 + $0x48] sm:$0xff] %v639
      %810 = vst [vmem:[#allocation3 + $0x50] sm:$0xff] %v641
      %811 = vst [vmem:[#allocation3 + $0x58] sm:$0xff] %v749
      %812 = vst [vmem:[#allocation3 + $0x60] sm:$0xff] %v645
      %813 = vst [vmem:[#allocation3 + $0x68] sm:$0xff] %v647
      %814 = vst [vmem:[#allocation3 + $0x70] sm:$0xff] %v754
      %815 = vst [vmem:[#allocation3 + $0x78] sm:$0xff] %v649
      %816 = vst [vmem:[#allocation3 + $0x80] sm:$0xff] %v651
      %817 = vst [vmem:[#allocation3 + $0x88] sm:$0xff] %v757
      %818 = vst [vmem:[#allocation3 + $0x90] sm:$0xff] %v655
      %819 = vst [vmem:[#allocation3 + $0x98] sm:$0xff] %v657
      %820 = vst [vmem:[#allocation3 + $0xa0] sm:$0xff] %v762
      %821 = vst [vmem:[#allocation3 + $0xa8] sm:$0xff] %v659
      %822 = vst [vmem:[#allocation3 + $0xb0] sm:$0xff] %v661
      %823 = vst [vmem:[#allocation3 + $0xb8] sm:$0xff] %v765
      %824 = vst [vmem:[#allocation3 + $0xc0] sm:$0xff] %v665
      %825 = vst [vmem:[#allocation3 + $0xc8] sm:$0xff] %v667
      %826 = vst [vmem:[#allocation3 + $0xd0] sm:$0xff] %v770
      %827 = vst [vmem:[#allocation3 + $0xd8] sm:$0xff] %v669
      %828 = vst [vmem:[#allocation3 + $0xe0] sm:$0xff] %v671
      %829 = vst [vmem:[#allocation3 + $0xe8] sm:$0xff] %v773
      %830 = vst [vmem:[#allocation3 + $0xf0] sm:$0xff] %v675
      %831 = vst [vmem:[#allocation3 + $0xf8] sm:$0xff] %v677
      %832 = vst [vmem:[#allocation3 + $0x100] sm:$0xff] %v778
      %833 = vst [vmem:[#allocation3 + $0x108] sm:$0xff] %v679
      %834 = vst [vmem:[#allocation3 + $0x110] sm:$0xff] %v681
      %835 = vst [vmem:[#allocation3 + $0x118] sm:$0xff] %v781
      %836 = vst [vmem:[#allocation3 + $0x120] sm:$0xff] %v685
      %837 = vst [vmem:[#allocation3 + $0x128] sm:$0xff] %v687
      %838 = vst [vmem:[#allocation3 + $0x130] sm:$0xff] %v786
      %839 = vst [vmem:[#allocation3 + $0x138] sm:$0xff] %v689
      %840 = vst [vmem:[#allocation3 + $0x140] sm:$0xff] %v691
      %841 = vst [vmem:[#allocation3 + $0x148] sm:$0xff] %v789
      %842 = vst [vmem:[#allocation3 + $0x150] sm:$0xff] %v695
      %843 = vst [vmem:[#allocation3 + $0x158] sm:$0xff] %v697
      %844 = vst [vmem:[#allocation3 + $0x160] sm:$0xff] %v794
      %845 = vst [vmem:[#allocation3 + $0x168] sm:$0xff] %v699
      %846 = vst [vmem:[#allocation3 + $0x170] sm:$0xff] %v701
      %847 = vst [vmem:[#allocation3 + $0x178] sm:$0xff] %v797
      %v848 = vld [vmem:[#allocation3] sm:$0xff]
      %v849 = vld [vmem:[#allocation3 + $0x8] sm:$0xff]
      %v850 = vld [vmem:[#allocation3 + $0x10] sm:$0xff]
      %v851 = vld [vmem:[#allocation3 + $0x18] sm:$0xff]
      %v852 = vld [vmem:[#allocation3 + $0x20] sm:$0xff]
      %v853 = vld [vmem:[#allocation3 + $0x28] sm:$0xff]
      %v886 = vunpack.c.l.b16 %v310
      %v887 = vunpack.c.h.b16 %v310
      %v888 = vunpack.c.l.b16 %v311
      %v889 = vunpack.c.l.b16 %v312
      %v890 = vunpack.c.h.b16 %v312
      %v891 = vunpack.c.l.b16 %v313
      %v892 = vunpack.c.l.b16 %v314
      %v893 = vunpack.c.h.b16 %v314
      %v894 = vunpack.c.l.b16 %v315
      %v895 = vunpack.c.l.b16 %v316
      %v896 = vunpack.c.h.b16 %v316
      %v897 = vunpack.c.l.b16 %v317
      %v898 = vunpack.c.l.b16 %v318
      %v899 = vunpack.c.h.b16 %v318
      %v900 = vunpack.c.l.b16 %v319
      %v901 = vunpack.c.l.b16 %v320
      %v902 = vunpack.c.h.b16 %v320
      %v903 = vunpack.c.l.b16 %v321
      %v904 = vunpack.c.l.b16 %v322
      %v905 = vunpack.c.h.b16 %v322
      %v906 = vunpack.c.l.b16 %v323
      %v907 = vunpack.c.l.b16 %v324
      %v908 = vunpack.c.h.b16 %v324
      %v909 = vunpack.c.l.b16 %v325
      %v910 = vunpack.c.l.b16 %v326
      %v911 = vunpack.c.h.b16 %v326
      %v912 = vunpack.c.l.b16 %v327
      %v913 = vunpack.c.l.b16 %v328
      %v914 = vunpack.c.h.b16 %v328
      %v915 = vunpack.c.l.b16 %v329
      %v916 = vunpack.c.l.b16 %v330
      %v917 = vunpack.c.h.b16 %v330
      %v918 = vunpack.c.l.b16 %v331
      %v919 = vunpack.c.l.b16 %v332
      %v920 = vunpack.c.h.b16 %v332
      %v921 = vunpack.c.l.b16 %v333
      %v922 = vunpack.c.l.b16 %v334
      %v923 = vunpack.c.h.b16 %v334
      %v924 = vunpack.c.l.b16 %v335
      %v925 = vunpack.c.l.b16 %v336
      %v926 = vunpack.c.h.b16 %v336
      %v927 = vunpack.c.l.b16 %v337
      %v928 = vunpack.c.l.b16 %v338
      %v929 = vunpack.c.h.b16 %v338
      %v930 = vunpack.c.l.b16 %v339
      %v931 = vunpack.c.l.b16 %v340
      %v932 = vunpack.c.h.b16 %v340
      %v933 = vunpack.c.l.b16 %v341
      %v934 = vpack.c.b16 %v889, %v886
      %v935 = vpack.c.b16 %v890, %v887
      %v936 = vpack.c.b16 %v891, %v888
      %v937 = vpack.c.b16 %v895, %v892
      %v938 = vpack.c.b16 %v896, %v893
      %v939 = vpack.c.b16 %v897, %v894
      %v940 = vpack.c.b16 %v901, %v898
      %v941 = vpack.c.b16 %v902, %v899
      %v942 = vpack.c.b16 %v903, %v900
      %v943 = vpack.c.b16 %v907, %v904
      %v944 = vpack.c.b16 %v908, %v905
      %v945 = vpack.c.b16 %v909, %v906
      %v946 = vpack.c.b16 %v913, %v910
      %v947 = vpack.c.b16 %v914, %v911
      %v948 = vpack.c.b16 %v915, %v912
      %v949 = vpack.c.b16 %v919, %v916
      %v950 = vpack.c.b16 %v920, %v917
      %v951 = vpack.c.b16 %v921, %v918
      %v952 = vpack.c.b16 %v925, %v922
      %v953 = vpack.c.b16 %v926, %v923
      %v954 = vpack.c.b16 %v927, %v924
      %v955 = vpack.c.b16 %v931, %v928
      %v956 = vpack.c.b16 %v932, %v929
      %v957 = vpack.c.b16 %v933, %v930
      %982 = vmatprep.subr.bf16.mxu0 %v956
      %983 = vmatpush1.bf16.msra.mxu0 %v955
      %984 = vmatprep.subr.bf16.mxu0 %v953
      %985 = vmatpush1.bf16.msra.mxu0 %v952
      %986 = vmatprep.subr.bf16.mxu0 %v950
      %987 = vmatpush1.bf16.msra.mxu0 %v949
      %988 = vmatprep.subr.bf16.mxu0 %v947
      %989 = vmatpush1.bf16.msra.mxu0 %v946
      %990 = vmatprep.subr.bf16.mxu0 %v944
      %991 = vmatpush1.bf16.msra.mxu0 %v943
      %992 = vmatprep.subr.bf16.mxu0 %v941
      %993 = vmatpush1.bf16.msra.mxu0 %v940
      %994 = vmatprep.subr.bf16.mxu0 %v938
      %995 = vmatpush1.bf16.msra.mxu0 %v937
      %996 = vmatprep.subr.bf16.mxu0 %v935
      %997 = vmatpush1.bf16.msra.mxu0 %v934
      %998 = vmatprep.subr.bf16.mxu0 0
      %999 = vmatpush2.bf16.msra.mxu0 0
      %1000 = vmatprep.subr.bf16.mxu0 0
      %1001 = vmatpush2.bf16.msra.mxu0 0
      %1002 = vmatprep.subr.bf16.mxu0 0
      %1003 = vmatpush2.bf16.msra.mxu0 0
      %1004 = vmatprep.subr.bf16.mxu0 0
      %1005 = vmatpush2.bf16.msra.mxu0 0
      %1006 = vmatprep.subr.bf16.mxu0 0
      %1007 = vmatpush2.bf16.msra.mxu0 0
      %1008 = vmatprep.subr.bf16.mxu0 0
      %1009 = vmatpush2.bf16.msra.mxu0 0
      %1010 = vmatprep.subr.bf16.mxu0 0
      %1011 = vmatpush2.bf16.msra.mxu0 0
      %1012 = vmatprep.subr.bf16.mxu0 0
      %1013 = vmatpush2.bf16.msra.mxu0 0
      %1014 = vmatprep.mubr.bf16.mxu0 0
      %1015 = vmatmul.mubr.bf16.gmra.mxu0 0
      %v1016 = vpop.f32.mrf.mxu0
      %v1017 = vadd.f32 0.0, %v1016
      %v1018 = vpop.f32.mrf.mxu0
      %v1019 = vadd.f32 0.0, %v1018
      %v1020 = vpop.f32.mrf.mxu0
      %v1021 = vadd.f32 0.0, %v1020
      %v1022 = vpop.f32.mrf.mxu0
      %v1023 = vadd.f32 0.0, %v1022
      %1024 = vdwg.mxu0
      %1025 = vmatprep.subr.bf16.mxu0 0
      %1026 = vmatpush1.bf16.msra.mxu0 %v957
      %1027 = vmatprep.subr.bf16.mxu0 0
      %1028 = vmatpush1.bf16.msra.mxu0 %v954
      %1029 = vmatprep.subr.bf16.mxu0 0
      %1030 = vmatpush1.bf16.msra.mxu0 %v951
      %1031 = vmatprep.subr.bf16.mxu0 0
      %1032 = vmatpush1.bf16.msra.mxu0 %v948
      %1033 = vmatprep.subr.bf16.mxu0 0
      %1034 = vmatpush1.bf16.msra.mxu0 %v945
      %1035 = vmatprep.subr.bf16.mxu0 0
      %1036 = vmatpush1.bf16.msra.mxu0 %v942
      %1037 = vmatprep.subr.bf16.mxu0 0
      %1038 = vmatpush1.bf16.msra.mxu0 %v939
      %1039 = vmatprep.subr.bf16.mxu0 0
      %1040 = vmatpush1.bf16.msra.mxu0 %v936
      %1041 = vmatprep.subr.bf16.mxu0 0
      %1042 = vmatpush2.bf16.msra.mxu0 0
      %1043 = vmatprep.subr.bf16.mxu0 0
      %1044 = vmatpush2.bf16.msra.mxu0 0
      %1045 = vmatprep.subr.bf16.mxu0 0
      %1046 = vmatpush2.bf16.msra.mxu0 0
      %1047 = vmatprep.subr.bf16.mxu0 0
      %1048 = vmatpush2.bf16.msra.mxu0 0
      %1049 = vmatprep.subr.bf16.mxu0 0
      %1050 = vmatpush2.bf16.msra.mxu0 0
      %1051 = vmatprep.subr.bf16.mxu0 0
      %1052 = vmatpush2.bf16.msra.mxu0 0
      %1053 = vmatprep.subr.bf16.mxu0 0
      %1054 = vmatpush2.bf16.msra.mxu0 0
      %1055 = vmatprep.subr.bf16.mxu0 0
      %1056 = vmatpush2.bf16.msra.mxu0 0
      %1057 = vmatprep.mubr.bf16.mxu0 0
      %1058 = vmatmul.mubr.bf16.gmra.mxu0 0
      %v1059 = vpop.f32.mrf.mxu0
      %v1060 = vadd.f32 0.0, %v1059
      %v1061 = vpop.f32.mrf.mxu0
      %v1062 = vpop.f32.mrf.mxu0
      %v1063 = vadd.f32 0.0, %v1062
      %v1064 = vpop.f32.mrf.mxu0
      %1065 = vdwg.mxu0
      %v1066 = vadd.f32 %v848, %v1017
      %v1067 = vadd.f32 %v851, %v1021
      %v1068 = vxor.u32 %v1066, 2147483648
      %v1069 = vxor.u32 %v1067, 2147483648
      %v1070 = vmul.f32 %v1068, 1.442695
      %v1071 = vpow.pop %v1070
      %v1072 = vmul.f32 %v1069, 1.442695
      %v1073 = vpow.pop %v1072
      %v1074 = vadd.f32 %v1071, 1.0
      %v1075 = vadd.f32 %v1073, 1.0
      %v1076 = vrcp.pop %v1074
      %v1077 = vmul.f32 1.0, %v1076
      %v1078 = vrcp.pop %v1075
      %v1079 = vmul.f32 1.0, %v1078
      %v1080 = vadd.f32 %v1060, %v348
      %v1081 = vadd.f32 %v1063, %v348
      %v1082 = vmul.f32 %v1077, %v1080
      %v1083 = vmul.f32 %v1079, %v1081
      %v1084 = vadd.f32 %v850, %v1082
      %v1085 = vadd.f32 %v853, %v1083
      %v1086 = vtanh.pop %v1084
      %v1087 = vtanh.pop %v1085
      %v1088 = vadd.f32 %v849, %v1019
      %v1089 = vadd.f32 %v852, %v1023
      %v1090 = vxor.u32 %v1088, 2147483648
      %v1091 = vxor.u32 %v1089, 2147483648
      %v1092 = vmul.f32 %v1090, 1.442695
      %v1093 = vpow.pop %v1092
      %v1094 = vmul.f32 %v1091, 1.442695
      %v1095 = vpow.pop %v1094
      %v1096 = vadd.f32 %v1093, 1.0
      %v1097 = vadd.f32 %v1095, 1.0
      %v1098 = vrcp.pop %v1096
      %v1099 = vmul.f32 1.0, %v1098
      %v1100 = vrcp.pop %v1097
      %v1101 = vmul.f32 1.0, %v1100
      %v1102 = vsub.f32 0.0, %v1086
      %v1103 = vsub.f32 0.0, %v1087
      %v1104 = vmul.f32 %v1099, %v1102
      %v1105 = vmul.f32 %v1101, %v1103
      %v1106 = vadd.f32 %v1086, %v1104
      %v1107 = vadd.f32 %v1087, %v1105
      %v1108 = vpack.c.bf16 %v1107, %v1106
      %v1110 = vunpack.c.l.b16 %v1108
      %v1111 = vunpack.c.h.b16 %v1108
      %v1112 = vpack.c.b16 %v1110, %v1110
      %v1113 = vpack.c.b16 %v1111, %v1111
      %1116 = vst [vmem:[#allocation2] sm:$0xf] %v1112
      %1117 = vst [vmem:[#allocation2 + $0x4] sm:$0xf] %v1113
      %v1118 = vld [vmem:[#allocation3 + $0x30] sm:$0xff]
      %v1119 = vld [vmem:[#allocation3 + $0x38] sm:$0xff]
      %v1120 = vld [vmem:[#allocation3 + $0x40] sm:$0xff]
      %v1121 = vld [vmem:[#allocation3 + $0x48] sm:$0xff]
      %v1122 = vld [vmem:[#allocation3 + $0x50] sm:$0xff]
      %v1123 = vld [vmem:[#allocation3 + $0x58] sm:$0xff]
      %1124 = vmatprep.subr.bf16.mxu0 %v956
      %1125 = vmatpush1.bf16.msra.mxu0 %v955
      %1126 = vmatprep.subr.bf16.mxu0 %v953
      %1127 = vmatpush1.bf16.msra.mxu0 %v952
      %1128 = vmatprep.subr.bf16.mxu0 %v950
      %1129 = vmatpush1.bf16.msra.mxu0 %v949
      %1130 = vmatprep.subr.bf16.mxu0 %v947
      %1131 = vmatpush1.bf16.msra.mxu0 %v946
      %1132 = vmatprep.subr.bf16.mxu0 %v944
      %1133 = vmatpush1.bf16.msra.mxu0 %v943
      %1134 = vmatprep.subr.bf16.mxu0 %v941
      %1135 = vmatpush1.bf16.msra.mxu0 %v940
      %1136 = vmatprep.subr.bf16.mxu0 %v938
      %1137 = vmatpush1.bf16.msra.mxu0 %v937
      %1138 = vmatprep.subr.bf16.mxu0 %v935
      %1139 = vmatpush1.bf16.msra.mxu0 %v934
      %1140 = vmatprep.subr.bf16.mxu0 0
      %1141 = vmatpush2.bf16.msra.mxu0 0
      %1142 = vmatprep.subr.bf16.mxu0 0
      %1143 = vmatpush2.bf16.msra.mxu0 0
      %1144 = vmatprep.subr.bf16.mxu0 0
      %1145 = vmatpush2.bf16.msra.mxu0 0
      %1146 = vmatprep.subr.bf16.mxu0 0
      %1147 = vmatpush2.bf16.msra.mxu0 0
      %1148 = vmatprep.subr.bf16.mxu0 0
      %1149 = vmatpush2.bf16.msra.mxu0 0
      %1150 = vmatprep.subr.bf16.mxu0 0
      %1151 = vmatpush2.bf16.msra.mxu0 0
      %1152 = vmatprep.subr.bf16.mxu0 0
      %1153 = vmatpush2.bf16.msra.mxu0 0
      %1154 = vmatprep.subr.bf16.mxu0 0
      %1155 = vmatpush2.bf16.msra.mxu0 0
      %1156 = vmatprep.mubr.bf16.mxu0 0
      %1157 = vmatmul.mubr.bf16.gmra.mxu0 %v1108
      %v1158 = vpop.f32.mrf.mxu0
      %v1159 = vadd.f32 0.0, %v1158
      %v1160 = vpop.f32.mrf.mxu0
      %v1161 = vadd.f32 0.0, %v1160
      %v1162 = vpop.f32.mrf.mxu0
      %v1163 = vadd.f32 0.0, %v1162
      %v1164 = vpop.f32.mrf.mxu0
      %v1165 = vadd.f32 0.0, %v1164
      %1166 = vdwg.mxu0
      %1167 = vmatprep.subr.bf16.mxu0 0
      %1168 = vmatpush1.bf16.msra.mxu0 %v957
      %1169 = vmatprep.subr.bf16.mxu0 0
      %1170 = vmatpush1.bf16.msra.mxu0 %v954
      %1171 = vmatprep.subr.bf16.mxu0 0
      %1172 = vmatpush1.bf16.msra.mxu0 %v951
      %1173 = vmatprep.subr.bf16.mxu0 0
      %1174 = vmatpush1.bf16.msra.mxu0 %v948
      %1175 = vmatprep.subr.bf16.mxu0 0
      %1176 = vmatpush1.bf16.msra.mxu0 %v945
      %1177 = vmatprep.subr.bf16.mxu0 0
      %1178 = vmatpush1.bf16.msra.mxu0 %v942
      %1179 = vmatprep.subr.bf16.mxu0 0
      %1180 = vmatpush1.bf16.msra.mxu0 %v939
      %1181 = vmatprep.subr.bf16.mxu0 0
      %1182 = vmatpush1.bf16.msra.mxu0 %v936
      %1183 = vmatprep.subr.bf16.mxu0 0
      %1184 = vmatpush2.bf16.msra.mxu0 0
      %1185 = vmatprep.subr.bf16.mxu0 0
      %1186 = vmatpush2.bf16.msra.mxu0 0
      %1187 = vmatprep.subr.bf16.mxu0 0
      %1188 = vmatpush2.bf16.msra.mxu0 0
      %1189 = vmatprep.subr.bf16.mxu0 0
      %1190 = vmatpush2.bf16.msra.mxu0 0
      %1191 = vmatprep.subr.bf16.mxu0 0
      %1192 = vmatpush2.bf16.msra.mxu0 0
      %1193 = vmatprep.subr.bf16.mxu0 0
      %1194 = vmatpush2.bf16.msra.mxu0 0
      %1195 = vmatprep.subr.bf16.mxu0 0
      %1196 = vmatpush2.bf16.msra.mxu0 0
      %1197 = vmatprep.subr.bf16.mxu0 0
      %1198 = vmatpush2.bf16.msra.mxu0 0
      %1199 = vmatprep.mubr.bf16.mxu0 0
      %1200 = vmatmul.mubr.bf16.gmra.mxu0 %v1108
      %v1201 = vpop.f32.mrf.mxu0
      %v1202 = vadd.f32 0.0, %v1201
      %v1203 = vpop.f32.mrf.mxu0
      %v1204 = vpop.f32.mrf.mxu0
      %v1205 = vadd.f32 0.0, %v1204
      %v1206 = vpop.f32.mrf.mxu0
      %1207 = vdwg.mxu0
      %v1208 = vadd.f32 %v1118, %v1159
      %v1209 = vadd.f32 %v1121, %v1163
      %v1210 = vxor.u32 %v1208, 2147483648
      %v1211 = vxor.u32 %v1209, 2147483648
      %v1212 = vmul.f32 %v1210, 1.442695
      %v1213 = vpow.pop %v1212
      %v1214 = vmul.f32 %v1211, 1.442695
      %v1215 = vpow.pop %v1214
      %v1216 = vadd.f32 %v1213, 1.0
      %v1217 = vadd.f32 %v1215, 1.0
      %v1218 = vrcp.pop %v1216
      %v1219 = vmul.f32 1.0, %v1218
      %v1220 = vrcp.pop %v1217
      %v1221 = vmul.f32 1.0, %v1220
      %v1222 = vadd.f32 %v1202, %v348
      %v1223 = vadd.f32 %v1205, %v348
      %v1224 = vmul.f32 %v1219, %v1222
      %v1225 = vmul.f32 %v1221, %v1223
      %v1226 = vadd.f32 %v1120, %v1224
      %v1227 = vadd.f32 %v1123, %v1225
      %v1228 = vtanh.pop %v1226
      %v1229 = vtanh.pop %v1227
      %v1230 = vadd.f32 %v1119, %v1161
      %v1231 = vadd.f32 %v1122, %v1165
      %v1232 = vxor.u32 %v1230, 2147483648
      %v1233 = vxor.u32 %v1231, 2147483648
      %v1234 = vmul.f32 %v1232, 1.442695
      %v1235 = vpow.pop %v1234
      %v1236 = vmul.f32 %v1233, 1.442695
      %v1237 = vpow.pop %v1236
      %v1238 = vadd.f32 %v1235, 1.0
      %v1239 = vadd.f32 %v1237, 1.0
      %v1240 = vrcp.pop %v1238
      %v1241 = vmul.f32 1.0, %v1240
      %v1242 = vrcp.pop %v1239
      %v1243 = vmul.f32 1.0, %v1242
      %v1244 = vsub.f32 %v1106, %v1228
      %v1245 = vsub.f32 %v1107, %v1229
      %v1246 = vmul.f32 %v1241, %v1244
      %v1247 = vmul.f32 %v1243, %v1245
      %v1248 = vadd.f32 %v1228, %v1246
      %v1249 = vadd.f32 %v1229, %v1247
      %v1250 = vpack.c.bf16 %v1249, %v1248
      %v1252 = vunpack.c.l.b16 %v1250
      %v1253 = vunpack.c.h.b16 %v1250
      %v1254 = vpack.c.b16 %v1252, %v1252
      %v1255 = vpack.c.b16 %v1253, %v1253
      %1258 = vst [vmem:[#allocation2 + $0x8] sm:$0xf] %v1254
      %1259 = vst [vmem:[#allocation2 + $0xc] sm:$0xf] %v1255
      %v1260 = vld [vmem:[#allocation3 + $0x60] sm:$0xff]
      %v1261 = vld [vmem:[#allocation3 + $0x68] sm:$0xff]
      %v1262 = vld [vmem:[#allocation3 + $0x70] sm:$0xff]
      %v1263 = vld [vmem:[#allocation3 + $0x78] sm:$0xff]
      %v1264 = vld [vmem:[#allocation3 + $0x80] sm:$0xff]
      %v1265 = vld [vmem:[#allocation3 + $0x88] sm:$0xff]
      %1266 = vmatprep.subr.bf16.mxu0 %v956
      %1267 = vmatpush1.bf16.msra.mxu0 %v955
      %1268 = vmatprep.subr.bf16.mxu0 %v953
      %1269 = vmatpush1.bf16.msra.mxu0 %v952
      %1270 = vmatprep.subr.bf16.mxu0 %v950
      %1271 = vmatpush1.bf16.msra.mxu0 %v949
      %1272 = vmatprep.subr.bf16.mxu0 %v947
      %1273 = vmatpush1.bf16.msra.mxu0 %v946
      %1274 = vmatprep.subr.bf16.mxu0 %v944
      %1275 = vmatpush1.bf16.msra.mxu0 %v943
      %1276 = vmatprep.subr.bf16.mxu0 %v941
      %1277 = vmatpush1.bf16.msra.mxu0 %v940
      %1278 = vmatprep.subr.bf16.mxu0 %v938
      %1279 = vmatpush1.bf16.msra.mxu0 %v937
      %1280 = vmatprep.subr.bf16.mxu0 %v935
      %1281 = vmatpush1.bf16.msra.mxu0 %v934
      %1282 = vmatprep.subr.bf16.mxu0 0
      %1283 = vmatpush2.bf16.msra.mxu0 0
      %1284 = vmatprep.subr.bf16.mxu0 0
      %1285 = vmatpush2.bf16.msra.mxu0 0
      %1286 = vmatprep.subr.bf16.mxu0 0
      %1287 = vmatpush2.bf16.msra.mxu0 0
      %1288 = vmatprep.subr.bf16.mxu0 0
      %1289 = vmatpush2.bf16.msra.mxu0 0
      %1290 = vmatprep.subr.bf16.mxu0 0
      %1291 = vmatpush2.bf16.msra.mxu0 0
      %1292 = vmatprep.subr.bf16.mxu0 0
      %1293 = vmatpush2.bf16.msra.mxu0 0
      %1294 = vmatprep.subr.bf16.mxu0 0
      %1295 = vmatpush2.bf16.msra.mxu0 0
      %1296 = vmatprep.subr.bf16.mxu0 0
      %1297 = vmatpush2.bf16.msra.mxu0 0
      %1298 = vmatprep.mubr.bf16.mxu0 0
      %1299 = vmatmul.mubr.bf16.gmra.mxu0 %v1250
      %v1300 = vpop.f32.mrf.mxu0
      %v1301 = vadd.f32 0.0, %v1300
      %v1302 = vpop.f32.mrf.mxu0
      %v1303 = vadd.f32 0.0, %v1302
      %v1304 = vpop.f32.mrf.mxu0
      %v1305 = vadd.f32 0.0, %v1304
      %v1306 = vpop.f32.mrf.mxu0
      %v1307 = vadd.f32 0.0, %v1306
      %1308 = vdwg.mxu0
      %1309 = vmatprep.subr.bf16.mxu0 0
      %1310 = vmatpush1.bf16.msra.mxu0 %v957
      %1311 = vmatprep.subr.bf16.mxu0 0
      %1312 = vmatpush1.bf16.msra.mxu0 %v954
      %1313 = vmatprep.subr.bf16.mxu0 0
      %1314 = vmatpush1.bf16.msra.mxu0 %v951
      %1315 = vmatprep.subr.bf16.mxu0 0
      %1316 = vmatpush1.bf16.msra.mxu0 %v948
      %1317 = vmatprep.subr.bf16.mxu0 0
      %1318 = vmatpush1.bf16.msra.mxu0 %v945
      %1319 = vmatprep.subr.bf16.mxu0 0
      %1320 = vmatpush1.bf16.msra.mxu0 %v942
      %1321 = vmatprep.subr.bf16.mxu0 0
      %1322 = vmatpush1.bf16.msra.mxu0 %v939
      %1323 = vmatprep.subr.bf16.mxu0 0
      %1324 = vmatpush1.bf16.msra.mxu0 %v936
      %1325 = vmatprep.subr.bf16.mxu0 0
      %1326 = vmatpush2.bf16.msra.mxu0 0
      %1327 = vmatprep.subr.bf16.mxu0 0
      %1328 = vmatpush2.bf16.msra.mxu0 0
      %1329 = vmatprep.subr.bf16.mxu0 0
      %1330 = vmatpush2.bf16.msra.mxu0 0
      %1331 = vmatprep.subr.bf16.mxu0 0
      %1332 = vmatpush2.bf16.msra.mxu0 0
      %1333 = vmatprep.subr.bf16.mxu0 0
      %1334 = vmatpush2.bf16.msra.mxu0 0
      %1335 = vmatprep.subr.bf16.mxu0 0
      %1336 = vmatpush2.bf16.msra.mxu0 0
      %1337 = vmatprep.subr.bf16.mxu0 0
      %1338 = vmatpush2.bf16.msra.mxu0 0
      %1339 = vmatprep.subr.bf16.mxu0 0
      %1340 = vmatpush2.bf16.msra.mxu0 0
      %1341 = vmatprep.mubr.bf16.mxu0 0
      %1342 = vmatmul.mubr.bf16.gmra.mxu0 %v1250
      %v1343 = vpop.f32.mrf.mxu0
      %v1344 = vadd.f32 0.0, %v1343
      %v1345 = vpop.f32.mrf.mxu0
      %v1346 = vpop.f32.mrf.mxu0
      %v1347 = vadd.f32 0.0, %v1346
      %v1348 = vpop.f32.mrf.mxu0
      %1349 = vdwg.mxu0
      %v1350 = vadd.f32 %v1260, %v1301
      %v1351 = vadd.f32 %v1263, %v1305
      %v1352 = vxor.u32 %v1350, 2147483648
      %v1353 = vxor.u32 %v1351, 2147483648
      %v1354 = vmul.f32 %v1352, 1.442695
      %v1355 = vpow.pop %v1354
      %v1356 = vmul.f32 %v1353, 1.442695
      %v1357 = vpow.pop %v1356
      %v1358 = vadd.f32 %v1355, 1.0
      %v1359 = vadd.f32 %v1357, 1.0
      %v1360 = vrcp.pop %v1358
      %v1361 = vmul.f32 1.0, %v1360
      %v1362 = vrcp.pop %v1359
      %v1363 = vmul.f32 1.0, %v1362
      %v1364 = vadd.f32 %v1344, %v348
      %v1365 = vadd.f32 %v1347, %v348
      %v1366 = vmul.f32 %v1361, %v1364
      %v1367 = vmul.f32 %v1363, %v1365
      %v1368 = vadd.f32 %v1262, %v1366
      %v1369 = vadd.f32 %v1265, %v1367
      %v1370 = vtanh.pop %v1368
      %v1371 = vtanh.pop %v1369
      %v1372 = vadd.f32 %v1261, %v1303
      %v1373 = vadd.f32 %v1264, %v1307
      %v1374 = vxor.u32 %v1372, 2147483648
      %v1375 = vxor.u32 %v1373, 2147483648
      %v1376 = vmul.f32 %v1374, 1.442695
      %v1377 = vpow.pop %v1376
      %v1378 = vmul.f32 %v1375, 1.442695
      %v1379 = vpow.pop %v1378
      %v1380 = vadd.f32 %v1377, 1.0
      %v1381 = vadd.f32 %v1379, 1.0
      %v1382 = vrcp.pop %v1380
      %v1383 = vmul.f32 1.0, %v1382
      %v1384 = vrcp.pop %v1381
      %v1385 = vmul.f32 1.0, %v1384
      %v1386 = vsub.f32 %v1248, %v1370
      %v1387 = vsub.f32 %v1249, %v1371
      %v1388 = vmul.f32 %v1383, %v1386
      %v1389 = vmul.f32 %v1385, %v1387
      %v1390 = vadd.f32 %v1370, %v1388
      %v1391 = vadd.f32 %v1371, %v1389
      %v1392 = vpack.c.bf16 %v1391, %v1390
      %v1394 = vunpack.c.l.b16 %v1392
      %v1395 = vunpack.c.h.b16 %v1392
      %v1396 = vpack.c.b16 %v1394, %v1394
      %v1397 = vpack.c.b16 %v1395, %v1395
      %1400 = vst [vmem:[#allocation2 + $0x10] sm:$0xf] %v1396
      %1401 = vst [vmem:[#allocation2 + $0x14] sm:$0xf] %v1397
      %v1402 = vld [vmem:[#allocation3 + $0x90] sm:$0xff]
      %v1403 = vld [vmem:[#allocation3 + $0x98] sm:$0xff]
      %v1404 = vld [vmem:[#allocation3 + $0xa0] sm:$0xff]
      %v1405 = vld [vmem:[#allocation3 + $0xa8] sm:$0xff]
      %v1406 = vld [vmem:[#allocation3 + $0xb0] sm:$0xff]
      %v1407 = vld [vmem:[#allocation3 + $0xb8] sm:$0xff]
      %1408 = vmatprep.subr.bf16.mxu0 %v956
      %1409 = vmatpush1.bf16.msra.mxu0 %v955
      %1410 = vmatprep.subr.bf16.mxu0 %v953
      %1411 = vmatpush1.bf16.msra.mxu0 %v952
      %1412 = vmatprep.subr.bf16.mxu0 %v950
      %1413 = vmatpush1.bf16.msra.mxu0 %v949
      %1414 = vmatprep.subr.bf16.mxu0 %v947
      %1415 = vmatpush1.bf16.msra.mxu0 %v946
      %1416 = vmatprep.subr.bf16.mxu0 %v944
      %1417 = vmatpush1.bf16.msra.mxu0 %v943
      %1418 = vmatprep.subr.bf16.mxu0 %v941
      %1419 = vmatpush1.bf16.msra.mxu0 %v940
      %1420 = vmatprep.subr.bf16.mxu0 %v938
      %1421 = vmatpush1.bf16.msra.mxu0 %v937
      %1422 = vmatprep.subr.bf16.mxu0 %v935
      %1423 = vmatpush1.bf16.msra.mxu0 %v934
      %1424 = vmatprep.subr.bf16.mxu0 0
      %1425 = vmatpush2.bf16.msra.mxu0 0
      %1426 = vmatprep.subr.bf16.mxu0 0
      %1427 = vmatpush2.bf16.msra.mxu0 0
      %1428 = vmatprep.subr.bf16.mxu0 0
      %1429 = vmatpush2.bf16.msra.mxu0 0
      %1430 = vmatprep.subr.bf16.mxu0 0
      %1431 = vmatpush2.bf16.msra.mxu0 0
      %1432 = vmatprep.subr.bf16.mxu0 0
      %1433 = vmatpush2.bf16.msra.mxu0 0
      %1434 = vmatprep.subr.bf16.mxu0 0
      %1435 = vmatpush2.bf16.msra.mxu0 0
      %1436 = vmatprep.subr.bf16.mxu0 0
      %1437 = vmatpush2.bf16.msra.mxu0 0
      %1438 = vmatprep.subr.bf16.mxu0 0
      %1439 = vmatpush2.bf16.msra.mxu0 0
      %1440 = vmatprep.mubr.bf16.mxu0 0
      %1441 = vmatmul.mubr.bf16.gmra.mxu0 %v1392
      %v1442 = vpop.f32.mrf.mxu0
      %v1443 = vadd.f32 0.0, %v1442
      %v1444 = vpop.f32.mrf.mxu0
      %v1445 = vadd.f32 0.0, %v1444
      %v1446 = vpop.f32.mrf.mxu0
      %v1447 = vadd.f32 0.0, %v1446
      %v1448 = vpop.f32.mrf.mxu0
      %v1449 = vadd.f32 0.0, %v1448
      %1450 = vdwg.mxu0
      %1451 = vmatprep.subr.bf16.mxu0 0
      %1452 = vmatpush1.bf16.msra.mxu0 %v957
      %1453 = vmatprep.subr.bf16.mxu0 0
      %1454 = vmatpush1.bf16.msra.mxu0 %v954
      %1455 = vmatprep.subr.bf16.mxu0 0
      %1456 = vmatpush1.bf16.msra.mxu0 %v951
      %1457 = vmatprep.subr.bf16.mxu0 0
      %1458 = vmatpush1.bf16.msra.mxu0 %v948
      %1459 = vmatprep.subr.bf16.mxu0 0
      %1460 = vmatpush1.bf16.msra.mxu0 %v945
      %1461 = vmatprep.subr.bf16.mxu0 0
      %1462 = vmatpush1.bf16.msra.mxu0 %v942
      %1463 = vmatprep.subr.bf16.mxu0 0
      %1464 = vmatpush1.bf16.msra.mxu0 %v939
      %1465 = vmatprep.subr.bf16.mxu0 0
      %1466 = vmatpush1.bf16.msra.mxu0 %v936
      %1467 = vmatprep.subr.bf16.mxu0 0
      %1468 = vmatpush2.bf16.msra.mxu0 0
      %1469 = vmatprep.subr.bf16.mxu0 0
      %1470 = vmatpush2.bf16.msra.mxu0 0
      %1471 = vmatprep.subr.bf16.mxu0 0
      %1472 = vmatpush2.bf16.msra.mxu0 0
      %1473 = vmatprep.subr.bf16.mxu0 0
      %1474 = vmatpush2.bf16.msra.mxu0 0
      %1475 = vmatprep.subr.bf16.mxu0 0
      %1476 = vmatpush2.bf16.msra.mxu0 0
      %1477 = vmatprep.subr.bf16.mxu0 0
      %1478 = vmatpush2.bf16.msra.mxu0 0
      %1479 = vmatprep.subr.bf16.mxu0 0
      %1480 = vmatpush2.bf16.msra.mxu0 0
      %1481 = vmatprep.subr.bf16.mxu0 0
      %1482 = vmatpush2.bf16.msra.mxu0 0
      %1483 = vmatprep.mubr.bf16.mxu0 0
      %1484 = vmatmul.mubr.bf16.gmra.mxu0 %v1392
      %v1485 = vpop.f32.mrf.mxu0
      %v1486 = vadd.f32 0.0, %v1485
      %v1487 = vpop.f32.mrf.mxu0
      %v1488 = vpop.f32.mrf.mxu0
      %v1489 = vadd.f32 0.0, %v1488
      %v1490 = vpop.f32.mrf.mxu0
      %1491 = vdwg.mxu0
      %v1492 = vadd.f32 %v1402, %v1443
      %v1493 = vadd.f32 %v1405, %v1447
      %v1494 = vxor.u32 %v1492, 2147483648
      %v1495 = vxor.u32 %v1493, 2147483648
      %v1496 = vmul.f32 %v1494, 1.442695
      %v1497 = vpow.pop %v1496
      %v1498 = vmul.f32 %v1495, 1.442695
      %v1499 = vpow.pop %v1498
      %v1500 = vadd.f32 %v1497, 1.0
      %v1501 = vadd.f32 %v1499, 1.0
      %v1502 = vrcp.pop %v1500
      %v1503 = vmul.f32 1.0, %v1502
      %v1504 = vrcp.pop %v1501
      %v1505 = vmul.f32 1.0, %v1504
      %v1506 = vadd.f32 %v1486, %v348
      %v1507 = vadd.f32 %v1489, %v348
      %v1508 = vmul.f32 %v1503, %v1506
      %v1509 = vmul.f32 %v1505, %v1507
      %v1510 = vadd.f32 %v1404, %v1508
      %v1511 = vadd.f32 %v1407, %v1509
      %v1512 = vtanh.pop %v1510
      %v1513 = vtanh.pop %v1511
      %v1514 = vadd.f32 %v1403, %v1445
      %v1515 = vadd.f32 %v1406, %v1449
      %v1516 = vxor.u32 %v1514, 2147483648
      %v1517 = vxor.u32 %v1515, 2147483648
      %v1518 = vmul.f32 %v1516, 1.442695
      %v1519 = vpow.pop %v1518
      %v1520 = vmul.f32 %v1517, 1.442695
      %v1521 = vpow.pop %v1520
      %v1522 = vadd.f32 %v1519, 1.0
      %v1523 = vadd.f32 %v1521, 1.0
      %v1524 = vrcp.pop %v1522
      %v1525 = vmul.f32 1.0, %v1524
      %v1526 = vrcp.pop %v1523
      %v1527 = vmul.f32 1.0, %v1526
      %v1528 = vsub.f32 %v1390, %v1512
      %v1529 = vsub.f32 %v1391, %v1513
      %v1530 = vmul.f32 %v1525, %v1528
      %v1531 = vmul.f32 %v1527, %v1529
      %v1532 = vadd.f32 %v1512, %v1530
      %v1533 = vadd.f32 %v1513, %v1531
      %v1534 = vpack.c.bf16 %v1533, %v1532
      %v1536 = vunpack.c.l.b16 %v1534
      %v1537 = vunpack.c.h.b16 %v1534
      %v1538 = vpack.c.b16 %v1536, %v1536
      %v1539 = vpack.c.b16 %v1537, %v1537
      %1542 = vst [vmem:[#allocation2 + $0x18] sm:$0xf] %v1538
      %1543 = vst [vmem:[#allocation2 + $0x1c] sm:$0xf] %v1539
      %v1544 = vld [vmem:[#allocation3 + $0xc0] sm:$0xff]
      %v1545 = vld [vmem:[#allocation3 + $0xc8] sm:$0xff]
      %v1546 = vld [vmem:[#allocation3 + $0xd0] sm:$0xff]
      %v1547 = vld [vmem:[#allocation3 + $0xd8] sm:$0xff]
      %v1548 = vld [vmem:[#allocation3 + $0xe0] sm:$0xff]
      %v1549 = vld [vmem:[#allocation3 + $0xe8] sm:$0xff]
      %1550 = vmatprep.subr.bf16.mxu0 %v956
      %1551 = vmatpush1.bf16.msra.mxu0 %v955
      %1552 = vmatprep.subr.bf16.mxu0 %v953
      %1553 = vmatpush1.bf16.msra.mxu0 %v952
      %1554 = vmatprep.subr.bf16.mxu0 %v950
      %1555 = vmatpush1.bf16.msra.mxu0 %v949
      %1556 = vmatprep.subr.bf16.mxu0 %v947
      %1557 = vmatpush1.bf16.msra.mxu0 %v946
      %1558 = vmatprep.subr.bf16.mxu0 %v944
      %1559 = vmatpush1.bf16.msra.mxu0 %v943
      %1560 = vmatprep.subr.bf16.mxu0 %v941
      %1561 = vmatpush1.bf16.msra.mxu0 %v940
      %1562 = vmatprep.subr.bf16.mxu0 %v938
      %1563 = vmatpush1.bf16.msra.mxu0 %v937
      %1564 = vmatprep.subr.bf16.mxu0 %v935
      %1565 = vmatpush1.bf16.msra.mxu0 %v934
      %1566 = vmatprep.subr.bf16.mxu0 0
      %1567 = vmatpush2.bf16.msra.mxu0 0
      %1568 = vmatprep.subr.bf16.mxu0 0
      %1569 = vmatpush2.bf16.msra.mxu0 0
      %1570 = vmatprep.subr.bf16.mxu0 0
      %1571 = vmatpush2.bf16.msra.mxu0 0
      %1572 = vmatprep.subr.bf16.mxu0 0
      %1573 = vmatpush2.bf16.msra.mxu0 0
      %1574 = vmatprep.subr.bf16.mxu0 0
      %1575 = vmatpush2.bf16.msra.mxu0 0
      %1576 = vmatprep.subr.bf16.mxu0 0
      %1577 = vmatpush2.bf16.msra.mxu0 0
      %1578 = vmatprep.subr.bf16.mxu0 0
      %1579 = vmatpush2.bf16.msra.mxu0 0
      %1580 = vmatprep.subr.bf16.mxu0 0
      %1581 = vmatpush2.bf16.msra.mxu0 0
      %1582 = vmatprep.mubr.bf16.mxu0 0
      %1583 = vmatmul.mubr.bf16.gmra.mxu0 %v1534
      %v1584 = vpop.f32.mrf.mxu0
      %v1585 = vadd.f32 0.0, %v1584
      %v1586 = vpop.f32.mrf.mxu0
      %v1587 = vadd.f32 0.0, %v1586
      %v1588 = vpop.f32.mrf.mxu0
      %v1589 = vadd.f32 0.0, %v1588
      %v1590 = vpop.f32.mrf.mxu0
      %v1591 = vadd.f32 0.0, %v1590
      %1592 = vdwg.mxu0
      %1593 = vmatprep.subr.bf16.mxu0 0
      %1594 = vmatpush1.bf16.msra.mxu0 %v957
      %1595 = vmatprep.subr.bf16.mxu0 0
      %1596 = vmatpush1.bf16.msra.mxu0 %v954
      %1597 = vmatprep.subr.bf16.mxu0 0
      %1598 = vmatpush1.bf16.msra.mxu0 %v951
      %1599 = vmatprep.subr.bf16.mxu0 0
      %1600 = vmatpush1.bf16.msra.mxu0 %v948
      %1601 = vmatprep.subr.bf16.mxu0 0
      %1602 = vmatpush1.bf16.msra.mxu0 %v945
      %1603 = vmatprep.subr.bf16.mxu0 0
      %1604 = vmatpush1.bf16.msra.mxu0 %v942
      %1605 = vmatprep.subr.bf16.mxu0 0
      %1606 = vmatpush1.bf16.msra.mxu0 %v939
      %1607 = vmatprep.subr.bf16.mxu0 0
      %1608 = vmatpush1.bf16.msra.mxu0 %v936
      %1609 = vmatprep.subr.bf16.mxu0 0
      %1610 = vmatpush2.bf16.msra.mxu0 0
      %1611 = vmatprep.subr.bf16.mxu0 0
      %1612 = vmatpush2.bf16.msra.mxu0 0
      %1613 = vmatprep.subr.bf16.mxu0 0
      %1614 = vmatpush2.bf16.msra.mxu0 0
      %1615 = vmatprep.subr.bf16.mxu0 0
      %1616 = vmatpush2.bf16.msra.mxu0 0
      %1617 = vmatprep.subr.bf16.mxu0 0
      %1618 = vmatpush2.bf16.msra.mxu0 0
      %1619 = vmatprep.subr.bf16.mxu0 0
      %1620 = vmatpush2.bf16.msra.mxu0 0
      %1621 = vmatprep.subr.bf16.mxu0 0
      %1622 = vmatpush2.bf16.msra.mxu0 0
      %1623 = vmatprep.subr.bf16.mxu0 0
      %1624 = vmatpush2.bf16.msra.mxu0 0
      %1625 = vmatprep.mubr.bf16.mxu0 0
      %1626 = vmatmul.mubr.bf16.gmra.mxu0 %v1534
      %v1627 = vpop.f32.mrf.mxu0
      %v1628 = vadd.f32 0.0, %v1627
      %v1629 = vpop.f32.mrf.mxu0
      %v1630 = vpop.f32.mrf.mxu0
      %v1631 = vadd.f32 0.0, %v1630
      %v1632 = vpop.f32.mrf.mxu0
      %1633 = vdwg.mxu0
      %v1634 = vadd.f32 %v1544, %v1585
      %v1635 = vadd.f32 %v1547, %v1589
      %v1636 = vxor.u32 %v1634, 2147483648
      %v1637 = vxor.u32 %v1635, 2147483648
      %v1638 = vmul.f32 %v1636, 1.442695
      %v1639 = vpow.pop %v1638
      %v1640 = vmul.f32 %v1637, 1.442695
      %v1641 = vpow.pop %v1640
      %v1642 = vadd.f32 %v1639, 1.0
      %v1643 = vadd.f32 %v1641, 1.0
      %v1644 = vrcp.pop %v1642
      %v1645 = vmul.f32 1.0, %v1644
      %v1646 = vrcp.pop %v1643
      %v1647 = vmul.f32 1.0, %v1646
      %v1648 = vadd.f32 %v1628, %v348
      %v1649 = vadd.f32 %v1631, %v348
      %v1650 = vmul.f32 %v1645, %v1648
      %v1651 = vmul.f32 %v1647, %v1649
      %v1652 = vadd.f32 %v1546, %v1650
      %v1653 = vadd.f32 %v1549, %v1651
      %v1654 = vtanh.pop %v1652
      %v1655 = vtanh.pop %v1653
      %v1656 = vadd.f32 %v1545, %v1587
      %v1657 = vadd.f32 %v1548, %v1591
      %v1658 = vxor.u32 %v1656, 2147483648
      %v1659 = vxor.u32 %v1657, 2147483648
      %v1660 = vmul.f32 %v1658, 1.442695
      %v1661 = vpow.pop %v1660
      %v1662 = vmul.f32 %v1659, 1.442695
      %v1663 = vpow.pop %v1662
      %v1664 = vadd.f32 %v1661, 1.0
      %v1665 = vadd.f32 %v1663, 1.0
      %v1666 = vrcp.pop %v1664
      %v1667 = vmul.f32 1.0, %v1666
      %v1668 = vrcp.pop %v1665
      %v1669 = vmul.f32 1.0, %v1668
      %v1670 = vsub.f32 %v1532, %v1654
      %v1671 = vsub.f32 %v1533, %v1655
      %v1672 = vmul.f32 %v1667, %v1670
      %v1673 = vmul.f32 %v1669, %v1671
      %v1674 = vadd.f32 %v1654, %v1672
      %v1675 = vadd.f32 %v1655, %v1673
      %v1676 = vpack.c.bf16 %v1675, %v1674
      %v1678 = vunpack.c.l.b16 %v1676
      %v1679 = vunpack.c.h.b16 %v1676
      %v1680 = vpack.c.b16 %v1678, %v1678
      %v1681 = vpack.c.b16 %v1679, %v1679
      %1684 = vst [vmem:[#allocation2 + $0x20] sm:$0xf] %v1680
      %1685 = vst [vmem:[#allocation2 + $0x24] sm:$0xf] %v1681
      %v1686 = vld [vmem:[#allocation3 + $0xf0] sm:$0xff]
      %v1687 = vld [vmem:[#allocation3 + $0xf8] sm:$0xff]
      %v1688 = vld [vmem:[#allocation3 + $0x100] sm:$0xff]
      %v1689 = vld [vmem:[#allocation3 + $0x108] sm:$0xff]
      %v1690 = vld [vmem:[#allocation3 + $0x110] sm:$0xff]
      %v1691 = vld [vmem:[#allocation3 + $0x118] sm:$0xff]
      %1692 = vmatprep.subr.bf16.mxu0 %v956
      %1693 = vmatpush1.bf16.msra.mxu0 %v955
      %1694 = vmatprep.subr.bf16.mxu0 %v953
      %1695 = vmatpush1.bf16.msra.mxu0 %v952
      %1696 = vmatprep.subr.bf16.mxu0 %v950
      %1697 = vmatpush1.bf16.msra.mxu0 %v949
      %1698 = vmatprep.subr.bf16.mxu0 %v947
      %1699 = vmatpush1.bf16.msra.mxu0 %v946
      %1700 = vmatprep.subr.bf16.mxu0 %v944
      %1701 = vmatpush1.bf16.msra.mxu0 %v943
      %1702 = vmatprep.subr.bf16.mxu0 %v941
      %1703 = vmatpush1.bf16.msra.mxu0 %v940
      %1704 = vmatprep.subr.bf16.mxu0 %v938
      %1705 = vmatpush1.bf16.msra.mxu0 %v937
      %1706 = vmatprep.subr.bf16.mxu0 %v935
      %1707 = vmatpush1.bf16.msra.mxu0 %v934
      %1708 = vmatprep.subr.bf16.mxu0 0
      %1709 = vmatpush2.bf16.msra.mxu0 0
      %1710 = vmatprep.subr.bf16.mxu0 0
      %1711 = vmatpush2.bf16.msra.mxu0 0
      %1712 = vmatprep.subr.bf16.mxu0 0
      %1713 = vmatpush2.bf16.msra.mxu0 0
      %1714 = vmatprep.subr.bf16.mxu0 0
      %1715 = vmatpush2.bf16.msra.mxu0 0
      %1716 = vmatprep.subr.bf16.mxu0 0
      %1717 = vmatpush2.bf16.msra.mxu0 0
      %1718 = vmatprep.subr.bf16.mxu0 0
      %1719 = vmatpush2.bf16.msra.mxu0 0
      %1720 = vmatprep.subr.bf16.mxu0 0
      %1721 = vmatpush2.bf16.msra.mxu0 0
      %1722 = vmatprep.subr.bf16.mxu0 0
      %1723 = vmatpush2.bf16.msra.mxu0 0
      %1724 = vmatprep.mubr.bf16.mxu0 0
      %1725 = vmatmul.mubr.bf16.gmra.mxu0 %v1676
      %v1726 = vpop.f32.mrf.mxu0
      %v1727 = vadd.f32 0.0, %v1726
      %v1728 = vpop.f32.mrf.mxu0
      %v1729 = vadd.f32 0.0, %v1728
      %v1730 = vpop.f32.mrf.mxu0
      %v1731 = vadd.f32 0.0, %v1730
      %v1732 = vpop.f32.mrf.mxu0
      %v1733 = vadd.f32 0.0, %v1732
      %1734 = vdwg.mxu0
      %1735 = vmatprep.subr.bf16.mxu0 0
      %1736 = vmatpush1.bf16.msra.mxu0 %v957
      %1737 = vmatprep.subr.bf16.mxu0 0
      %1738 = vmatpush1.bf16.msra.mxu0 %v954
      %1739 = vmatprep.subr.bf16.mxu0 0
      %1740 = vmatpush1.bf16.msra.mxu0 %v951
      %1741 = vmatprep.subr.bf16.mxu0 0
      %1742 = vmatpush1.bf16.msra.mxu0 %v948
      %1743 = vmatprep.subr.bf16.mxu0 0
      %1744 = vmatpush1.bf16.msra.mxu0 %v945
      %1745 = vmatprep.subr.bf16.mxu0 0
      %1746 = vmatpush1.bf16.msra.mxu0 %v942
      %1747 = vmatprep.subr.bf16.mxu0 0
      %1748 = vmatpush1.bf16.msra.mxu0 %v939
      %1749 = vmatprep.subr.bf16.mxu0 0
      %1750 = vmatpush1.bf16.msra.mxu0 %v936
      %1751 = vmatprep.subr.bf16.mxu0 0
      %1752 = vmatpush2.bf16.msra.mxu0 0
      %1753 = vmatprep.subr.bf16.mxu0 0
      %1754 = vmatpush2.bf16.msra.mxu0 0
      %1755 = vmatprep.subr.bf16.mxu0 0
      %1756 = vmatpush2.bf16.msra.mxu0 0
      %1757 = vmatprep.subr.bf16.mxu0 0
      %1758 = vmatpush2.bf16.msra.mxu0 0
      %1759 = vmatprep.subr.bf16.mxu0 0
      %1760 = vmatpush2.bf16.msra.mxu0 0
      %1761 = vmatprep.subr.bf16.mxu0 0
      %1762 = vmatpush2.bf16.msra.mxu0 0
      %1763 = vmatprep.subr.bf16.mxu0 0
      %1764 = vmatpush2.bf16.msra.mxu0 0
      %1765 = vmatprep.subr.bf16.mxu0 0
      %1766 = vmatpush2.bf16.msra.mxu0 0
      %1767 = vmatprep.mubr.bf16.mxu0 0
      %1768 = vmatmul.mubr.bf16.gmra.mxu0 %v1676
      %v1769 = vpop.f32.mrf.mxu0
      %v1770 = vadd.f32 0.0, %v1769
      %v1771 = vpop.f32.mrf.mxu0
      %v1772 = vpop.f32.mrf.mxu0
      %v1773 = vadd.f32 0.0, %v1772
      %v1774 = vpop.f32.mrf.mxu0
      %1775 = vdwg.mxu0
      %v1776 = vadd.f32 %v1686, %v1727
      %v1777 = vadd.f32 %v1689, %v1731
      %v1778 = vxor.u32 %v1776, 2147483648
      %v1779 = vxor.u32 %v1777, 2147483648
      %v1780 = vmul.f32 %v1778, 1.442695
      %v1781 = vpow.pop %v1780
      %v1782 = vmul.f32 %v1779, 1.442695
      %v1783 = vpow.pop %v1782
      %v1784 = vadd.f32 %v1781, 1.0
      %v1785 = vadd.f32 %v1783, 1.0
      %v1786 = vrcp.pop %v1784
      %v1787 = vmul.f32 1.0, %v1786
      %v1788 = vrcp.pop %v1785
      %v1789 = vmul.f32 1.0, %v1788
      %v1790 = vadd.f32 %v1770, %v348
      %v1791 = vadd.f32 %v1773, %v348
      %v1792 = vmul.f32 %v1787, %v1790
      %v1793 = vmul.f32 %v1789, %v1791
      %v1794 = vadd.f32 %v1688, %v1792
      %v1795 = vadd.f32 %v1691, %v1793
      %v1796 = vtanh.pop %v1794
      %v1797 = vtanh.pop %v1795
      %v1798 = vadd.f32 %v1687, %v1729
      %v1799 = vadd.f32 %v1690, %v1733
      %v1800 = vxor.u32 %v1798, 2147483648
      %v1801 = vxor.u32 %v1799, 2147483648
      %v1802 = vmul.f32 %v1800, 1.442695
      %v1803 = vpow.pop %v1802
      %v1804 = vmul.f32 %v1801, 1.442695
      %v1805 = vpow.pop %v1804
      %v1806 = vadd.f32 %v1803, 1.0
      %v1807 = vadd.f32 %v1805, 1.0
      %v1808 = vrcp.pop %v1806
      %v1809 = vmul.f32 1.0, %v1808
      %v1810 = vrcp.pop %v1807
      %v1811 = vmul.f32 1.0, %v1810
      %v1812 = vsub.f32 %v1674, %v1796
      %v1813 = vsub.f32 %v1675, %v1797
      %v1814 = vmul.f32 %v1809, %v1812
      %v1815 = vmul.f32 %v1811, %v1813
      %v1816 = vadd.f32 %v1796, %v1814
      %v1817 = vadd.f32 %v1797, %v1815
      %v1818 = vpack.c.bf16 %v1817, %v1816
      %v1820 = vunpack.c.l.b16 %v1818
      %v1821 = vunpack.c.h.b16 %v1818
      %v1822 = vpack.c.b16 %v1820, %v1820
      %v1823 = vpack.c.b16 %v1821, %v1821
      %1826 = vst [vmem:[#allocation2 + $0x28] sm:$0xf] %v1822
      %1827 = vst [vmem:[#allocation2 + $0x2c] sm:$0xf] %v1823
      %v1828 = vld [vmem:[#allocation3 + $0x120] sm:$0xff]
      %v1829 = vld [vmem:[#allocation3 + $0x128] sm:$0xff]
      %v1830 = vld [vmem:[#allocation3 + $0x130] sm:$0xff]
      %v1831 = vld [vmem:[#allocation3 + $0x138] sm:$0xff]
      %v1832 = vld [vmem:[#allocation3 + $0x140] sm:$0xff]
      %v1833 = vld [vmem:[#allocation3 + $0x148] sm:$0xff]
      %1834 = vmatprep.subr.bf16.mxu0 %v956
      %1835 = vmatpush1.bf16.msra.mxu0 %v955
      %1836 = vmatprep.subr.bf16.mxu0 %v953
      %1837 = vmatpush1.bf16.msra.mxu0 %v952
      %1838 = vmatprep.subr.bf16.mxu0 %v950
      %1839 = vmatpush1.bf16.msra.mxu0 %v949
      %1840 = vmatprep.subr.bf16.mxu0 %v947
      %1841 = vmatpush1.bf16.msra.mxu0 %v946
      %1842 = vmatprep.subr.bf16.mxu0 %v944
      %1843 = vmatpush1.bf16.msra.mxu0 %v943
      %1844 = vmatprep.subr.bf16.mxu0 %v941
      %1845 = vmatpush1.bf16.msra.mxu0 %v940
      %1846 = vmatprep.subr.bf16.mxu0 %v938
      %1847 = vmatpush1.bf16.msra.mxu0 %v937
      %1848 = vmatprep.subr.bf16.mxu0 %v935
      %1849 = vmatpush1.bf16.msra.mxu0 %v934
      %1850 = vmatprep.subr.bf16.mxu0 0
      %1851 = vmatpush2.bf16.msra.mxu0 0
      %1852 = vmatprep.subr.bf16.mxu0 0
      %1853 = vmatpush2.bf16.msra.mxu0 0
      %1854 = vmatprep.subr.bf16.mxu0 0
      %1855 = vmatpush2.bf16.msra.mxu0 0
      %1856 = vmatprep.subr.bf16.mxu0 0
      %1857 = vmatpush2.bf16.msra.mxu0 0
      %1858 = vmatprep.subr.bf16.mxu0 0
      %1859 = vmatpush2.bf16.msra.mxu0 0
      %1860 = vmatprep.subr.bf16.mxu0 0
      %1861 = vmatpush2.bf16.msra.mxu0 0
      %1862 = vmatprep.subr.bf16.mxu0 0
      %1863 = vmatpush2.bf16.msra.mxu0 0
      %1864 = vmatprep.subr.bf16.mxu0 0
      %1865 = vmatpush2.bf16.msra.mxu0 0
      %1866 = vmatprep.mubr.bf16.mxu0 0
      %1867 = vmatmul.mubr.bf16.gmra.mxu0 %v1818
      %v1868 = vpop.f32.mrf.mxu0
      %v1869 = vadd.f32 0.0, %v1868
      %v1870 = vpop.f32.mrf.mxu0
      %v1871 = vadd.f32 0.0, %v1870
      %v1872 = vpop.f32.mrf.mxu0
      %v1873 = vadd.f32 0.0, %v1872
      %v1874 = vpop.f32.mrf.mxu0
      %v1875 = vadd.f32 0.0, %v1874
      %1876 = vdwg.mxu0
      %1877 = vmatprep.subr.bf16.mxu0 0
      %1878 = vmatpush1.bf16.msra.mxu0 %v957
      %1879 = vmatprep.subr.bf16.mxu0 0
      %1880 = vmatpush1.bf16.msra.mxu0 %v954
      %1881 = vmatprep.subr.bf16.mxu0 0
      %1882 = vmatpush1.bf16.msra.mxu0 %v951
      %1883 = vmatprep.subr.bf16.mxu0 0
      %1884 = vmatpush1.bf16.msra.mxu0 %v948
      %1885 = vmatprep.subr.bf16.mxu0 0
      %1886 = vmatpush1.bf16.msra.mxu0 %v945
      %1887 = vmatprep.subr.bf16.mxu0 0
      %1888 = vmatpush1.bf16.msra.mxu0 %v942
      %1889 = vmatprep.subr.bf16.mxu0 0
      %1890 = vmatpush1.bf16.msra.mxu0 %v939
      %1891 = vmatprep.subr.bf16.mxu0 0
      %1892 = vmatpush1.bf16.msra.mxu0 %v936
      %1893 = vmatprep.subr.bf16.mxu0 0
      %1894 = vmatpush2.bf16.msra.mxu0 0
      %1895 = vmatprep.subr.bf16.mxu0 0
      %1896 = vmatpush2.bf16.msra.mxu0 0
      %1897 = vmatprep.subr.bf16.mxu0 0
      %1898 = vmatpush2.bf16.msra.mxu0 0
      %1899 = vmatprep.subr.bf16.mxu0 0
      %1900 = vmatpush2.bf16.msra.mxu0 0
      %1901 = vmatprep.subr.bf16.mxu0 0
      %1902 = vmatpush2.bf16.msra.mxu0 0
      %1903 = vmatprep.subr.bf16.mxu0 0
      %1904 = vmatpush2.bf16.msra.mxu0 0
      %1905 = vmatprep.subr.bf16.mxu0 0
      %1906 = vmatpush2.bf16.msra.mxu0 0
      %1907 = vmatprep.subr.bf16.mxu0 0
      %1908 = vmatpush2.bf16.msra.mxu0 0
      %1909 = vmatprep.mubr.bf16.mxu0 0
      %1910 = vmatmul.mubr.bf16.gmra.mxu0 %v1818
      %v1911 = vpop.f32.mrf.mxu0
      %v1912 = vadd.f32 0.0, %v1911
      %v1913 = vpop.f32.mrf.mxu0
      %v1914 = vpop.f32.mrf.mxu0
      %v1915 = vadd.f32 0.0, %v1914
      %v1916 = vpop.f32.mrf.mxu0
      %1917 = vdwg.mxu0
      %v1918 = vadd.f32 %v1828, %v1869
      %v1919 = vadd.f32 %v1831, %v1873
      %v1920 = vxor.u32 %v1918, 2147483648
      %v1921 = vxor.u32 %v1919, 2147483648
      %v1922 = vmul.f32 %v1920, 1.442695
      %v1923 = vpow.pop %v1922
      %v1924 = vmul.f32 %v1921, 1.442695
      %v1925 = vpow.pop %v1924
      %v1926 = vadd.f32 %v1923, 1.0
      %v1927 = vadd.f32 %v1925, 1.0
      %v1928 = vrcp.pop %v1926
      %v1929 = vmul.f32 1.0, %v1928
      %v1930 = vrcp.pop %v1927
      %v1931 = vmul.f32 1.0, %v1930
      %v1932 = vadd.f32 %v1912, %v348
      %v1933 = vadd.f32 %v1915, %v348
      %v1934 = vmul.f32 %v1929, %v1932
      %v1935 = vmul.f32 %v1931, %v1933
      %v1936 = vadd.f32 %v1830, %v1934
      %v1937 = vadd.f32 %v1833, %v1935
      %v1938 = vtanh.pop %v1936
      %v1939 = vtanh.pop %v1937
      %v1940 = vadd.f32 %v1829, %v1871
      %v1941 = vadd.f32 %v1832, %v1875
      %v1942 = vxor.u32 %v1940, 2147483648
      %v1943 = vxor.u32 %v1941, 2147483648
      %v1944 = vmul.f32 %v1942, 1.442695
      %v1945 = vpow.pop %v1944
      %v1946 = vmul.f32 %v1943, 1.442695
      %v1947 = vpow.pop %v1946
      %v1948 = vadd.f32 %v1945, 1.0
      %v1949 = vadd.f32 %v1947, 1.0
      %v1950 = vrcp.pop %v1948
      %v1951 = vmul.f32 1.0, %v1950
      %v1952 = vrcp.pop %v1949
      %v1953 = vmul.f32 1.0, %v1952
      %v1954 = vsub.f32 %v1816, %v1938
      %v1955 = vsub.f32 %v1817, %v1939
      %v1956 = vmul.f32 %v1951, %v1954
      %v1957 = vmul.f32 %v1953, %v1955
      %v1958 = vadd.f32 %v1938, %v1956
      %v1959 = vadd.f32 %v1939, %v1957
      %v1960 = vpack.c.bf16 %v1959, %v1958
      %v1962 = vunpack.c.l.b16 %v1960
      %v1963 = vunpack.c.h.b16 %v1960
      %v1964 = vpack.c.b16 %v1962, %v1962
      %v1965 = vpack.c.b16 %v1963, %v1963
      %1968 = vst [vmem:[#allocation2 + $0x30] sm:$0xf] %v1964
      %1969 = vst [vmem:[#allocation2 + $0x34] sm:$0xf] %v1965
      %v1970 = vld [vmem:[#allocation3 + $0x150] sm:$0xff]
      %v1971 = vld [vmem:[#allocation3 + $0x158] sm:$0xff]
      %v1972 = vld [vmem:[#allocation3 + $0x160] sm:$0xff]
      %v1973 = vld [vmem:[#allocation3 + $0x168] sm:$0xff]
      %v1974 = vld [vmem:[#allocation3 + $0x170] sm:$0xff]
      %v1975 = vld [vmem:[#allocation3 + $0x178] sm:$0xff]
      %1976 = vmatprep.subr.bf16.mxu0 %v956
      %1977 = vmatpush1.bf16.msra.mxu0 %v955
      %1978 = vmatprep.subr.bf16.mxu0 %v953
      %1979 = vmatpush1.bf16.msra.mxu0 %v952
      %1980 = vmatprep.subr.bf16.mxu0 %v950
      %1981 = vmatpush1.bf16.msra.mxu0 %v949
      %1982 = vmatprep.subr.bf16.mxu0 %v947
      %1983 = vmatpush1.bf16.msra.mxu0 %v946
      %1984 = vmatprep.subr.bf16.mxu0 %v944
      %1985 = vmatpush1.bf16.msra.mxu0 %v943
      %1986 = vmatprep.subr.bf16.mxu0 %v941
      %1987 = vmatpush1.bf16.msra.mxu0 %v940
      %1988 = vmatprep.subr.bf16.mxu0 %v938
      %1989 = vmatpush1.bf16.msra.mxu0 %v937
      %1990 = vmatprep.subr.bf16.mxu0 %v935
      %1991 = vmatpush1.bf16.msra.mxu0 %v934
      %1992 = vmatprep.subr.bf16.mxu0 0
      %1993 = vmatpush2.bf16.msra.mxu0 0
      %1994 = vmatprep.subr.bf16.mxu0 0
      %1995 = vmatpush2.bf16.msra.mxu0 0
      %1996 = vmatprep.subr.bf16.mxu0 0
      %1997 = vmatpush2.bf16.msra.mxu0 0
      %1998 = vmatprep.subr.bf16.mxu0 0
      %1999 = vmatpush2.bf16.msra.mxu0 0
      %2000 = vmatprep.subr.bf16.mxu0 0
      %2001 = vmatpush2.bf16.msra.mxu0 0
      %2002 = vmatprep.subr.bf16.mxu0 0
      %2003 = vmatpush2.bf16.msra.mxu0 0
      %2004 = vmatprep.subr.bf16.mxu0 0
      %2005 = vmatpush2.bf16.msra.mxu0 0
      %2006 = vmatprep.subr.bf16.mxu0 0
      %2007 = vmatpush2.bf16.msra.mxu0 0
      %2008 = vmatprep.mubr.bf16.mxu0 0
      %2009 = vmatmul.mubr.bf16.gmra.mxu0 %v1960
      %v2010 = vpop.f32.mrf.mxu0
      %v2011 = vadd.f32 0.0, %v2010
      %v2012 = vpop.f32.mrf.mxu0
      %v2013 = vadd.f32 0.0, %v2012
      %v2014 = vpop.f32.mrf.mxu0
      %v2015 = vadd.f32 0.0, %v2014
      %v2016 = vpop.f32.mrf.mxu0
      %v2017 = vadd.f32 0.0, %v2016
      %2018 = vdwg.mxu0
      %2019 = vmatprep.subr.bf16.mxu0 0
      %2020 = vmatpush1.bf16.msra.mxu0 %v957
      %2021 = vmatprep.subr.bf16.mxu0 0
      %2022 = vmatpush1.bf16.msra.mxu0 %v954
      %2023 = vmatprep.subr.bf16.mxu0 0
      %2024 = vmatpush1.bf16.msra.mxu0 %v951
      %2025 = vmatprep.subr.bf16.mxu0 0
      %2026 = vmatpush1.bf16.msra.mxu0 %v948
      %2027 = vmatprep.subr.bf16.mxu0 0
      %2028 = vmatpush1.bf16.msra.mxu0 %v945
      %2029 = vmatprep.subr.bf16.mxu0 0
      %2030 = vmatpush1.bf16.msra.mxu0 %v942
      %2031 = vmatprep.subr.bf16.mxu0 0
      %2032 = vmatpush1.bf16.msra.mxu0 %v939
      %2033 = vmatprep.subr.bf16.mxu0 0
      %2034 = vmatpush1.bf16.msra.mxu0 %v936
      %2035 = vmatprep.subr.bf16.mxu0 0
      %2036 = vmatpush2.bf16.msra.mxu0 0
      %2037 = vmatprep.subr.bf16.mxu0 0
      %2038 = vmatpush2.bf16.msra.mxu0 0
      %2039 = vmatprep.subr.bf16.mxu0 0
      %2040 = vmatpush2.bf16.msra.mxu0 0
      %2041 = vmatprep.subr.bf16.mxu0 0
      %2042 = vmatpush2.bf16.msra.mxu0 0
      %2043 = vmatprep.subr.bf16.mxu0 0
      %2044 = vmatpush2.bf16.msra.mxu0 0
      %2045 = vmatprep.subr.bf16.mxu0 0
      %2046 = vmatpush2.bf16.msra.mxu0 0
      %2047 = vmatprep.subr.bf16.mxu0 0
      %2048 = vmatpush2.bf16.msra.mxu0 0
      %2049 = vmatprep.subr.bf16.mxu0 0
      %2050 = vmatpush2.bf16.msra.mxu0 0
      %2051 = vmatprep.mubr.bf16.mxu0 0
      %2052 = vmatmul.mubr.bf16.gmra.mxu0 %v1960
      %v2053 = vpop.f32.mrf.mxu0
      %v2054 = vadd.f32 0.0, %v2053
      %v2055 = vpop.f32.mrf.mxu0
      %v2056 = vpop.f32.mrf.mxu0
      %v2057 = vadd.f32 0.0, %v2056
      %v2058 = vpop.f32.mrf.mxu0
      %2059 = vdwg.mxu0
      %v2060 = vadd.f32 %v1970, %v2011
      %v2061 = vadd.f32 %v1973, %v2015
      %v2062 = vxor.u32 %v2060, 2147483648
      %v2063 = vxor.u32 %v2061, 2147483648
      %v2064 = vmul.f32 %v2062, 1.442695
      %v2065 = vpow.pop %v2064
      %v2066 = vmul.f32 %v2063, 1.442695
      %v2067 = vpow.pop %v2066
      %v2068 = vadd.f32 %v2065, 1.0
      %v2069 = vadd.f32 %v2067, 1.0
      %v2070 = vrcp.pop %v2068
      %v2071 = vmul.f32 1.0, %v2070
      %v2072 = vrcp.pop %v2069
      %v2073 = vmul.f32 1.0, %v2072
      %v2074 = vadd.f32 %v2054, %v348
      %v2075 = vadd.f32 %v2057, %v348
      %v2076 = vmul.f32 %v2071, %v2074
      %v2077 = vmul.f32 %v2073, %v2075
      %v2078 = vadd.f32 %v1972, %v2076
      %v2079 = vadd.f32 %v1975, %v2077
      %v2080 = vtanh.pop %v2078
      %v2081 = vtanh.pop %v2079
      %v2082 = vadd.f32 %v1971, %v2013
      %v2083 = vadd.f32 %v1974, %v2017
      %v2084 = vxor.u32 %v2082, 2147483648
      %v2085 = vxor.u32 %v2083, 2147483648
      %v2086 = vmul.f32 %v2084, 1.442695
      %v2087 = vpow.pop %v2086
      %v2088 = vmul.f32 %v2085, 1.442695
      %v2089 = vpow.pop %v2088
      %v2090 = vadd.f32 %v2087, 1.0
      %v2091 = vadd.f32 %v2089, 1.0
      %v2092 = vrcp.pop %v2090
      %v2093 = vmul.f32 1.0, %v2092
      %v2094 = vrcp.pop %v2091
      %v2095 = vmul.f32 1.0, %v2094
      %v2096 = vsub.f32 %v1958, %v2080
      %v2097 = vsub.f32 %v1959, %v2081
      %v2098 = vmul.f32 %v2093, %v2096
      %v2099 = vmul.f32 %v2095, %v2097
      %v2100 = vadd.f32 %v2080, %v2098
      %v2101 = vadd.f32 %v2081, %v2099
      %v2102 = vpack.c.bf16 %v2101, %v2100
      %v2104 = vunpack.c.l.b16 %v2102
      %v2105 = vunpack.c.h.b16 %v2102
      %v2106 = vpack.c.b16 %v2104, %v2104
      %v2107 = vpack.c.b16 %v2105, %v2105
      %2110 = vst [vmem:[#allocation2 + $0x38] sm:$0xf] %v2106
      %2111 = vst [vmem:[#allocation2 + $0x3c] sm:$0xf] %v2107
      %s2112 = scalar_lea.vmem %s3, 192
      %v2113 = vld [vmem:[%s2112] sm:$0xff]
      %v2114 = vld [vmem:[%s2112 + $0x8] sm:$0xf]
      %v2115 = vld [vmem:[%s2112 + $0xc] sm:$0xff]
      %v2116 = vld [vmem:[%s2112 + $0x14] sm:$0xf]
      %v2117 = vld [vmem:[%s2112 + $0x18] sm:$0xff]
      %v2118 = vld [vmem:[%s2112 + $0x20] sm:$0xf]
      %v2119 = vld [vmem:[%s2112 + $0x24] sm:$0xff]
      %v2120 = vld [vmem:[%s2112 + $0x2c] sm:$0xf]
      %v2121 = vld [vmem:[%s2112 + $0x30] sm:$0xff]
      %v2122 = vld [vmem:[%s2112 + $0x38] sm:$0xf]
      %v2123 = vld [vmem:[%s2112 + $0x3c] sm:$0xff]
      %v2124 = vld [vmem:[%s2112 + $0x44] sm:$0xf]
      %v2125 = vld [vmem:[%s2112 + $0x48] sm:$0xff]
      %v2126 = vld [vmem:[%s2112 + $0x50] sm:$0xf]
      %v2127 = vld [vmem:[%s2112 + $0x54] sm:$0xff]
      %v2128 = vld [vmem:[%s2112 + $0x5c] sm:$0xf]
      %v2129 = vld [vmem:[%s2112 + $0x60] sm:$0xff]
      %v2130 = vld [vmem:[%s2112 + $0x68] sm:$0xf]
      %v2131 = vld [vmem:[%s2112 + $0x6c] sm:$0xff]
      %v2132 = vld [vmem:[%s2112 + $0x74] sm:$0xf]
      %v2133 = vld [vmem:[%s2112 + $0x78] sm:$0xff]
      %v2134 = vld [vmem:[%s2112 + $0x80] sm:$0xf]
      %v2135 = vld [vmem:[%s2112 + $0x84] sm:$0xff]
      %v2136 = vld [vmem:[%s2112 + $0x8c] sm:$0xf]
      %v2137 = vld [vmem:[%s2112 + $0x90] sm:$0xff]
      %v2138 = vld [vmem:[%s2112 + $0x98] sm:$0xf]
      %v2139 = vld [vmem:[%s2112 + $0x9c] sm:$0xff]
      %v2140 = vld [vmem:[%s2112 + $0xa4] sm:$0xf]
      %v2141 = vld [vmem:[%s2112 + $0xa8] sm:$0xff]
      %v2142 = vld [vmem:[%s2112 + $0xb0] sm:$0xf]
      %v2143 = vld [vmem:[%s2112 + $0xb4] sm:$0xff]
      %v2144 = vld [vmem:[%s2112 + $0xbc] sm:$0xf]
      %s2145 = scalar_lea.vmem %s4, 3
      %v2146 = vld [vmem:[%s2145] sm:$0x7]
      %s2147 = scalar_lea.vmem %s5, 1
      %v2148 = vld [vmem:[%s2147] sm:$0x1]
      %v2150 = vlaneseq
      %v2151 = vshrl.u32 %v2150, 7
      %v2152 = vsub.s32 0, %v2151
      %v2153 = vrot.slane %v2148, %v2152
      %v2155 = vld [vmem:[#allocation2] sm:$0xf]
      %v2156 = vld [vmem:[#allocation2 + $0x4] sm:$0xf]
      %v2157 = vld [vmem:[#allocation2 + $0x8] sm:$0xf]
      %v2158 = vld [vmem:[#allocation2 + $0xc] sm:$0xf]
      %v2159 = vld [vmem:[#allocation2 + $0x10] sm:$0xf]
      %v2160 = vld [vmem:[#allocation2 + $0x14] sm:$0xf]
      %v2161 = vld [vmem:[#allocation2 + $0x18] sm:$0xf]
      %v2162 = vld [vmem:[#allocation2 + $0x1c] sm:$0xf]
      %v2163 = vld [vmem:[#allocation2 + $0x20] sm:$0xf]
      %v2164 = vld [vmem:[#allocation2 + $0x24] sm:$0xf]
      %v2165 = vld [vmem:[#allocation2 + $0x28] sm:$0xf]
      %v2166 = vld [vmem:[#allocation2 + $0x2c] sm:$0xf]
      %v2167 = vld [vmem:[#allocation2 + $0x30] sm:$0xf]
      %v2168 = vld [vmem:[#allocation2 + $0x34] sm:$0xf]
      %v2169 = vld [vmem:[#allocation2 + $0x38] sm:$0xf]
      %v2170 = vld [vmem:[#allocation2 + $0x3c] sm:$0xf]
      %v2171 = vld [vmem:[%s2] sm:$0xff]
      %v2172 = vld [vmem:[%s2 + $0x8] sm:$0xf]
      %v2173 = vld [vmem:[%s2 + $0xc] sm:$0xff]
      %v2174 = vld [vmem:[%s2 + $0x14] sm:$0xf]
      %v2175 = vld [vmem:[%s2 + $0x18] sm:$0xff]
      %v2176 = vld [vmem:[%s2 + $0x20] sm:$0xf]
      %v2177 = vld [vmem:[%s2 + $0x24] sm:$0xff]
      %v2178 = vld [vmem:[%s2 + $0x2c] sm:$0xf]
      %v2179 = vld [vmem:[%s2 + $0x30] sm:$0xff]
      %v2180 = vld [vmem:[%s2 + $0x38] sm:$0xf]
      %v2181 = vld [vmem:[%s2 + $0x3c] sm:$0xff]
      %v2182 = vld [vmem:[%s2 + $0x44] sm:$0xf]
      %v2183 = vld [vmem:[%s2 + $0x48] sm:$0xff]
      %v2184 = vld [vmem:[%s2 + $0x50] sm:$0xf]
      %v2185 = vld [vmem:[%s2 + $0x54] sm:$0xff]
      %v2186 = vld [vmem:[%s2 + $0x5c] sm:$0xf]
      %v2187 = vld [vmem:[%s2 + $0x60] sm:$0xff]
      %v2188 = vld [vmem:[%s2 + $0x68] sm:$0xf]
      %v2189 = vld [vmem:[%s2 + $0x6c] sm:$0xff]
      %v2190 = vld [vmem:[%s2 + $0x74] sm:$0xf]
      %v2191 = vld [vmem:[%s2 + $0x78] sm:$0xff]
      %v2192 = vld [vmem:[%s2 + $0x80] sm:$0xf]
      %v2193 = vld [vmem:[%s2 + $0x84] sm:$0xff]
      %v2194 = vld [vmem:[%s2 + $0x8c] sm:$0xf]
      %v2195 = vld [vmem:[%s2 + $0x90] sm:$0xff]
      %v2196 = vld [vmem:[%s2 + $0x98] sm:$0xf]
      %v2197 = vld [vmem:[%s2 + $0x9c] sm:$0xff]
      %v2198 = vld [vmem:[%s2 + $0xa4] sm:$0xf]
      %v2199 = vld [vmem:[%s2 + $0xa8] sm:$0xff]
      %v2200 = vld [vmem:[%s2 + $0xb0] sm:$0xf]
      %v2201 = vld [vmem:[%s2 + $0xb4] sm:$0xff]
      %v2202 = vld [vmem:[%s2 + $0xbc] sm:$0xf]
      %v2204 = vlaneseq
      %v2205 = vshrl.u32 %v2204, 7
      %v2206 = vsub.s32 0, %v2205
      %v2207 = vrot.slane %v2146, %v2206
      %v2208 = vlaneseq
      %v2209 = vshrl.u32 %v2208, 7
      %v2210 = vsub.s32 1, %v2209
      %v2211 = vrot.slane %v2146, %v2210
      %v2212 = vlaneseq
      %v2213 = vshrl.u32 %v2212, 7
      %v2214 = vsub.s32 2, %v2213
      %v2215 = vrot.slane %v2146, %v2214
      %v2235 = vunpack.c.l.b16 %v2155
      %v2236 = vunpack.c.l.b16 %v2156
      %v2237 = vunpack.c.l.b16 %v2157
      %v2238 = vunpack.c.l.b16 %v2158
      %v2239 = vunpack.c.l.b16 %v2159
      %v2240 = vunpack.c.l.b16 %v2160
      %v2241 = vunpack.c.l.b16 %v2161
      %v2242 = vunpack.c.l.b16 %v2162
      %v2243 = vunpack.c.l.b16 %v2163
      %v2244 = vunpack.c.l.b16 %v2164
      %v2245 = vunpack.c.l.b16 %v2165
      %v2246 = vunpack.c.l.b16 %v2166
      %v2247 = vunpack.c.l.b16 %v2167
      %v2248 = vunpack.c.l.b16 %v2168
      %v2249 = vunpack.c.l.b16 %v2169
      %v2250 = vunpack.c.l.b16 %v2170
      %v2251 = vpack.c.b16 %v2236, %v2235
      %v2252 = vpack.c.b16 %v2238, %v2237
      %v2253 = vpack.c.b16 %v2240, %v2239
      %v2254 = vpack.c.b16 %v2242, %v2241
      %v2255 = vpack.c.b16 %v2244, %v2243
      %v2256 = vpack.c.b16 %v2246, %v2245
      %v2257 = vpack.c.b16 %v2248, %v2247
      %v2258 = vpack.c.b16 %v2250, %v2249
      %v2299 = vunpack.c.l.b16 %v2171
      %v2300 = vunpack.c.h.b16 %v2171
      %v2301 = vunpack.c.l.b16 %v2172
      %v2302 = vunpack.c.l.b16 %v2173
      %v2303 = vunpack.c.h.b16 %v2173
      %v2304 = vunpack.c.l.b16 %v2174
      %v2305 = vunpack.c.l.b16 %v2175
      %v2306 = vunpack.c.h.b16 %v2175
      %v2307 = vunpack.c.l.b16 %v2176
      %v2308 = vunpack.c.l.b16 %v2177
      %v2309 = vunpack.c.h.b16 %v2177
      %v2310 = vunpack.c.l.b16 %v2178
      %v2311 = vunpack.c.l.b16 %v2179
      %v2312 = vunpack.c.h.b16 %v2179
      %v2313 = vunpack.c.l.b16 %v2180
      %v2314 = vunpack.c.l.b16 %v2181
      %v2315 = vunpack.c.h.b16 %v2181
      %v2316 = vunpack.c.l.b16 %v2182
      %v2317 = vunpack.c.l.b16 %v2183
      %v2318 = vunpack.c.h.b16 %v2183
      %v2319 = vunpack.c.l.b16 %v2184
      %v2320 = vunpack.c.l.b16 %v2185
      %v2321 = vunpack.c.h.b16 %v2185
      %v2322 = vunpack.c.l.b16 %v2186
      %v2323 = vunpack.c.l.b16 %v2187
      %v2324 = vunpack.c.h.b16 %v2187
      %v2325 = vunpack.c.l.b16 %v2188
      %v2326 = vunpack.c.l.b16 %v2189
      %v2327 = vunpack.c.h.b16 %v2189
      %v2328 = vunpack.c.l.b16 %v2190
      %v2329 = vunpack.c.l.b16 %v2191
      %v2330 = vunpack.c.h.b16 %v2191
      %v2331 = vunpack.c.l.b16 %v2192
      %v2332 = vunpack.c.l.b16 %v2193
      %v2333 = vunpack.c.h.b16 %v2193
      %v2334 = vunpack.c.l.b16 %v2194
      %v2335 = vunpack.c.l.b16 %v2195
      %v2336 = vunpack.c.h.b16 %v2195
      %v2337 = vunpack.c.l.b16 %v2196
      %v2338 = vunpack.c.l.b16 %v2197
      %v2339 = vunpack.c.h.b16 %v2197
      %v2340 = vunpack.c.l.b16 %v2198
      %v2341 = vunpack.c.l.b16 %v2199
      %v2342 = vunpack.c.h.b16 %v2199
      %v2343 = vunpack.c.l.b16 %v2200
      %v2344 = vunpack.c.l.b16 %v2201
      %v2345 = vunpack.c.h.b16 %v2201
      %v2346 = vunpack.c.l.b16 %v2202
      %v2347 = vpack.c.b16 %v2302, %v2299
      %v2348 = vpack.c.b16 %v2303, %v2300
      %v2349 = vpack.c.b16 %v2304, %v2301
      %v2350 = vpack.c.b16 %v2308, %v2305
      %v2351 = vpack.c.b16 %v2309, %v2306
      %v2352 = vpack.c.b16 %v2310, %v2307
      %v2353 = vpack.c.b16 %v2314, %v2311
      %v2354 = vpack.c.b16 %v2315, %v2312
      %v2355 = vpack.c.b16 %v2316, %v2313
      %v2356 = vpack.c.b16 %v2320, %v2317
      %v2357 = vpack.c.b16 %v2321, %v2318
      %v2358 = vpack.c.b16 %v2322, %v2319
      %v2359 = vpack.c.b16 %v2326, %v2323
      %v2360 = vpack.c.b16 %v2327, %v2324
      %v2361 = vpack.c.b16 %v2328, %v2325
      %v2362 = vpack.c.b16 %v2332, %v2329
      %v2363 = vpack.c.b16 %v2333, %v2330
      %v2364 = vpack.c.b16 %v2334, %v2331
      %v2365 = vpack.c.b16 %v2338, %v2335
      %v2366 = vpack.c.b16 %v2339, %v2336
      %v2367 = vpack.c.b16 %v2340, %v2337
      %v2368 = vpack.c.b16 %v2344, %v2341
      %v2369 = vpack.c.b16 %v2345, %v2342
      %v2370 = vpack.c.b16 %v2346, %v2343
      %2395 = vmatprep.subr.bf16.mxu0 %v2369
      %2396 = vmatpush1.bf16.msra.mxu0 %v2368
      %2397 = vmatprep.subr.bf16.mxu0 %v2366
      %2398 = vmatpush1.bf16.msra.mxu0 %v2365
      %2399 = vmatprep.subr.bf16.mxu0 %v2363
      %2400 = vmatpush1.bf16.msra.mxu0 %v2362
      %2401 = vmatprep.subr.bf16.mxu0 %v2360
      %2402 = vmatpush1.bf16.msra.mxu0 %v2359
      %2403 = vmatprep.subr.bf16.mxu0 %v2357
      %2404 = vmatpush1.bf16.msra.mxu0 %v2356
      %2405 = vmatprep.subr.bf16.mxu0 %v2354
      %2406 = vmatpush1.bf16.msra.mxu0 %v2353
      %2407 = vmatprep.subr.bf16.mxu0 %v2351
      %2408 = vmatpush1.bf16.msra.mxu0 %v2350
      %2409 = vmatprep.subr.bf16.mxu0 %v2348
      %2410 = vmatpush1.bf16.msra.mxu0 %v2347
      %2411 = vmatprep.subr.bf16.mxu0 0
      %2412 = vmatpush2.bf16.msra.mxu0 0
      %2413 = vmatprep.subr.bf16.mxu0 0
      %2414 = vmatpush2.bf16.msra.mxu0 0
      %2415 = vmatprep.subr.bf16.mxu0 0
      %2416 = vmatpush2.bf16.msra.mxu0 0
      %2417 = vmatprep.subr.bf16.mxu0 0
      %2418 = vmatpush2.bf16.msra.mxu0 0
      %2419 = vmatprep.subr.bf16.mxu0 0
      %2420 = vmatpush2.bf16.msra.mxu0 0
      %2421 = vmatprep.subr.bf16.mxu0 0
      %2422 = vmatpush2.bf16.msra.mxu0 0
      %2423 = vmatprep.subr.bf16.mxu0 0
      %2424 = vmatpush2.bf16.msra.mxu0 0
      %2425 = vmatprep.subr.bf16.mxu0 0
      %2426 = vmatpush2.bf16.msra.mxu0 0
      %2427 = vmatprep.mubr.bf16.mxu0 0
      %2428 = vmatmul.mubr.bf16.gmra.mxu0 %v2251
      %v2429 = vpop.f32.mrf.mxu0
      %v2430 = vadd.f32 %v2207, %v2429
      %v2431 = vpop.f32.mrf.mxu0
      %v2432 = vadd.f32 %v2211, %v2431
      %v2433 = vpop.f32.mrf.mxu0
      %v2434 = vadd.f32 %v2207, %v2433
      %v2435 = vpop.f32.mrf.mxu0
      %v2436 = vadd.f32 %v2211, %v2435
      %2437 = vmatprep.mubr.bf16.mxu0 0
      %2438 = vmatmul.mubr.bf16.gmra.mxu0 %v2252
      %v2439 = vpop.f32.mrf.mxu0
      %v2440 = vadd.f32 %v2207, %v2439
      %v2441 = vpop.f32.mrf.mxu0
      %v2442 = vadd.f32 %v2211, %v2441
      %v2443 = vpop.f32.mrf.mxu0
      %v2444 = vadd.f32 %v2207, %v2443
      %v2445 = vpop.f32.mrf.mxu0
      %v2446 = vadd.f32 %v2211, %v2445
      %2447 = vmatprep.mubr.bf16.mxu0 0
      %2448 = vmatmul.mubr.bf16.gmra.mxu0 %v2253
      %v2449 = vpop.f32.mrf.mxu0
      %v2450 = vadd.f32 %v2207, %v2449
      %v2451 = vpop.f32.mrf.mxu0
      %v2452 = vadd.f32 %v2211, %v2451
      %v2453 = vpop.f32.mrf.mxu0
      %v2454 = vadd.f32 %v2207, %v2453
      %v2455 = vpop.f32.mrf.mxu0
      %v2456 = vadd.f32 %v2211, %v2455
      %2457 = vmatprep.mubr.bf16.mxu0 0
      %2458 = vmatmul.mubr.bf16.gmra.mxu0 %v2254
      %v2459 = vpop.f32.mrf.mxu0
      %v2460 = vadd.f32 %v2207, %v2459
      %v2461 = vpop.f32.mrf.mxu0
      %v2462 = vadd.f32 %v2211, %v2461
      %v2463 = vpop.f32.mrf.mxu0
      %v2464 = vadd.f32 %v2207, %v2463
      %v2465 = vpop.f32.mrf.mxu0
      %v2466 = vadd.f32 %v2211, %v2465
      %2467 = vmatprep.mubr.bf16.mxu0 0
      %2468 = vmatmul.mubr.bf16.gmra.mxu0 %v2255
      %v2469 = vpop.f32.mrf.mxu0
      %v2470 = vadd.f32 %v2207, %v2469
      %v2471 = vpop.f32.mrf.mxu0
      %v2472 = vadd.f32 %v2211, %v2471
      %v2473 = vpop.f32.mrf.mxu0
      %v2474 = vadd.f32 %v2207, %v2473
      %v2475 = vpop.f32.mrf.mxu0
      %v2476 = vadd.f32 %v2211, %v2475
      %2477 = vmatprep.mubr.bf16.mxu0 0
      %2478 = vmatmul.mubr.bf16.gmra.mxu0 %v2256
      %v2479 = vpop.f32.mrf.mxu0
      %v2480 = vadd.f32 %v2207, %v2479
      %v2481 = vpop.f32.mrf.mxu0
      %v2482 = vadd.f32 %v2211, %v2481
      %v2483 = vpop.f32.mrf.mxu0
      %v2484 = vadd.f32 %v2207, %v2483
      %v2485 = vpop.f32.mrf.mxu0
      %v2486 = vadd.f32 %v2211, %v2485
      %2487 = vmatprep.mubr.bf16.mxu0 0
      %2488 = vmatmul.mubr.bf16.gmra.mxu0 %v2257
      %v2489 = vpop.f32.mrf.mxu0
      %v2490 = vadd.f32 %v2207, %v2489
      %v2491 = vpop.f32.mrf.mxu0
      %v2492 = vadd.f32 %v2211, %v2491
      %v2493 = vpop.f32.mrf.mxu0
      %v2494 = vadd.f32 %v2207, %v2493
      %v2495 = vpop.f32.mrf.mxu0
      %v2496 = vadd.f32 %v2211, %v2495
      %2497 = vmatprep.mubr.bf16.mxu0 0
      %2498 = vmatmul.mubr.bf16.gmra.mxu0 %v2258
      %v2499 = vpop.f32.mrf.mxu0
      %v2500 = vadd.f32 %v2207, %v2499
      %v2501 = vpop.f32.mrf.mxu0
      %v2502 = vadd.f32 %v2211, %v2501
      %v2503 = vpop.f32.mrf.mxu0
      %v2504 = vadd.f32 %v2207, %v2503
      %v2505 = vpop.f32.mrf.mxu0
      %v2506 = vadd.f32 %v2211, %v2505
      %2507 = vdwg.mxu0
      %2508 = vmatprep.subr.bf16.mxu0 0
      %2509 = vmatpush1.bf16.msra.mxu0 %v2370
      %2510 = vmatprep.subr.bf16.mxu0 0
      %2511 = vmatpush1.bf16.msra.mxu0 %v2367
      %2512 = vmatprep.subr.bf16.mxu0 0
      %2513 = vmatpush1.bf16.msra.mxu0 %v2364
      %2514 = vmatprep.subr.bf16.mxu0 0
      %2515 = vmatpush1.bf16.msra.mxu0 %v2361
      %2516 = vmatprep.subr.bf16.mxu0 0
      %2517 = vmatpush1.bf16.msra.mxu0 %v2358
      %2518 = vmatprep.subr.bf16.mxu0 0
      %2519 = vmatpush1.bf16.msra.mxu0 %v2355
      %2520 = vmatprep.subr.bf16.mxu0 0
      %2521 = vmatpush1.bf16.msra.mxu0 %v2352
      %2522 = vmatprep.subr.bf16.mxu0 0
      %2523 = vmatpush1.bf16.msra.mxu0 %v2349
      %2524 = vmatprep.subr.bf16.mxu0 0
      %2525 = vmatpush2.bf16.msra.mxu0 0
      %2526 = vmatprep.subr.bf16.mxu0 0
      %2527 = vmatpush2.bf16.msra.mxu0 0
      %2528 = vmatprep.subr.bf16.mxu0 0
      %2529 = vmatpush2.bf16.msra.mxu0 0
      %2530 = vmatprep.subr.bf16.mxu0 0
      %2531 = vmatpush2.bf16.msra.mxu0 0
      %2532 = vmatprep.subr.bf16.mxu0 0
      %2533 = vmatpush2.bf16.msra.mxu0 0
      %2534 = vmatprep.subr.bf16.mxu0 0
      %2535 = vmatpush2.bf16.msra.mxu0 0
      %2536 = vmatprep.subr.bf16.mxu0 0
      %2537 = vmatpush2.bf16.msra.mxu0 0
      %2538 = vmatprep.subr.bf16.mxu0 0
      %2539 = vmatpush2.bf16.msra.mxu0 0
      %2540 = vmatprep.mubr.bf16.mxu0 0
      %2541 = vmatmul.mubr.bf16.gmra.mxu0 %v2251
      %v2542 = vpop.f32.mrf.mxu0
      %v2543 = vadd.f32 %v2215, %v2542
      %v2544 = vpop.f32.mrf.mxu0
      %v2545 = vpop.f32.mrf.mxu0
      %v2546 = vadd.f32 %v2215, %v2545
      %v2547 = vpop.f32.mrf.mxu0
      %2548 = vmatprep.mubr.bf16.mxu0 0
      %2549 = vmatmul.mubr.bf16.gmra.mxu0 %v2252
      %v2550 = vpop.f32.mrf.mxu0
      %v2551 = vadd.f32 %v2215, %v2550
      %v2552 = vpop.f32.mrf.mxu0
      %v2553 = vpop.f32.mrf.mxu0
      %v2554 = vadd.f32 %v2215, %v2553
      %v2555 = vpop.f32.mrf.mxu0
      %2556 = vmatprep.mubr.bf16.mxu0 0
      %2557 = vmatmul.mubr.bf16.gmra.mxu0 %v2253
      %v2558 = vpop.f32.mrf.mxu0
      %v2559 = vadd.f32 %v2215, %v2558
      %v2560 = vpop.f32.mrf.mxu0
      %v2561 = vpop.f32.mrf.mxu0
      %v2562 = vadd.f32 %v2215, %v2561
      %v2563 = vpop.f32.mrf.mxu0
      %2564 = vmatprep.mubr.bf16.mxu0 0
      %2565 = vmatmul.mubr.bf16.gmra.mxu0 %v2254
      %v2566 = vpop.f32.mrf.mxu0
      %v2567 = vadd.f32 %v2215, %v2566
      %v2568 = vpop.f32.mrf.mxu0
      %v2569 = vpop.f32.mrf.mxu0
      %v2570 = vadd.f32 %v2215, %v2569
      %v2571 = vpop.f32.mrf.mxu0
      %2572 = vmatprep.mubr.bf16.mxu0 0
      %2573 = vmatmul.mubr.bf16.gmra.mxu0 %v2255
      %v2574 = vpop.f32.mrf.mxu0
      %v2575 = vadd.f32 %v2215, %v2574
      %v2576 = vpop.f32.mrf.mxu0
      %v2577 = vpop.f32.mrf.mxu0
      %v2578 = vadd.f32 %v2215, %v2577
      %v2579 = vpop.f32.mrf.mxu0
      %2580 = vmatprep.mubr.bf16.mxu0 0
      %2581 = vmatmul.mubr.bf16.gmra.mxu0 %v2256
      %v2582 = vpop.f32.mrf.mxu0
      %v2583 = vadd.f32 %v2215, %v2582
      %v2584 = vpop.f32.mrf.mxu0
      %v2585 = vpop.f32.mrf.mxu0
      %v2586 = vadd.f32 %v2215, %v2585
      %v2587 = vpop.f32.mrf.mxu0
      %2588 = vmatprep.mubr.bf16.mxu0 0
      %2589 = vmatmul.mubr.bf16.gmra.mxu0 %v2257
      %v2590 = vpop.f32.mrf.mxu0
      %v2591 = vadd.f32 %v2215, %v2590
      %v2592 = vpop.f32.mrf.mxu0
      %v2593 = vpop.f32.mrf.mxu0
      %v2594 = vadd.f32 %v2215, %v2593
      %v2595 = vpop.f32.mrf.mxu0
      %2596 = vmatprep.mubr.bf16.mxu0 0
      %2597 = vmatmul.mubr.bf16.gmra.mxu0 %v2258
      %v2598 = vpop.f32.mrf.mxu0
      %v2599 = vadd.f32 %v2215, %v2598
      %v2600 = vpop.f32.mrf.mxu0
      %v2601 = vpop.f32.mrf.mxu0
      %v2602 = vadd.f32 %v2215, %v2601
      %v2603 = vpop.f32.mrf.mxu0
      %2604 = vdwg.mxu0
      %2605 = vst [vmem:[#allocation3] sm:$0xff] %v2430
      %2606 = vst [vmem:[#allocation3 + $0x8] sm:$0xff] %v2432
      %2607 = vst [vmem:[#allocation3 + $0x10] sm:$0xff] %v2543
      %2608 = vst [vmem:[#allocation3 + $0x18] sm:$0xff] %v2434
      %2609 = vst [vmem:[#allocation3 + $0x20] sm:$0xff] %v2436
      %2610 = vst [vmem:[#allocation3 + $0x28] sm:$0xff] %v2546
      %2611 = vst [vmem:[#allocation3 + $0x30] sm:$0xff] %v2440
      %2612 = vst [vmem:[#allocation3 + $0x38] sm:$0xff] %v2442
      %2613 = vst [vmem:[#allocation3 + $0x40] sm:$0xff] %v2551
      %2614 = vst [vmem:[#allocation3 + $0x48] sm:$0xff] %v2444
      %2615 = vst [vmem:[#allocation3 + $0x50] sm:$0xff] %v2446
      %2616 = vst [vmem:[#allocation3 + $0x58] sm:$0xff] %v2554
      %2617 = vst [vmem:[#allocation3 + $0x60] sm:$0xff] %v2450
      %2618 = vst [vmem:[#allocation3 + $0x68] sm:$0xff] %v2452
      %2619 = vst [vmem:[#allocation3 + $0x70] sm:$0xff] %v2559
      %2620 = vst [vmem:[#allocation3 + $0x78] sm:$0xff] %v2454
      %2621 = vst [vmem:[#allocation3 + $0x80] sm:$0xff] %v2456
      %2622 = vst [vmem:[#allocation3 + $0x88] sm:$0xff] %v2562
      %2623 = vst [vmem:[#allocation3 + $0x90] sm:$0xff] %v2460
      %2624 = vst [vmem:[#allocation3 + $0x98] sm:$0xff] %v2462
      %2625 = vst [vmem:[#allocation3 + $0xa0] sm:$0xff] %v2567
      %2626 = vst [vmem:[#allocation3 + $0xa8] sm:$0xff] %v2464
      %2627 = vst [vmem:[#allocation3 + $0xb0] sm:$0xff] %v2466
      %2628 = vst [vmem:[#allocation3 + $0xb8] sm:$0xff] %v2570
      %2629 = vst [vmem:[#allocation3 + $0xc0] sm:$0xff] %v2470
      %2630 = vst [vmem:[#allocation3 + $0xc8] sm:$0xff] %v2472
      %2631 = vst [vmem:[#allocation3 + $0xd0] sm:$0xff] %v2575
      %2632 = vst [vmem:[#allocation3 + $0xd8] sm:$0xff] %v2474
      %2633 = vst [vmem:[#allocation3 + $0xe0] sm:$0xff] %v2476
      %2634 = vst [vmem:[#allocation3 + $0xe8] sm:$0xff] %v2578
      %2635 = vst [vmem:[#allocation3 + $0xf0] sm:$0xff] %v2480
      %2636 = vst [vmem:[#allocation3 + $0xf8] sm:$0xff] %v2482
      %2637 = vst [vmem:[#allocation3 + $0x100] sm:$0xff] %v2583
      %2638 = vst [vmem:[#allocation3 + $0x108] sm:$0xff] %v2484
      %2639 = vst [vmem:[#allocation3 + $0x110] sm:$0xff] %v2486
      %2640 = vst [vmem:[#allocation3 + $0x118] sm:$0xff] %v2586
      %2641 = vst [vmem:[#allocation3 + $0x120] sm:$0xff] %v2490
      %2642 = vst [vmem:[#allocation3 + $0x128] sm:$0xff] %v2492
      %2643 = vst [vmem:[#allocation3 + $0x130] sm:$0xff] %v2591
      %2644 = vst [vmem:[#allocation3 + $0x138] sm:$0xff] %v2494
      %2645 = vst [vmem:[#allocation3 + $0x140] sm:$0xff] %v2496
      %2646 = vst [vmem:[#allocation3 + $0x148] sm:$0xff] %v2594
      %2647 = vst [vmem:[#allocation3 + $0x150] sm:$0xff] %v2500
      %2648 = vst [vmem:[#allocation3 + $0x158] sm:$0xff] %v2502
      %2649 = vst [vmem:[#allocation3 + $0x160] sm:$0xff] %v2599
      %2650 = vst [vmem:[#allocation3 + $0x168] sm:$0xff] %v2504
      %2651 = vst [vmem:[#allocation3 + $0x170] sm:$0xff] %v2506
      %2652 = vst [vmem:[#allocation3 + $0x178] sm:$0xff] %v2602
      %v2653 = vld [vmem:[#allocation3] sm:$0xff]
      %v2654 = vld [vmem:[#allocation3 + $0x8] sm:$0xff]
      %v2655 = vld [vmem:[#allocation3 + $0x10] sm:$0xff]
      %v2656 = vld [vmem:[#allocation3 + $0x18] sm:$0xff]
      %v2657 = vld [vmem:[#allocation3 + $0x20] sm:$0xff]
      %v2658 = vld [vmem:[#allocation3 + $0x28] sm:$0xff]
      %v2691 = vunpack.c.l.b16 %v2113
      %v2692 = vunpack.c.h.b16 %v2113
      %v2693 = vunpack.c.l.b16 %v2114
      %v2694 = vunpack.c.l.b16 %v2115
      %v2695 = vunpack.c.h.b16 %v2115
      %v2696 = vunpack.c.l.b16 %v2116
      %v2697 = vunpack.c.l.b16 %v2117
      %v2698 = vunpack.c.h.b16 %v2117
      %v2699 = vunpack.c.l.b16 %v2118
      %v2700 = vunpack.c.l.b16 %v2119
      %v2701 = vunpack.c.h.b16 %v2119
      %v2702 = vunpack.c.l.b16 %v2120
      %v2703 = vunpack.c.l.b16 %v2121
      %v2704 = vunpack.c.h.b16 %v2121
      %v2705 = vunpack.c.l.b16 %v2122
      %v2706 = vunpack.c.l.b16 %v2123
      %v2707 = vunpack.c.h.b16 %v2123
      %v2708 = vunpack.c.l.b16 %v2124
      %v2709 = vunpack.c.l.b16 %v2125
      %v2710 = vunpack.c.h.b16 %v2125
      %v2711 = vunpack.c.l.b16 %v2126
      %v2712 = vunpack.c.l.b16 %v2127
      %v2713 = vunpack.c.h.b16 %v2127
      %v2714 = vunpack.c.l.b16 %v2128
      %v2715 = vunpack.c.l.b16 %v2129
      %v2716 = vunpack.c.h.b16 %v2129
      %v2717 = vunpack.c.l.b16 %v2130
      %v2718 = vunpack.c.l.b16 %v2131
      %v2719 = vunpack.c.h.b16 %v2131
      %v2720 = vunpack.c.l.b16 %v2132
      %v2721 = vunpack.c.l.b16 %v2133
      %v2722 = vunpack.c.h.b16 %v2133
      %v2723 = vunpack.c.l.b16 %v2134
      %v2724 = vunpack.c.l.b16 %v2135
      %v2725 = vunpack.c.h.b16 %v2135
      %v2726 = vunpack.c.l.b16 %v2136
      %v2727 = vunpack.c.l.b16 %v2137
      %v2728 = vunpack.c.h.b16 %v2137
      %v2729 = vunpack.c.l.b16 %v2138
      %v2730 = vunpack.c.l.b16 %v2139
      %v2731 = vunpack.c.h.b16 %v2139
      %v2732 = vunpack.c.l.b16 %v2140
      %v2733 = vunpack.c.l.b16 %v2141
      %v2734 = vunpack.c.h.b16 %v2141
      %v2735 = vunpack.c.l.b16 %v2142
      %v2736 = vunpack.c.l.b16 %v2143
      %v2737 = vunpack.c.h.b16 %v2143
      %v2738 = vunpack.c.l.b16 %v2144
      %v2739 = vpack.c.b16 %v2694, %v2691
      %v2740 = vpack.c.b16 %v2695, %v2692
      %v2741 = vpack.c.b16 %v2696, %v2693
      %v2742 = vpack.c.b16 %v2700, %v2697
      %v2743 = vpack.c.b16 %v2701, %v2698
      %v2744 = vpack.c.b16 %v2702, %v2699
      %v2745 = vpack.c.b16 %v2706, %v2703
      %v2746 = vpack.c.b16 %v2707, %v2704
      %v2747 = vpack.c.b16 %v2708, %v2705
      %v2748 = vpack.c.b16 %v2712, %v2709
      %v2749 = vpack.c.b16 %v2713, %v2710
      %v2750 = vpack.c.b16 %v2714, %v2711
      %v2751 = vpack.c.b16 %v2718, %v2715
      %v2752 = vpack.c.b16 %v2719, %v2716
      %v2753 = vpack.c.b16 %v2720, %v2717
      %v2754 = vpack.c.b16 %v2724, %v2721
      %v2755 = vpack.c.b16 %v2725, %v2722
      %v2756 = vpack.c.b16 %v2726, %v2723
      %v2757 = vpack.c.b16 %v2730, %v2727
      %v2758 = vpack.c.b16 %v2731, %v2728
      %v2759 = vpack.c.b16 %v2732, %v2729
      %v2760 = vpack.c.b16 %v2736, %v2733
      %v2761 = vpack.c.b16 %v2737, %v2734
      %v2762 = vpack.c.b16 %v2738, %v2735
      %2787 = vmatprep.subr.bf16.mxu0 %v2761
      %2788 = vmatpush1.bf16.msra.mxu0 %v2760
      %2789 = vmatprep.subr.bf16.mxu0 %v2758
      %2790 = vmatpush1.bf16.msra.mxu0 %v2757
      %2791 = vmatprep.subr.bf16.mxu0 %v2755
      %2792 = vmatpush1.bf16.msra.mxu0 %v2754
      %2793 = vmatprep.subr.bf16.mxu0 %v2752
      %2794 = vmatpush1.bf16.msra.mxu0 %v2751
      %2795 = vmatprep.subr.bf16.mxu0 %v2749
      %2796 = vmatpush1.bf16.msra.mxu0 %v2748
      %2797 = vmatprep.subr.bf16.mxu0 %v2746
      %2798 = vmatpush1.bf16.msra.mxu0 %v2745
      %2799 = vmatprep.subr.bf16.mxu0 %v2743
      %2800 = vmatpush1.bf16.msra.mxu0 %v2742
      %2801 = vmatprep.subr.bf16.mxu0 %v2740
      %2802 = vmatpush1.bf16.msra.mxu0 %v2739
      %2803 = vmatprep.subr.bf16.mxu0 0
      %2804 = vmatpush2.bf16.msra.mxu0 0
      %2805 = vmatprep.subr.bf16.mxu0 0
      %2806 = vmatpush2.bf16.msra.mxu0 0
      %2807 = vmatprep.subr.bf16.mxu0 0
      %2808 = vmatpush2.bf16.msra.mxu0 0
      %2809 = vmatprep.subr.bf16.mxu0 0
      %2810 = vmatpush2.bf16.msra.mxu0 0
      %2811 = vmatprep.subr.bf16.mxu0 0
      %2812 = vmatpush2.bf16.msra.mxu0 0
      %2813 = vmatprep.subr.bf16.mxu0 0
      %2814 = vmatpush2.bf16.msra.mxu0 0
      %2815 = vmatprep.subr.bf16.mxu0 0
      %2816 = vmatpush2.bf16.msra.mxu0 0
      %2817 = vmatprep.subr.bf16.mxu0 0
      %2818 = vmatpush2.bf16.msra.mxu0 0
      %2819 = vmatprep.mubr.bf16.mxu0 0
      %2820 = vmatmul.mubr.bf16.gmra.mxu0 0
      %v2821 = vpop.f32.mrf.mxu0
      %v2822 = vadd.f32 0.0, %v2821
      %v2823 = vpop.f32.mrf.mxu0
      %v2824 = vadd.f32 0.0, %v2823
      %v2825 = vpop.f32.mrf.mxu0
      %v2826 = vadd.f32 0.0, %v2825
      %v2827 = vpop.f32.mrf.mxu0
      %v2828 = vadd.f32 0.0, %v2827
      %2829 = vdwg.mxu0
      %2830 = vmatprep.subr.bf16.mxu0 0
      %2831 = vmatpush1.bf16.msra.mxu0 %v2762
      %2832 = vmatprep.subr.bf16.mxu0 0
      %2833 = vmatpush1.bf16.msra.mxu0 %v2759
      %2834 = vmatprep.subr.bf16.mxu0 0
      %2835 = vmatpush1.bf16.msra.mxu0 %v2756
      %2836 = vmatprep.subr.bf16.mxu0 0
      %2837 = vmatpush1.bf16.msra.mxu0 %v2753
      %2838 = vmatprep.subr.bf16.mxu0 0
      %2839 = vmatpush1.bf16.msra.mxu0 %v2750
      %2840 = vmatprep.subr.bf16.mxu0 0
      %2841 = vmatpush1.bf16.msra.mxu0 %v2747
      %2842 = vmatprep.subr.bf16.mxu0 0
      %2843 = vmatpush1.bf16.msra.mxu0 %v2744
      %2844 = vmatprep.subr.bf16.mxu0 0
      %2845 = vmatpush1.bf16.msra.mxu0 %v2741
      %2846 = vmatprep.subr.bf16.mxu0 0
      %2847 = vmatpush2.bf16.msra.mxu0 0
      %2848 = vmatprep.subr.bf16.mxu0 0
      %2849 = vmatpush2.bf16.msra.mxu0 0
      %2850 = vmatprep.subr.bf16.mxu0 0
      %2851 = vmatpush2.bf16.msra.mxu0 0
      %2852 = vmatprep.subr.bf16.mxu0 0
      %2853 = vmatpush2.bf16.msra.mxu0 0
      %2854 = vmatprep.subr.bf16.mxu0 0
      %2855 = vmatpush2.bf16.msra.mxu0 0
      %2856 = vmatprep.subr.bf16.mxu0 0
      %2857 = vmatpush2.bf16.msra.mxu0 0
      %2858 = vmatprep.subr.bf16.mxu0 0
      %2859 = vmatpush2.bf16.msra.mxu0 0
      %2860 = vmatprep.subr.bf16.mxu0 0
      %2861 = vmatpush2.bf16.msra.mxu0 0
      %2862 = vmatprep.mubr.bf16.mxu0 0
      %2863 = vmatmul.mubr.bf16.gmra.mxu0 0
      %v2864 = vpop.f32.mrf.mxu0
      %v2865 = vadd.f32 0.0, %v2864
      %v2866 = vpop.f32.mrf.mxu0
      %v2867 = vpop.f32.mrf.mxu0
      %v2868 = vadd.f32 0.0, %v2867
      %v2869 = vpop.f32.mrf.mxu0
      %2870 = vdwg.mxu0
      %v2871 = vadd.f32 %v2653, %v2822
      %v2872 = vadd.f32 %v2656, %v2826
      %v2873 = vxor.u32 %v2871, 2147483648
      %v2874 = vxor.u32 %v2872, 2147483648
      %v2875 = vmul.f32 %v2873, 1.442695
      %v2876 = vpow.pop %v2875
      %v2877 = vmul.f32 %v2874, 1.442695
      %v2878 = vpow.pop %v2877
      %v2879 = vadd.f32 %v2876, 1.0
      %v2880 = vadd.f32 %v2878, 1.0
      %v2881 = vrcp.pop %v2879
      %v2882 = vmul.f32 1.0, %v2881
      %v2883 = vrcp.pop %v2880
      %v2884 = vmul.f32 1.0, %v2883
      %v2885 = vadd.f32 %v2865, %v2153
      %v2886 = vadd.f32 %v2868, %v2153
      %v2887 = vmul.f32 %v2882, %v2885
      %v2888 = vmul.f32 %v2884, %v2886
      %v2889 = vadd.f32 %v2655, %v2887
      %v2890 = vadd.f32 %v2658, %v2888
      %v2891 = vtanh.pop %v2889
      %v2892 = vtanh.pop %v2890
      %v2893 = vadd.f32 %v2654, %v2824
      %v2894 = vadd.f32 %v2657, %v2828
      %v2895 = vxor.u32 %v2893, 2147483648
      %v2896 = vxor.u32 %v2894, 2147483648
      %v2897 = vmul.f32 %v2895, 1.442695
      %v2898 = vpow.pop %v2897
      %v2899 = vmul.f32 %v2896, 1.442695
      %v2900 = vpow.pop %v2899
      %v2901 = vadd.f32 %v2898, 1.0
      %v2902 = vadd.f32 %v2900, 1.0
      %v2903 = vrcp.pop %v2901
      %v2904 = vmul.f32 1.0, %v2903
      %v2905 = vrcp.pop %v2902
      %v2906 = vmul.f32 1.0, %v2905
      %v2907 = vsub.f32 0.0, %v2891
      %v2908 = vsub.f32 0.0, %v2892
      %v2909 = vmul.f32 %v2904, %v2907
      %v2910 = vmul.f32 %v2906, %v2908
      %v2911 = vadd.f32 %v2891, %v2909
      %v2912 = vadd.f32 %v2892, %v2910
      %v2913 = vld [vmem:[#allocation3 + $0x30] sm:$0xff]
      %v2914 = vld [vmem:[#allocation3 + $0x38] sm:$0xff]
      %v2915 = vld [vmem:[#allocation3 + $0x40] sm:$0xff]
      %v2916 = vld [vmem:[#allocation3 + $0x48] sm:$0xff]
      %v2917 = vld [vmem:[#allocation3 + $0x50] sm:$0xff]
      %v2918 = vld [vmem:[#allocation3 + $0x58] sm:$0xff]
      %v2919 = vpack.c.bf16 %v2912, %v2911
      %2920 = vmatprep.subr.bf16.mxu0 %v2761
      %2921 = vmatpush1.bf16.msra.mxu0 %v2760
      %2922 = vmatprep.subr.bf16.mxu0 %v2758
      %2923 = vmatpush1.bf16.msra.mxu0 %v2757
      %2924 = vmatprep.subr.bf16.mxu0 %v2755
      %2925 = vmatpush1.bf16.msra.mxu0 %v2754
      %2926 = vmatprep.subr.bf16.mxu0 %v2752
      %2927 = vmatpush1.bf16.msra.mxu0 %v2751
      %2928 = vmatprep.subr.bf16.mxu0 %v2749
      %2929 = vmatpush1.bf16.msra.mxu0 %v2748
      %2930 = vmatprep.subr.bf16.mxu0 %v2746
      %2931 = vmatpush1.bf16.msra.mxu0 %v2745
      %2932 = vmatprep.subr.bf16.mxu0 %v2743
      %2933 = vmatpush1.bf16.msra.mxu0 %v2742
      %2934 = vmatprep.subr.bf16.mxu0 %v2740
      %2935 = vmatpush1.bf16.msra.mxu0 %v2739
      %2936 = vmatprep.subr.bf16.mxu0 0
      %2937 = vmatpush2.bf16.msra.mxu0 0
      %2938 = vmatprep.subr.bf16.mxu0 0
      %2939 = vmatpush2.bf16.msra.mxu0 0
      %2940 = vmatprep.subr.bf16.mxu0 0
      %2941 = vmatpush2.bf16.msra.mxu0 0
      %2942 = vmatprep.subr.bf16.mxu0 0
      %2943 = vmatpush2.bf16.msra.mxu0 0
      %2944 = vmatprep.subr.bf16.mxu0 0
      %2945 = vmatpush2.bf16.msra.mxu0 0
      %2946 = vmatprep.subr.bf16.mxu0 0
      %2947 = vmatpush2.bf16.msra.mxu0 0
      %2948 = vmatprep.subr.bf16.mxu0 0
      %2949 = vmatpush2.bf16.msra.mxu0 0
      %2950 = vmatprep.subr.bf16.mxu0 0
      %2951 = vmatpush2.bf16.msra.mxu0 0
      %2952 = vmatprep.mubr.bf16.mxu0 0
      %2953 = vmatmul.mubr.bf16.gmra.mxu0 %v2919
      %v2954 = vpop.f32.mrf.mxu0
      %v2955 = vadd.f32 0.0, %v2954
      %v2956 = vpop.f32.mrf.mxu0
      %v2957 = vadd.f32 0.0, %v2956
      %v2958 = vpop.f32.mrf.mxu0
      %v2959 = vadd.f32 0.0, %v2958
      %v2960 = vpop.f32.mrf.mxu0
      %v2961 = vadd.f32 0.0, %v2960
      %2962 = vdwg.mxu0
      %2963 = vmatprep.subr.bf16.mxu0 0
      %2964 = vmatpush1.bf16.msra.mxu0 %v2762
      %2965 = vmatprep.subr.bf16.mxu0 0
      %2966 = vmatpush1.bf16.msra.mxu0 %v2759
      %2967 = vmatprep.subr.bf16.mxu0 0
      %2968 = vmatpush1.bf16.msra.mxu0 %v2756
      %2969 = vmatprep.subr.bf16.mxu0 0
      %2970 = vmatpush1.bf16.msra.mxu0 %v2753
      %2971 = vmatprep.subr.bf16.mxu0 0
      %2972 = vmatpush1.bf16.msra.mxu0 %v2750
      %2973 = vmatprep.subr.bf16.mxu0 0
      %2974 = vmatpush1.bf16.msra.mxu0 %v2747
      %2975 = vmatprep.subr.bf16.mxu0 0
      %2976 = vmatpush1.bf16.msra.mxu0 %v2744
      %2977 = vmatprep.subr.bf16.mxu0 0
      %2978 = vmatpush1.bf16.msra.mxu0 %v2741
      %2979 = vmatprep.subr.bf16.mxu0 0
      %2980 = vmatpush2.bf16.msra.mxu0 0
      %2981 = vmatprep.subr.bf16.mxu0 0
      %2982 = vmatpush2.bf16.msra.mxu0 0
      %2983 = vmatprep.subr.bf16.mxu0 0
      %2984 = vmatpush2.bf16.msra.mxu0 0
      %2985 = vmatprep.subr.bf16.mxu0 0
      %2986 = vmatpush2.bf16.msra.mxu0 0
      %2987 = vmatprep.subr.bf16.mxu0 0
      %2988 = vmatpush2.bf16.msra.mxu0 0
      %2989 = vmatprep.subr.bf16.mxu0 0
      %2990 = vmatpush2.bf16.msra.mxu0 0
      %2991 = vmatprep.subr.bf16.mxu0 0
      %2992 = vmatpush2.bf16.msra.mxu0 0
      %2993 = vmatprep.subr.bf16.mxu0 0
      %2994 = vmatpush2.bf16.msra.mxu0 0
      %2995 = vmatprep.mubr.bf16.mxu0 0
      %2996 = vmatmul.mubr.bf16.gmra.mxu0 %v2919
      %v2997 = vpop.f32.mrf.mxu0
      %v2998 = vadd.f32 0.0, %v2997
      %v2999 = vpop.f32.mrf.mxu0
      %v3000 = vpop.f32.mrf.mxu0
      %v3001 = vadd.f32 0.0, %v3000
      %v3002 = vpop.f32.mrf.mxu0
      %3003 = vdwg.mxu0
      %v3004 = vadd.f32 %v2913, %v2955
      %v3005 = vadd.f32 %v2916, %v2959
      %v3006 = vxor.u32 %v3004, 2147483648
      %v3007 = vxor.u32 %v3005, 2147483648
      %v3008 = vmul.f32 %v3006, 1.442695
      %v3009 = vpow.pop %v3008
      %v3010 = vmul.f32 %v3007, 1.442695
      %v3011 = vpow.pop %v3010
      %v3012 = vadd.f32 %v3009, 1.0
      %v3013 = vadd.f32 %v3011, 1.0
      %v3014 = vrcp.pop %v3012
      %v3015 = vmul.f32 1.0, %v3014
      %v3016 = vrcp.pop %v3013
      %v3017 = vmul.f32 1.0, %v3016
      %v3018 = vadd.f32 %v2998, %v2153
      %v3019 = vadd.f32 %v3001, %v2153
      %v3020 = vmul.f32 %v3015, %v3018
      %v3021 = vmul.f32 %v3017, %v3019
      %v3022 = vadd.f32 %v2915, %v3020
      %v3023 = vadd.f32 %v2918, %v3021
      %v3024 = vtanh.pop %v3022
      %v3025 = vtanh.pop %v3023
      %v3026 = vadd.f32 %v2914, %v2957
      %v3027 = vadd.f32 %v2917, %v2961
      %v3028 = vxor.u32 %v3026, 2147483648
      %v3029 = vxor.u32 %v3027, 2147483648
      %v3030 = vmul.f32 %v3028, 1.442695
      %v3031 = vpow.pop %v3030
      %v3032 = vmul.f32 %v3029, 1.442695
      %v3033 = vpow.pop %v3032
      %v3034 = vadd.f32 %v3031, 1.0
      %v3035 = vadd.f32 %v3033, 1.0
      %v3036 = vrcp.pop %v3034
      %v3037 = vmul.f32 1.0, %v3036
      %v3038 = vrcp.pop %v3035
      %v3039 = vmul.f32 1.0, %v3038
      %v3040 = vsub.f32 %v2911, %v3024
      %v3041 = vsub.f32 %v2912, %v3025
      %v3042 = vmul.f32 %v3037, %v3040
      %v3043 = vmul.f32 %v3039, %v3041
      %v3044 = vadd.f32 %v3024, %v3042
      %v3045 = vadd.f32 %v3025, %v3043
      %v3046 = vld [vmem:[#allocation3 + $0x60] sm:$0xff]
      %v3047 = vld [vmem:[#allocation3 + $0x68] sm:$0xff]
      %v3048 = vld [vmem:[#allocation3 + $0x70] sm:$0xff]
      %v3049 = vld [vmem:[#allocation3 + $0x78] sm:$0xff]
      %v3050 = vld [vmem:[#allocation3 + $0x80] sm:$0xff]
      %v3051 = vld [vmem:[#allocation3 + $0x88] sm:$0xff]
      %v3052 = vpack.c.bf16 %v3045, %v3044
      %3053 = vmatprep.subr.bf16.mxu0 %v2761
      %3054 = vmatpush1.bf16.msra.mxu0 %v2760
      %3055 = vmatprep.subr.bf16.mxu0 %v2758
      %3056 = vmatpush1.bf16.msra.mxu0 %v2757
      %3057 = vmatprep.subr.bf16.mxu0 %v2755
      %3058 = vmatpush1.bf16.msra.mxu0 %v2754
      %3059 = vmatprep.subr.bf16.mxu0 %v2752
      %3060 = vmatpush1.bf16.msra.mxu0 %v2751
      %3061 = vmatprep.subr.bf16.mxu0 %v2749
      %3062 = vmatpush1.bf16.msra.mxu0 %v2748
      %3063 = vmatprep.subr.bf16.mxu0 %v2746
      %3064 = vmatpush1.bf16.msra.mxu0 %v2745
      %3065 = vmatprep.subr.bf16.mxu0 %v2743
      %3066 = vmatpush1.bf16.msra.mxu0 %v2742
      %3067 = vmatprep.subr.bf16.mxu0 %v2740
      %3068 = vmatpush1.bf16.msra.mxu0 %v2739
      %3069 = vmatprep.subr.bf16.mxu0 0
      %3070 = vmatpush2.bf16.msra.mxu0 0
      %3071 = vmatprep.subr.bf16.mxu0 0
      %3072 = vmatpush2.bf16.msra.mxu0 0
      %3073 = vmatprep.subr.bf16.mxu0 0
      %3074 = vmatpush2.bf16.msra.mxu0 0
      %3075 = vmatprep.subr.bf16.mxu0 0
      %3076 = vmatpush2.bf16.msra.mxu0 0
      %3077 = vmatprep.subr.bf16.mxu0 0
      %3078 = vmatpush2.bf16.msra.mxu0 0
      %3079 = vmatprep.subr.bf16.mxu0 0
      %3080 = vmatpush2.bf16.msra.mxu0 0
      %3081 = vmatprep.subr.bf16.mxu0 0
      %3082 = vmatpush2.bf16.msra.mxu0 0
      %3083 = vmatprep.subr.bf16.mxu0 0
      %3084 = vmatpush2.bf16.msra.mxu0 0
      %3085 = vmatprep.mubr.bf16.mxu0 0
      %3086 = vmatmul.mubr.bf16.gmra.mxu0 %v3052
      %v3087 = vpop.f32.mrf.mxu0
      %v3088 = vadd.f32 0.0, %v3087
      %v3089 = vpop.f32.mrf.mxu0
      %v3090 = vadd.f32 0.0, %v3089
      %v3091 = vpop.f32.mrf.mxu0
      %v3092 = vadd.f32 0.0, %v3091
      %v3093 = vpop.f32.mrf.mxu0
      %v3094 = vadd.f32 0.0, %v3093
      %3095 = vdwg.mxu0
      %3096 = vmatprep.subr.bf16.mxu0 0
      %3097 = vmatpush1.bf16.msra.mxu0 %v2762
      %3098 = vmatprep.subr.bf16.mxu0 0
      %3099 = vmatpush1.bf16.msra.mxu0 %v2759
      %3100 = vmatprep.subr.bf16.mxu0 0
      %3101 = vmatpush1.bf16.msra.mxu0 %v2756
      %3102 = vmatprep.subr.bf16.mxu0 0
      %3103 = vmatpush1.bf16.msra.mxu0 %v2753
      %3104 = vmatprep.subr.bf16.mxu0 0
      %3105 = vmatpush1.bf16.msra.mxu0 %v2750
      %3106 = vmatprep.subr.bf16.mxu0 0
      %3107 = vmatpush1.bf16.msra.mxu0 %v2747
      %3108 = vmatprep.subr.bf16.mxu0 0
      %3109 = vmatpush1.bf16.msra.mxu0 %v2744
      %3110 = vmatprep.subr.bf16.mxu0 0
      %3111 = vmatpush1.bf16.msra.mxu0 %v2741
      %3112 = vmatprep.subr.bf16.mxu0 0
      %3113 = vmatpush2.bf16.msra.mxu0 0
      %3114 = vmatprep.subr.bf16.mxu0 0
      %3115 = vmatpush2.bf16.msra.mxu0 0
      %3116 = vmatprep.subr.bf16.mxu0 0
      %3117 = vmatpush2.bf16.msra.mxu0 0
      %3118 = vmatprep.subr.bf16.mxu0 0
      %3119 = vmatpush2.bf16.msra.mxu0 0
      %3120 = vmatprep.subr.bf16.mxu0 0
      %3121 = vmatpush2.bf16.msra.mxu0 0
      %3122 = vmatprep.subr.bf16.mxu0 0
      %3123 = vmatpush2.bf16.msra.mxu0 0
      %3124 = vmatprep.subr.bf16.mxu0 0
      %3125 = vmatpush2.bf16.msra.mxu0 0
      %3126 = vmatprep.subr.bf16.mxu0 0
      %3127 = vmatpush2.bf16.msra.mxu0 0
      %3128 = vmatprep.mubr.bf16.mxu0 0
      %3129 = vmatmul.mubr.bf16.gmra.mxu0 %v3052
      %v3130 = vpop.f32.mrf.mxu0
      %v3131 = vadd.f32 0.0, %v3130
      %v3132 = vpop.f32.mrf.mxu0
      %v3133 = vpop.f32.mrf.mxu0
      %v3134 = vadd.f32 0.0, %v3133
      %v3135 = vpop.f32.mrf.mxu0
      %3136 = vdwg.mxu0
      %v3137 = vadd.f32 %v3046, %v3088
      %v3138 = vadd.f32 %v3049, %v3092
      %v3139 = vxor.u32 %v3137, 2147483648
      %v3140 = vxor.u32 %v3138, 2147483648
      %v3141 = vmul.f32 %v3139, 1.442695
      %v3142 = vpow.pop %v3141
      %v3143 = vmul.f32 %v3140, 1.442695
      %v3144 = vpow.pop %v3143
      %v3145 = vadd.f32 %v3142, 1.0
      %v3146 = vadd.f32 %v3144, 1.0
      %v3147 = vrcp.pop %v3145
      %v3148 = vmul.f32 1.0, %v3147
      %v3149 = vrcp.pop %v3146
      %v3150 = vmul.f32 1.0, %v3149
      %v3151 = vadd.f32 %v3131, %v2153
      %v3152 = vadd.f32 %v3134, %v2153
      %v3153 = vmul.f32 %v3148, %v3151
      %v3154 = vmul.f32 %v3150, %v3152
      %v3155 = vadd.f32 %v3048, %v3153
      %v3156 = vadd.f32 %v3051, %v3154
      %v3157 = vtanh.pop %v3155
      %v3158 = vtanh.pop %v3156
      %v3159 = vadd.f32 %v3047, %v3090
      %v3160 = vadd.f32 %v3050, %v3094
      %v3161 = vxor.u32 %v3159, 2147483648
      %v3162 = vxor.u32 %v3160, 2147483648
      %v3163 = vmul.f32 %v3161, 1.442695
      %v3164 = vpow.pop %v3163
      %v3165 = vmul.f32 %v3162, 1.442695
      %v3166 = vpow.pop %v3165
      %v3167 = vadd.f32 %v3164, 1.0
      %v3168 = vadd.f32 %v3166, 1.0
      %v3169 = vrcp.pop %v3167
      %v3170 = vmul.f32 1.0, %v3169
      %v3171 = vrcp.pop %v3168
      %v3172 = vmul.f32 1.0, %v3171
      %v3173 = vsub.f32 %v3044, %v3157
      %v3174 = vsub.f32 %v3045, %v3158
      %v3175 = vmul.f32 %v3170, %v3173
      %v3176 = vmul.f32 %v3172, %v3174
      %v3177 = vadd.f32 %v3157, %v3175
      %v3178 = vadd.f32 %v3158, %v3176
      %v3179 = vld [vmem:[#allocation3 + $0x90] sm:$0xff]
      %v3180 = vld [vmem:[#allocation3 + $0x98] sm:$0xff]
      %v3181 = vld [vmem:[#allocation3 + $0xa0] sm:$0xff]
      %v3182 = vld [vmem:[#allocation3 + $0xa8] sm:$0xff]
      %v3183 = vld [vmem:[#allocation3 + $0xb0] sm:$0xff]
      %v3184 = vld [vmem:[#allocation3 + $0xb8] sm:$0xff]
      %v3185 = vpack.c.bf16 %v3178, %v3177
      %3186 = vmatprep.subr.bf16.mxu0 %v2761
      %3187 = vmatpush1.bf16.msra.mxu0 %v2760
      %3188 = vmatprep.subr.bf16.mxu0 %v2758
      %3189 = vmatpush1.bf16.msra.mxu0 %v2757
      %3190 = vmatprep.subr.bf16.mxu0 %v2755
      %3191 = vmatpush1.bf16.msra.mxu0 %v2754
      %3192 = vmatprep.subr.bf16.mxu0 %v2752
      %3193 = vmatpush1.bf16.msra.mxu0 %v2751
      %3194 = vmatprep.subr.bf16.mxu0 %v2749
      %3195 = vmatpush1.bf16.msra.mxu0 %v2748
      %3196 = vmatprep.subr.bf16.mxu0 %v2746
      %3197 = vmatpush1.bf16.msra.mxu0 %v2745
      %3198 = vmatprep.subr.bf16.mxu0 %v2743
      %3199 = vmatpush1.bf16.msra.mxu0 %v2742
      %3200 = vmatprep.subr.bf16.mxu0 %v2740
      %3201 = vmatpush1.bf16.msra.mxu0 %v2739
      %3202 = vmatprep.subr.bf16.mxu0 0
      %3203 = vmatpush2.bf16.msra.mxu0 0
      %3204 = vmatprep.subr.bf16.mxu0 0
      %3205 = vmatpush2.bf16.msra.mxu0 0
      %3206 = vmatprep.subr.bf16.mxu0 0
      %3207 = vmatpush2.bf16.msra.mxu0 0
      %3208 = vmatprep.subr.bf16.mxu0 0
      %3209 = vmatpush2.bf16.msra.mxu0 0
      %3210 = vmatprep.subr.bf16.mxu0 0
      %3211 = vmatpush2.bf16.msra.mxu0 0
      %3212 = vmatprep.subr.bf16.mxu0 0
      %3213 = vmatpush2.bf16.msra.mxu0 0
      %3214 = vmatprep.subr.bf16.mxu0 0
      %3215 = vmatpush2.bf16.msra.mxu0 0
      %3216 = vmatprep.subr.bf16.mxu0 0
      %3217 = vmatpush2.bf16.msra.mxu0 0
      %3218 = vmatprep.mubr.bf16.mxu0 0
      %3219 = vmatmul.mubr.bf16.gmra.mxu0 %v3185
      %v3220 = vpop.f32.mrf.mxu0
      %v3221 = vadd.f32 0.0, %v3220
      %v3222 = vpop.f32.mrf.mxu0
      %v3223 = vadd.f32 0.0, %v3222
      %v3224 = vpop.f32.mrf.mxu0
      %v3225 = vadd.f32 0.0, %v3224
      %v3226 = vpop.f32.mrf.mxu0
      %v3227 = vadd.f32 0.0, %v3226
      %3228 = vdwg.mxu0
      %3229 = vmatprep.subr.bf16.mxu0 0
      %3230 = vmatpush1.bf16.msra.mxu0 %v2762
      %3231 = vmatprep.subr.bf16.mxu0 0
      %3232 = vmatpush1.bf16.msra.mxu0 %v2759
      %3233 = vmatprep.subr.bf16.mxu0 0
      %3234 = vmatpush1.bf16.msra.mxu0 %v2756
      %3235 = vmatprep.subr.bf16.mxu0 0
      %3236 = vmatpush1.bf16.msra.mxu0 %v2753
      %3237 = vmatprep.subr.bf16.mxu0 0
      %3238 = vmatpush1.bf16.msra.mxu0 %v2750
      %3239 = vmatprep.subr.bf16.mxu0 0
      %3240 = vmatpush1.bf16.msra.mxu0 %v2747
      %3241 = vmatprep.subr.bf16.mxu0 0
      %3242 = vmatpush1.bf16.msra.mxu0 %v2744
      %3243 = vmatprep.subr.bf16.mxu0 0
      %3244 = vmatpush1.bf16.msra.mxu0 %v2741
      %3245 = vmatprep.subr.bf16.mxu0 0
      %3246 = vmatpush2.bf16.msra.mxu0 0
      %3247 = vmatprep.subr.bf16.mxu0 0
      %3248 = vmatpush2.bf16.msra.mxu0 0
      %3249 = vmatprep.subr.bf16.mxu0 0
      %3250 = vmatpush2.bf16.msra.mxu0 0
      %3251 = vmatprep.subr.bf16.mxu0 0
      %3252 = vmatpush2.bf16.msra.mxu0 0
      %3253 = vmatprep.subr.bf16.mxu0 0
      %3254 = vmatpush2.bf16.msra.mxu0 0
      %3255 = vmatprep.subr.bf16.mxu0 0
      %3256 = vmatpush2.bf16.msra.mxu0 0
      %3257 = vmatprep.subr.bf16.mxu0 0
      %3258 = vmatpush2.bf16.msra.mxu0 0
      %3259 = vmatprep.subr.bf16.mxu0 0
      %3260 = vmatpush2.bf16.msra.mxu0 0
      %3261 = vmatprep.mubr.bf16.mxu0 0
      %3262 = vmatmul.mubr.bf16.gmra.mxu0 %v3185
      %v3263 = vpop.f32.mrf.mxu0
      %v3264 = vadd.f32 0.0, %v3263
      %v3265 = vpop.f32.mrf.mxu0
      %v3266 = vpop.f32.mrf.mxu0
      %v3267 = vadd.f32 0.0, %v3266
      %v3268 = vpop.f32.mrf.mxu0
      %3269 = vdwg.mxu0
      %v3270 = vadd.f32 %v3179, %v3221
      %v3271 = vadd.f32 %v3182, %v3225
      %v3272 = vxor.u32 %v3270, 2147483648
      %v3273 = vxor.u32 %v3271, 2147483648
      %v3274 = vmul.f32 %v3272, 1.442695
      %v3275 = vpow.pop %v3274
      %v3276 = vmul.f32 %v3273, 1.442695
      %v3277 = vpow.pop %v3276
      %v3278 = vadd.f32 %v3275, 1.0
      %v3279 = vadd.f32 %v3277, 1.0
      %v3280 = vrcp.pop %v3278
      %v3281 = vmul.f32 1.0, %v3280
      %v3282 = vrcp.pop %v3279
      %v3283 = vmul.f32 1.0, %v3282
      %v3284 = vadd.f32 %v3264, %v2153
      %v3285 = vadd.f32 %v3267, %v2153
      %v3286 = vmul.f32 %v3281, %v3284
      %v3287 = vmul.f32 %v3283, %v3285
      %v3288 = vadd.f32 %v3181, %v3286
      %v3289 = vadd.f32 %v3184, %v3287
      %v3290 = vtanh.pop %v3288
      %v3291 = vtanh.pop %v3289
      %v3292 = vadd.f32 %v3180, %v3223
      %v3293 = vadd.f32 %v3183, %v3227
      %v3294 = vxor.u32 %v3292, 2147483648
      %v3295 = vxor.u32 %v3293, 2147483648
      %v3296 = vmul.f32 %v3294, 1.442695
      %v3297 = vpow.pop %v3296
      %v3298 = vmul.f32 %v3295, 1.442695
      %v3299 = vpow.pop %v3298
      %v3300 = vadd.f32 %v3297, 1.0
      %v3301 = vadd.f32 %v3299, 1.0
      %v3302 = vrcp.pop %v3300
      %v3303 = vmul.f32 1.0, %v3302
      %v3304 = vrcp.pop %v3301
      %v3305 = vmul.f32 1.0, %v3304
      %v3306 = vsub.f32 %v3177, %v3290
      %v3307 = vsub.f32 %v3178, %v3291
      %v3308 = vmul.f32 %v3303, %v3306
      %v3309 = vmul.f32 %v3305, %v3307
      %v3310 = vadd.f32 %v3290, %v3308
      %v3311 = vadd.f32 %v3291, %v3309
      %v3312 = vld [vmem:[#allocation3 + $0xc0] sm:$0xff]
      %v3313 = vld [vmem:[#allocation3 + $0xc8] sm:$0xff]
      %v3314 = vld [vmem:[#allocation3 + $0xd0] sm:$0xff]
      %v3315 = vld [vmem:[#allocation3 + $0xd8] sm:$0xff]
      %v3316 = vld [vmem:[#allocation3 + $0xe0] sm:$0xff]
      %v3317 = vld [vmem:[#allocation3 + $0xe8] sm:$0xff]
      %v3318 = vpack.c.bf16 %v3311, %v3310
      %3319 = vmatprep.subr.bf16.mxu0 %v2761
      %3320 = vmatpush1.bf16.msra.mxu0 %v2760
      %3321 = vmatprep.subr.bf16.mxu0 %v2758
      %3322 = vmatpush1.bf16.msra.mxu0 %v2757
      %3323 = vmatprep.subr.bf16.mxu0 %v2755
      %3324 = vmatpush1.bf16.msra.mxu0 %v2754
      %3325 = vmatprep.subr.bf16.mxu0 %v2752
      %3326 = vmatpush1.bf16.msra.mxu0 %v2751
      %3327 = vmatprep.subr.bf16.mxu0 %v2749
      %3328 = vmatpush1.bf16.msra.mxu0 %v2748
      %3329 = vmatprep.subr.bf16.mxu0 %v2746
      %3330 = vmatpush1.bf16.msra.mxu0 %v2745
      %3331 = vmatprep.subr.bf16.mxu0 %v2743
      %3332 = vmatpush1.bf16.msra.mxu0 %v2742
      %3333 = vmatprep.subr.bf16.mxu0 %v2740
      %3334 = vmatpush1.bf16.msra.mxu0 %v2739
      %3335 = vmatprep.subr.bf16.mxu0 0
      %3336 = vmatpush2.bf16.msra.mxu0 0
      %3337 = vmatprep.subr.bf16.mxu0 0
      %3338 = vmatpush2.bf16.msra.mxu0 0
      %3339 = vmatprep.subr.bf16.mxu0 0
      %3340 = vmatpush2.bf16.msra.mxu0 0
      %3341 = vmatprep.subr.bf16.mxu0 0
      %3342 = vmatpush2.bf16.msra.mxu0 0
      %3343 = vmatprep.subr.bf16.mxu0 0
      %3344 = vmatpush2.bf16.msra.mxu0 0
      %3345 = vmatprep.subr.bf16.mxu0 0
      %3346 = vmatpush2.bf16.msra.mxu0 0
      %3347 = vmatprep.subr.bf16.mxu0 0
      %3348 = vmatpush2.bf16.msra.mxu0 0
      %3349 = vmatprep.subr.bf16.mxu0 0
      %3350 = vmatpush2.bf16.msra.mxu0 0
      %3351 = vmatprep.mubr.bf16.mxu0 0
      %3352 = vmatmul.mubr.bf16.gmra.mxu0 %v3318
      %v3353 = vpop.f32.mrf.mxu0
      %v3354 = vadd.f32 0.0, %v3353
      %v3355 = vpop.f32.mrf.mxu0
      %v3356 = vadd.f32 0.0, %v3355
      %v3357 = vpop.f32.mrf.mxu0
      %v3358 = vadd.f32 0.0, %v3357
      %v3359 = vpop.f32.mrf.mxu0
      %v3360 = vadd.f32 0.0, %v3359
      %3361 = vdwg.mxu0
      %3362 = vmatprep.subr.bf16.mxu0 0
      %3363 = vmatpush1.bf16.msra.mxu0 %v2762
      %3364 = vmatprep.subr.bf16.mxu0 0
      %3365 = vmatpush1.bf16.msra.mxu0 %v2759
      %3366 = vmatprep.subr.bf16.mxu0 0
      %3367 = vmatpush1.bf16.msra.mxu0 %v2756
      %3368 = vmatprep.subr.bf16.mxu0 0
      %3369 = vmatpush1.bf16.msra.mxu0 %v2753
      %3370 = vmatprep.subr.bf16.mxu0 0
      %3371 = vmatpush1.bf16.msra.mxu0 %v2750
      %3372 = vmatprep.subr.bf16.mxu0 0
      %3373 = vmatpush1.bf16.msra.mxu0 %v2747
      %3374 = vmatprep.subr.bf16.mxu0 0
      %3375 = vmatpush1.bf16.msra.mxu0 %v2744
      %3376 = vmatprep.subr.bf16.mxu0 0
      %3377 = vmatpush1.bf16.msra.mxu0 %v2741
      %3378 = vmatprep.subr.bf16.mxu0 0
      %3379 = vmatpush2.bf16.msra.mxu0 0
      %3380 = vmatprep.subr.bf16.mxu0 0
      %3381 = vmatpush2.bf16.msra.mxu0 0
      %3382 = vmatprep.subr.bf16.mxu0 0
      %3383 = vmatpush2.bf16.msra.mxu0 0
      %3384 = vmatprep.subr.bf16.mxu0 0
      %3385 = vmatpush2.bf16.msra.mxu0 0
      %3386 = vmatprep.subr.bf16.mxu0 0
      %3387 = vmatpush2.bf16.msra.mxu0 0
      %3388 = vmatprep.subr.bf16.mxu0 0
      %3389 = vmatpush2.bf16.msra.mxu0 0
      %3390 = vmatprep.subr.bf16.mxu0 0
      %3391 = vmatpush2.bf16.msra.mxu0 0
      %3392 = vmatprep.subr.bf16.mxu0 0
      %3393 = vmatpush2.bf16.msra.mxu0 0
      %3394 = vmatprep.mubr.bf16.mxu0 0
      %3395 = vmatmul.mubr.bf16.gmra.mxu0 %v3318
      %v3396 = vpop.f32.mrf.mxu0
      %v3397 = vadd.f32 0.0, %v3396
      %v3398 = vpop.f32.mrf.mxu0
      %v3399 = vpop.f32.mrf.mxu0
      %v3400 = vadd.f32 0.0, %v3399
      %v3401 = vpop.f32.mrf.mxu0
      %3402 = vdwg.mxu0
      %v3403 = vadd.f32 %v3312, %v3354
      %v3404 = vadd.f32 %v3315, %v3358
      %v3405 = vxor.u32 %v3403, 2147483648
      %v3406 = vxor.u32 %v3404, 2147483648
      %v3407 = vmul.f32 %v3405, 1.442695
      %v3408 = vpow.pop %v3407
      %v3409 = vmul.f32 %v3406, 1.442695
      %v3410 = vpow.pop %v3409
      %v3411 = vadd.f32 %v3408, 1.0
      %v3412 = vadd.f32 %v3410, 1.0
      %v3413 = vrcp.pop %v3411
      %v3414 = vmul.f32 1.0, %v3413
      %v3415 = vrcp.pop %v3412
      %v3416 = vmul.f32 1.0, %v3415
      %v3417 = vadd.f32 %v3397, %v2153
      %v3418 = vadd.f32 %v3400, %v2153
      %v3419 = vmul.f32 %v3414, %v3417
      %v3420 = vmul.f32 %v3416, %v3418
      %v3421 = vadd.f32 %v3314, %v3419
      %v3422 = vadd.f32 %v3317, %v3420
      %v3423 = vtanh.pop %v3421
      %v3424 = vtanh.pop %v3422
      %v3425 = vadd.f32 %v3313, %v3356
      %v3426 = vadd.f32 %v3316, %v3360
      %v3427 = vxor.u32 %v3425, 2147483648
      %v3428 = vxor.u32 %v3426, 2147483648
      %v3429 = vmul.f32 %v3427, 1.442695
      %v3430 = vpow.pop %v3429
      %v3431 = vmul.f32 %v3428, 1.442695
      %v3432 = vpow.pop %v3431
      %v3433 = vadd.f32 %v3430, 1.0
      %v3434 = vadd.f32 %v3432, 1.0
      %v3435 = vrcp.pop %v3433
      %v3436 = vmul.f32 1.0, %v3435
      %v3437 = vrcp.pop %v3434
      %v3438 = vmul.f32 1.0, %v3437
      %v3439 = vsub.f32 %v3310, %v3423
      %v3440 = vsub.f32 %v3311, %v3424
      %v3441 = vmul.f32 %v3436, %v3439
      %v3442 = vmul.f32 %v3438, %v3440
      %v3443 = vadd.f32 %v3423, %v3441
      %v3444 = vadd.f32 %v3424, %v3442
      %v3445 = vld [vmem:[#allocation3 + $0xf0] sm:$0xff]
      %v3446 = vld [vmem:[#allocation3 + $0xf8] sm:$0xff]
      %v3447 = vld [vmem:[#allocation3 + $0x100] sm:$0xff]
      %v3448 = vld [vmem:[#allocation3 + $0x108] sm:$0xff]
      %v3449 = vld [vmem:[#allocation3 + $0x110] sm:$0xff]
      %v3450 = vld [vmem:[#allocation3 + $0x118] sm:$0xff]
      %v3451 = vpack.c.bf16 %v3444, %v3443
      %3452 = vmatprep.subr.bf16.mxu0 %v2761
      %3453 = vmatpush1.bf16.msra.mxu0 %v2760
      %3454 = vmatprep.subr.bf16.mxu0 %v2758
      %3455 = vmatpush1.bf16.msra.mxu0 %v2757
      %3456 = vmatprep.subr.bf16.mxu0 %v2755
      %3457 = vmatpush1.bf16.msra.mxu0 %v2754
      %3458 = vmatprep.subr.bf16.mxu0 %v2752
      %3459 = vmatpush1.bf16.msra.mxu0 %v2751
      %3460 = vmatprep.subr.bf16.mxu0 %v2749
      %3461 = vmatpush1.bf16.msra.mxu0 %v2748
      %3462 = vmatprep.subr.bf16.mxu0 %v2746
      %3463 = vmatpush1.bf16.msra.mxu0 %v2745
      %3464 = vmatprep.subr.bf16.mxu0 %v2743
      %3465 = vmatpush1.bf16.msra.mxu0 %v2742
      %3466 = vmatprep.subr.bf16.mxu0 %v2740
      %3467 = vmatpush1.bf16.msra.mxu0 %v2739
      %3468 = vmatprep.subr.bf16.mxu0 0
      %3469 = vmatpush2.bf16.msra.mxu0 0
      %3470 = vmatprep.subr.bf16.mxu0 0
      %3471 = vmatpush2.bf16.msra.mxu0 0
      %3472 = vmatprep.subr.bf16.mxu0 0
      %3473 = vmatpush2.bf16.msra.mxu0 0
      %3474 = vmatprep.subr.bf16.mxu0 0
      %3475 = vmatpush2.bf16.msra.mxu0 0
      %3476 = vmatprep.subr.bf16.mxu0 0
      %3477 = vmatpush2.bf16.msra.mxu0 0
      %3478 = vmatprep.subr.bf16.mxu0 0
      %3479 = vmatpush2.bf16.msra.mxu0 0
      %3480 = vmatprep.subr.bf16.mxu0 0
      %3481 = vmatpush2.bf16.msra.mxu0 0
      %3482 = vmatprep.subr.bf16.mxu0 0
      %3483 = vmatpush2.bf16.msra.mxu0 0
      %3484 = vmatprep.mubr.bf16.mxu0 0
      %3485 = vmatmul.mubr.bf16.gmra.mxu0 %v3451
      %v3486 = vpop.f32.mrf.mxu0
      %v3487 = vadd.f32 0.0, %v3486
      %v3488 = vpop.f32.mrf.mxu0
      %v3489 = vadd.f32 0.0, %v3488
      %v3490 = vpop.f32.mrf.mxu0
      %v3491 = vadd.f32 0.0, %v3490
      %v3492 = vpop.f32.mrf.mxu0
      %v3493 = vadd.f32 0.0, %v3492
      %3494 = vdwg.mxu0
      %3495 = vmatprep.subr.bf16.mxu0 0
      %3496 = vmatpush1.bf16.msra.mxu0 %v2762
      %3497 = vmatprep.subr.bf16.mxu0 0
      %3498 = vmatpush1.bf16.msra.mxu0 %v2759
      %3499 = vmatprep.subr.bf16.mxu0 0
      %3500 = vmatpush1.bf16.msra.mxu0 %v2756
      %3501 = vmatprep.subr.bf16.mxu0 0
      %3502 = vmatpush1.bf16.msra.mxu0 %v2753
      %3503 = vmatprep.subr.bf16.mxu0 0
      %3504 = vmatpush1.bf16.msra.mxu0 %v2750
      %3505 = vmatprep.subr.bf16.mxu0 0
      %3506 = vmatpush1.bf16.msra.mxu0 %v2747
      %3507 = vmatprep.subr.bf16.mxu0 0
      %3508 = vmatpush1.bf16.msra.mxu0 %v2744
      %3509 = vmatprep.subr.bf16.mxu0 0
      %3510 = vmatpush1.bf16.msra.mxu0 %v2741
      %3511 = vmatprep.subr.bf16.mxu0 0
      %3512 = vmatpush2.bf16.msra.mxu0 0
      %3513 = vmatprep.subr.bf16.mxu0 0
      %3514 = vmatpush2.bf16.msra.mxu0 0
      %3515 = vmatprep.subr.bf16.mxu0 0
      %3516 = vmatpush2.bf16.msra.mxu0 0
      %3517 = vmatprep.subr.bf16.mxu0 0
      %3518 = vmatpush2.bf16.msra.mxu0 0
      %3519 = vmatprep.subr.bf16.mxu0 0
      %3520 = vmatpush2.bf16.msra.mxu0 0
      %3521 = vmatprep.subr.bf16.mxu0 0
      %3522 = vmatpush2.bf16.msra.mxu0 0
      %3523 = vmatprep.subr.bf16.mxu0 0
      %3524 = vmatpush2.bf16.msra.mxu0 0
      %3525 = vmatprep.subr.bf16.mxu0 0
      %3526 = vmatpush2.bf16.msra.mxu0 0
      %3527 = vmatprep.mubr.bf16.mxu0 0
      %3528 = vmatmul.mubr.bf16.gmra.mxu0 %v3451
      %v3529 = vpop.f32.mrf.mxu0
      %v3530 = vadd.f32 0.0, %v3529
      %v3531 = vpop.f32.mrf.mxu0
      %v3532 = vpop.f32.mrf.mxu0
      %v3533 = vadd.f32 0.0, %v3532
      %v3534 = vpop.f32.mrf.mxu0
      %3535 = vdwg.mxu0
      %v3536 = vadd.f32 %v3445, %v3487
      %v3537 = vadd.f32 %v3448, %v3491
      %v3538 = vxor.u32 %v3536, 2147483648
      %v3539 = vxor.u32 %v3537, 2147483648
      %v3540 = vmul.f32 %v3538, 1.442695
      %v3541 = vpow.pop %v3540
      %v3542 = vmul.f32 %v3539, 1.442695
      %v3543 = vpow.pop %v3542
      %v3544 = vadd.f32 %v3541, 1.0
      %v3545 = vadd.f32 %v3543, 1.0
      %v3546 = vrcp.pop %v3544
      %v3547 = vmul.f32 1.0, %v3546
      %v3548 = vrcp.pop %v3545
      %v3549 = vmul.f32 1.0, %v3548
      %v3550 = vadd.f32 %v3530, %v2153
      %v3551 = vadd.f32 %v3533, %v2153
      %v3552 = vmul.f32 %v3547, %v3550
      %v3553 = vmul.f32 %v3549, %v3551
      %v3554 = vadd.f32 %v3447, %v3552
      %v3555 = vadd.f32 %v3450, %v3553
      %v3556 = vtanh.pop %v3554
      %v3557 = vtanh.pop %v3555
      %v3558 = vadd.f32 %v3446, %v3489
      %v3559 = vadd.f32 %v3449, %v3493
      %v3560 = vxor.u32 %v3558, 2147483648
      %v3561 = vxor.u32 %v3559, 2147483648
      %v3562 = vmul.f32 %v3560, 1.442695
      %v3563 = vpow.pop %v3562
      %v3564 = vmul.f32 %v3561, 1.442695
      %v3565 = vpow.pop %v3564
      %v3566 = vadd.f32 %v3563, 1.0
      %v3567 = vadd.f32 %v3565, 1.0
      %v3568 = vrcp.pop %v3566
      %v3569 = vmul.f32 1.0, %v3568
      %v3570 = vrcp.pop %v3567
      %v3571 = vmul.f32 1.0, %v3570
      %v3572 = vsub.f32 %v3443, %v3556
      %v3573 = vsub.f32 %v3444, %v3557
      %v3574 = vmul.f32 %v3569, %v3572
      %v3575 = vmul.f32 %v3571, %v3573
      %v3576 = vadd.f32 %v3556, %v3574
      %v3577 = vadd.f32 %v3557, %v3575
      %v3578 = vld [vmem:[#allocation3 + $0x120] sm:$0xff]
      %v3579 = vld [vmem:[#allocation3 + $0x128] sm:$0xff]
      %v3580 = vld [vmem:[#allocation3 + $0x130] sm:$0xff]
      %v3581 = vld [vmem:[#allocation3 + $0x138] sm:$0xff]
      %v3582 = vld [vmem:[#allocation3 + $0x140] sm:$0xff]
      %v3583 = vld [vmem:[#allocation3 + $0x148] sm:$0xff]
      %v3584 = vpack.c.bf16 %v3577, %v3576
      %3585 = vmatprep.subr.bf16.mxu0 %v2761
      %3586 = vmatpush1.bf16.msra.mxu0 %v2760
      %3587 = vmatprep.subr.bf16.mxu0 %v2758
      %3588 = vmatpush1.bf16.msra.mxu0 %v2757
      %3589 = vmatprep.subr.bf16.mxu0 %v2755
      %3590 = vmatpush1.bf16.msra.mxu0 %v2754
      %3591 = vmatprep.subr.bf16.mxu0 %v2752
      %3592 = vmatpush1.bf16.msra.mxu0 %v2751
      %3593 = vmatprep.subr.bf16.mxu0 %v2749
      %3594 = vmatpush1.bf16.msra.mxu0 %v2748
      %3595 = vmatprep.subr.bf16.mxu0 %v2746
      %3596 = vmatpush1.bf16.msra.mxu0 %v2745
      %3597 = vmatprep.subr.bf16.mxu0 %v2743
      %3598 = vmatpush1.bf16.msra.mxu0 %v2742
      %3599 = vmatprep.subr.bf16.mxu0 %v2740
      %3600 = vmatpush1.bf16.msra.mxu0 %v2739
      %3601 = vmatprep.subr.bf16.mxu0 0
      %3602 = vmatpush2.bf16.msra.mxu0 0
      %3603 = vmatprep.subr.bf16.mxu0 0
      %3604 = vmatpush2.bf16.msra.mxu0 0
      %3605 = vmatprep.subr.bf16.mxu0 0
      %3606 = vmatpush2.bf16.msra.mxu0 0
      %3607 = vmatprep.subr.bf16.mxu0 0
      %3608 = vmatpush2.bf16.msra.mxu0 0
      %3609 = vmatprep.subr.bf16.mxu0 0
      %3610 = vmatpush2.bf16.msra.mxu0 0
      %3611 = vmatprep.subr.bf16.mxu0 0
      %3612 = vmatpush2.bf16.msra.mxu0 0
      %3613 = vmatprep.subr.bf16.mxu0 0
      %3614 = vmatpush2.bf16.msra.mxu0 0
      %3615 = vmatprep.subr.bf16.mxu0 0
      %3616 = vmatpush2.bf16.msra.mxu0 0
      %3617 = vmatprep.mubr.bf16.mxu0 0
      %3618 = vmatmul.mubr.bf16.gmra.mxu0 %v3584
      %v3619 = vpop.f32.mrf.mxu0
      %v3620 = vadd.f32 0.0, %v3619
      %v3621 = vpop.f32.mrf.mxu0
      %v3622 = vadd.f32 0.0, %v3621
      %v3623 = vpop.f32.mrf.mxu0
      %v3624 = vadd.f32 0.0, %v3623
      %v3625 = vpop.f32.mrf.mxu0
      %v3626 = vadd.f32 0.0, %v3625
      %3627 = vdwg.mxu0
      %3628 = vmatprep.subr.bf16.mxu0 0
      %3629 = vmatpush1.bf16.msra.mxu0 %v2762
      %3630 = vmatprep.subr.bf16.mxu0 0
      %3631 = vmatpush1.bf16.msra.mxu0 %v2759
      %3632 = vmatprep.subr.bf16.mxu0 0
      %3633 = vmatpush1.bf16.msra.mxu0 %v2756
      %3634 = vmatprep.subr.bf16.mxu0 0
      %3635 = vmatpush1.bf16.msra.mxu0 %v2753
      %3636 = vmatprep.subr.bf16.mxu0 0
      %3637 = vmatpush1.bf16.msra.mxu0 %v2750
      %3638 = vmatprep.subr.bf16.mxu0 0
      %3639 = vmatpush1.bf16.msra.mxu0 %v2747
      %3640 = vmatprep.subr.bf16.mxu0 0
      %3641 = vmatpush1.bf16.msra.mxu0 %v2744
      %3642 = vmatprep.subr.bf16.mxu0 0
      %3643 = vmatpush1.bf16.msra.mxu0 %v2741
      %3644 = vmatprep.subr.bf16.mxu0 0
      %3645 = vmatpush2.bf16.msra.mxu0 0
      %3646 = vmatprep.subr.bf16.mxu0 0
      %3647 = vmatpush2.bf16.msra.mxu0 0
      %3648 = vmatprep.subr.bf16.mxu0 0
      %3649 = vmatpush2.bf16.msra.mxu0 0
      %3650 = vmatprep.subr.bf16.mxu0 0
      %3651 = vmatpush2.bf16.msra.mxu0 0
      %3652 = vmatprep.subr.bf16.mxu0 0
      %3653 = vmatpush2.bf16.msra.mxu0 0
      %3654 = vmatprep.subr.bf16.mxu0 0
      %3655 = vmatpush2.bf16.msra.mxu0 0
      %3656 = vmatprep.subr.bf16.mxu0 0
      %3657 = vmatpush2.bf16.msra.mxu0 0
      %3658 = vmatprep.subr.bf16.mxu0 0
      %3659 = vmatpush2.bf16.msra.mxu0 0
      %3660 = vmatprep.mubr.bf16.mxu0 0
      %3661 = vmatmul.mubr.bf16.gmra.mxu0 %v3584
      %v3662 = vpop.f32.mrf.mxu0
      %v3663 = vadd.f32 0.0, %v3662
      %v3664 = vpop.f32.mrf.mxu0
      %v3665 = vpop.f32.mrf.mxu0
      %v3666 = vadd.f32 0.0, %v3665
      %v3667 = vpop.f32.mrf.mxu0
      %3668 = vdwg.mxu0
      %v3669 = vadd.f32 %v3578, %v3620
      %v3670 = vadd.f32 %v3581, %v3624
      %v3671 = vxor.u32 %v3669, 2147483648
      %v3672 = vxor.u32 %v3670, 2147483648
      %v3673 = vmul.f32 %v3671, 1.442695
      %v3674 = vpow.pop %v3673
      %v3675 = vmul.f32 %v3672, 1.442695
      %v3676 = vpow.pop %v3675
      %v3677 = vadd.f32 %v3674, 1.0
      %v3678 = vadd.f32 %v3676, 1.0
      %v3679 = vrcp.pop %v3677
      %v3680 = vmul.f32 1.0, %v3679
      %v3681 = vrcp.pop %v3678
      %v3682 = vmul.f32 1.0, %v3681
      %v3683 = vadd.f32 %v3663, %v2153
      %v3684 = vadd.f32 %v3666, %v2153
      %v3685 = vmul.f32 %v3680, %v3683
      %v3686 = vmul.f32 %v3682, %v3684
      %v3687 = vadd.f32 %v3580, %v3685
      %v3688 = vadd.f32 %v3583, %v3686
      %v3689 = vtanh.pop %v3687
      %v3690 = vtanh.pop %v3688
      %v3691 = vadd.f32 %v3579, %v3622
      %v3692 = vadd.f32 %v3582, %v3626
      %v3693 = vxor.u32 %v3691, 2147483648
      %v3694 = vxor.u32 %v3692, 2147483648
      %v3695 = vmul.f32 %v3693, 1.442695
      %v3696 = vpow.pop %v3695
      %v3697 = vmul.f32 %v3694, 1.442695
      %v3698 = vpow.pop %v3697
      %v3699 = vadd.f32 %v3696, 1.0
      %v3700 = vadd.f32 %v3698, 1.0
      %v3701 = vrcp.pop %v3699
      %v3702 = vmul.f32 1.0, %v3701
      %v3703 = vrcp.pop %v3700
      %v3704 = vmul.f32 1.0, %v3703
      %v3705 = vsub.f32 %v3576, %v3689
      %v3706 = vsub.f32 %v3577, %v3690
      %v3707 = vmul.f32 %v3702, %v3705
      %v3708 = vmul.f32 %v3704, %v3706
      %v3709 = vadd.f32 %v3689, %v3707
      %v3710 = vadd.f32 %v3690, %v3708
      %v3711 = vld [vmem:[#allocation3 + $0x150] sm:$0xff]
      %v3712 = vld [vmem:[#allocation3 + $0x158] sm:$0xff]
      %v3713 = vld [vmem:[#allocation3 + $0x160] sm:$0xff]
      %v3714 = vld [vmem:[#allocation3 + $0x168] sm:$0xff]
      %v3715 = vld [vmem:[#allocation3 + $0x170] sm:$0xff]
      %v3716 = vld [vmem:[#allocation3 + $0x178] sm:$0xff]
      %v3717 = vpack.c.bf16 %v3710, %v3709
      %3718 = vmatprep.subr.bf16.mxu0 %v2761
      %3719 = vmatpush1.bf16.msra.mxu0 %v2760
      %3720 = vmatprep.subr.bf16.mxu0 %v2758
      %3721 = vmatpush1.bf16.msra.mxu0 %v2757
      %3722 = vmatprep.subr.bf16.mxu0 %v2755
      %3723 = vmatpush1.bf16.msra.mxu0 %v2754
      %3724 = vmatprep.subr.bf16.mxu0 %v2752
      %3725 = vmatpush1.bf16.msra.mxu0 %v2751
      %3726 = vmatprep.subr.bf16.mxu0 %v2749
      %3727 = vmatpush1.bf16.msra.mxu0 %v2748
      %3728 = vmatprep.subr.bf16.mxu0 %v2746
      %3729 = vmatpush1.bf16.msra.mxu0 %v2745
      %3730 = vmatprep.subr.bf16.mxu0 %v2743
      %3731 = vmatpush1.bf16.msra.mxu0 %v2742
      %3732 = vmatprep.subr.bf16.mxu0 %v2740
      %3733 = vmatpush1.bf16.msra.mxu0 %v2739
      %3734 = vmatprep.subr.bf16.mxu0 0
      %3735 = vmatpush2.bf16.msra.mxu0 0
      %3736 = vmatprep.subr.bf16.mxu0 0
      %3737 = vmatpush2.bf16.msra.mxu0 0
      %3738 = vmatprep.subr.bf16.mxu0 0
      %3739 = vmatpush2.bf16.msra.mxu0 0
      %3740 = vmatprep.subr.bf16.mxu0 0
      %3741 = vmatpush2.bf16.msra.mxu0 0
      %3742 = vmatprep.subr.bf16.mxu0 0
      %3743 = vmatpush2.bf16.msra.mxu0 0
      %3744 = vmatprep.subr.bf16.mxu0 0
      %3745 = vmatpush2.bf16.msra.mxu0 0
      %3746 = vmatprep.subr.bf16.mxu0 0
      %3747 = vmatpush2.bf16.msra.mxu0 0
      %3748 = vmatprep.subr.bf16.mxu0 0
      %3749 = vmatpush2.bf16.msra.mxu0 0
      %3750 = vmatprep.mubr.bf16.mxu0 0
      %3751 = vmatmul.mubr.bf16.gmra.mxu0 %v3717
      %v3752 = vpop.f32.mrf.mxu0
      %v3753 = vadd.f32 0.0, %v3752
      %v3754 = vpop.f32.mrf.mxu0
      %v3755 = vadd.f32 0.0, %v3754
      %v3756 = vpop.f32.mrf.mxu0
      %v3757 = vadd.f32 0.0, %v3756
      %v3758 = vpop.f32.mrf.mxu0
      %v3759 = vadd.f32 0.0, %v3758
      %3760 = vdwg.mxu0
      %3761 = vmatprep.subr.bf16.mxu0 0
      %3762 = vmatpush1.bf16.msra.mxu0 %v2762
      %3763 = vmatprep.subr.bf16.mxu0 0
      %3764 = vmatpush1.bf16.msra.mxu0 %v2759
      %3765 = vmatprep.subr.bf16.mxu0 0
      %3766 = vmatpush1.bf16.msra.mxu0 %v2756
      %3767 = vmatprep.subr.bf16.mxu0 0
      %3768 = vmatpush1.bf16.msra.mxu0 %v2753
      %3769 = vmatprep.subr.bf16.mxu0 0
      %3770 = vmatpush1.bf16.msra.mxu0 %v2750
      %3771 = vmatprep.subr.bf16.mxu0 0
      %3772 = vmatpush1.bf16.msra.mxu0 %v2747
      %3773 = vmatprep.subr.bf16.mxu0 0
      %3774 = vmatpush1.bf16.msra.mxu0 %v2744
      %3775 = vmatprep.subr.bf16.mxu0 0
      %3776 = vmatpush1.bf16.msra.mxu0 %v2741
      %3777 = vmatprep.subr.bf16.mxu0 0
      %3778 = vmatpush2.bf16.msra.mxu0 0
      %3779 = vmatprep.subr.bf16.mxu0 0
      %3780 = vmatpush2.bf16.msra.mxu0 0
      %3781 = vmatprep.subr.bf16.mxu0 0
      %3782 = vmatpush2.bf16.msra.mxu0 0
      %3783 = vmatprep.subr.bf16.mxu0 0
      %3784 = vmatpush2.bf16.msra.mxu0 0
      %3785 = vmatprep.subr.bf16.mxu0 0
      %3786 = vmatpush2.bf16.msra.mxu0 0
      %3787 = vmatprep.subr.bf16.mxu0 0
      %3788 = vmatpush2.bf16.msra.mxu0 0
      %3789 = vmatprep.subr.bf16.mxu0 0
      %3790 = vmatpush2.bf16.msra.mxu0 0
      %3791 = vmatprep.subr.bf16.mxu0 0
      %3792 = vmatpush2.bf16.msra.mxu0 0
      %3793 = vmatprep.mubr.bf16.mxu0 0
      %3794 = vmatmul.mubr.bf16.gmra.mxu0 %v3717
      %v3795 = vpop.f32.mrf.mxu0
      %v3796 = vadd.f32 0.0, %v3795
      %v3797 = vpop.f32.mrf.mxu0
      %v3798 = vpop.f32.mrf.mxu0
      %v3799 = vadd.f32 0.0, %v3798
      %v3800 = vpop.f32.mrf.mxu0
      %3801 = vdwg.mxu0
      %v3802 = vadd.f32 %v3711, %v3753
      %v3803 = vadd.f32 %v3714, %v3757
      %v3804 = vxor.u32 %v3802, 2147483648
      %v3805 = vxor.u32 %v3803, 2147483648
      %v3806 = vmul.f32 %v3804, 1.442695
      %v3807 = vpow.pop %v3806
      %v3808 = vmul.f32 %v3805, 1.442695
      %v3809 = vpow.pop %v3808
      %v3810 = vadd.f32 %v3807, 1.0
      %v3811 = vadd.f32 %v3809, 1.0
      %v3812 = vrcp.pop %v3810
      %v3813 = vmul.f32 1.0, %v3812
      %v3814 = vrcp.pop %v3811
      %v3815 = vmul.f32 1.0, %v3814
      %v3816 = vadd.f32 %v3796, %v2153
      %v3817 = vadd.f32 %v3799, %v2153
      %v3818 = vmul.f32 %v3813, %v3816
      %v3819 = vmul.f32 %v3815, %v3817
      %v3820 = vadd.f32 %v3713, %v3818
      %v3821 = vadd.f32 %v3716, %v3819
      %v3822 = vtanh.pop %v3820
      %v3823 = vtanh.pop %v3821
      %v3824 = vadd.f32 %v3712, %v3755
      %v3825 = vadd.f32 %v3715, %v3759
      %v3826 = vxor.u32 %v3824, 2147483648
      %v3827 = vxor.u32 %v3825, 2147483648
      %v3828 = vmul.f32 %v3826, 1.442695
      %v3829 = vpow.pop %v3828
      %v3830 = vmul.f32 %v3827, 1.442695
      %v3831 = vpow.pop %v3830
      %v3832 = vadd.f32 %v3829, 1.0
      %v3833 = vadd.f32 %v3831, 1.0
      %v3834 = vrcp.pop %v3832
      %v3835 = vmul.f32 1.0, %v3834
      %v3836 = vrcp.pop %v3833
      %v3837 = vmul.f32 1.0, %v3836
      %v3838 = vsub.f32 %v3709, %v3822
      %v3839 = vsub.f32 %v3710, %v3823
      %v3840 = vmul.f32 %v3835, %v3838
      %v3841 = vmul.f32 %v3837, %v3839
      %v3842 = vadd.f32 %v3822, %v3840
      %v3843 = vadd.f32 %v3823, %v3841
      %v3844 = vpack.c.bf16 %v3843, %v3842
      %v3845 = vld [vmem:[%s6] sm:$0xf]
      %v3846 = vld [vmem:[%s6 + $0x4] sm:$0xf]
      %v3847 = vld [vmem:[%s6 + $0x8] sm:$0xf]
      %v3848 = vld [vmem:[%s6 + $0xc] sm:$0xf]
      %v3849 = vld [vmem:[%s6 + $0x10] sm:$0xf]
      %v3850 = vld [vmem:[%s6 + $0x14] sm:$0xf]
      %v3851 = vld [vmem:[%s6 + $0x18] sm:$0xf]
      %v3852 = vld [vmem:[%s6 + $0x1c] sm:$0xf]
      %v3853 = vld [vmem:[%s6 + $0x20] sm:$0xf]
      %v3854 = vld [vmem:[%s6 + $0x24] sm:$0xf]
      %v3855 = vld [vmem:[%s6 + $0x28] sm:$0xf]
      %v3856 = vld [vmem:[%s6 + $0x2c] sm:$0xf]
      %v3857 = vld [vmem:[%s6 + $0x30] sm:$0xf]
      %v3858 = vld [vmem:[%s6 + $0x34] sm:$0xf]
      %v3859 = vld [vmem:[%s6 + $0x38] sm:$0xf]
      %v3860 = vld [vmem:[%s6 + $0x3c] sm:$0xf]
      %v3861 = vld [vmem:[%s7] sm:$0x1]
      %v3863 = vlaneseq
      %v3864 = vshrl.u32 %v3863, 7
      %v3865 = vsub.s32 0, %v3864
      %v3866 = vrot.slane %v3861, %v3865
      %v3884 = vunpack.c.l.b16 %v3845
      %v3885 = vunpack.c.l.b16 %v3846
      %v3886 = vunpack.c.l.b16 %v3847
      %v3887 = vunpack.c.l.b16 %v3848
      %v3888 = vunpack.c.l.b16 %v3849
      %v3889 = vunpack.c.l.b16 %v3850
      %v3890 = vunpack.c.l.b16 %v3851
      %v3891 = vunpack.c.l.b16 %v3852
      %v3892 = vunpack.c.l.b16 %v3853
      %v3893 = vunpack.c.l.b16 %v3854
      %v3894 = vunpack.c.l.b16 %v3855
      %v3895 = vunpack.c.l.b16 %v3856
      %v3896 = vunpack.c.l.b16 %v3857
      %v3897 = vunpack.c.l.b16 %v3858
      %v3898 = vunpack.c.l.b16 %v3859
      %v3899 = vunpack.c.l.b16 %v3860
      %v3900 = vpack.c.b16 %v3885, %v3884
      %v3901 = vpack.c.b16 %v3887, %v3886
      %v3902 = vpack.c.b16 %v3889, %v3888
      %v3903 = vpack.c.b16 %v3891, %v3890
      %v3904 = vpack.c.b16 %v3893, %v3892
      %v3905 = vpack.c.b16 %v3895, %v3894
      %v3906 = vpack.c.b16 %v3897, %v3896
      %v3907 = vpack.c.b16 %v3899, %v3898
      %3916 = vmatprep.subr.bf16.mxu0 0
      %3917 = vmatpush1.bf16.msra.mxu0 %v3907
      %3918 = vmatprep.subr.bf16.mxu0 0
      %3919 = vmatpush1.bf16.msra.mxu0 %v3906
      %3920 = vmatprep.subr.bf16.mxu0 0
      %3921 = vmatpush1.bf16.msra.mxu0 %v3905
      %3922 = vmatprep.subr.bf16.mxu0 0
      %3923 = vmatpush1.bf16.msra.mxu0 %v3904
      %3924 = vmatprep.subr.bf16.mxu0 0
      %3925 = vmatpush1.bf16.msra.mxu0 %v3903
      %3926 = vmatprep.subr.bf16.mxu0 0
      %3927 = vmatpush1.bf16.msra.mxu0 %v3902
      %3928 = vmatprep.subr.bf16.mxu0 0
      %3929 = vmatpush1.bf16.msra.mxu0 %v3901
      %3930 = vmatprep.subr.bf16.mxu0 0
      %3931 = vmatpush1.bf16.msra.mxu0 %v3900
      %3932 = vmatprep.subr.bf16.mxu0 0
      %3933 = vmatpush2.bf16.msra.mxu0 0
      %3934 = vmatprep.subr.bf16.mxu0 0
      %3935 = vmatpush2.bf16.msra.mxu0 0
      %3936 = vmatprep.subr.bf16.mxu0 0
      %3937 = vmatpush2.bf16.msra.mxu0 0
      %3938 = vmatprep.subr.bf16.mxu0 0
      %3939 = vmatpush2.bf16.msra.mxu0 0
      %3940 = vmatprep.subr.bf16.mxu0 0
      %3941 = vmatpush2.bf16.msra.mxu0 0
      %3942 = vmatprep.subr.bf16.mxu0 0
      %3943 = vmatpush2.bf16.msra.mxu0 0
      %3944 = vmatprep.subr.bf16.mxu0 0
      %3945 = vmatpush2.bf16.msra.mxu0 0
      %3946 = vmatprep.subr.bf16.mxu0 0
      %3947 = vmatpush2.bf16.msra.mxu0 0
      %3948 = vmatprep.mubr.bf16.mxu0 0
      %3949 = vmatmul.mubr.bf16.gmra.mxu0 %v3844
      %v3950 = vpop.f32.mrf.mxu0
      %v3951 = vadd.f32 %v3866, %v3950
      %v3952 = vpop.f32.mrf.mxu0
      %v3953 = vpop.f32.mrf.mxu0
      %v3954 = vadd.f32 %v3866, %v3953
      %v3955 = vpop.f32.mrf.mxu0
      %3956 = vdwg.mxu0
      %3957 = vst [vmem:[%s307] sm:$0xff] %v3951
      %3958 = vst [vmem:[%s307 + $0x8] sm:$0xff] %v3954
      %s3959 = smul.u32 2, %s19
      %p3960 = scmp.lt.s32.totalorder %s3959, 3
      %s3961 = scalar_select %p3960, %s3959, 3
      %s3962 = smul.addr %s3961, 8
      %s3963 = scalar_lea.vmem %s8, %s3962
      // Predicated region
      $region53: #{gru_forward_packed.1} parent=51 // pred_check
        %p3964 = pneg %p210
      $region54: #{gru_forward_packed.1} parent=51 // pred_check_branch
        %3966 = sbr.rel (%p3964) target = $region56
      $region55: #{gru_forward_packed.1} parent=51 // pred_region
        %s3967 = smul.u32 2, %s19
      $region56: #{gru_forward_packed.1} parent=51 // pred_fallthru
        _
    $region52: #{gru_forward_packed.1} parent=5 // pred_fallthru
      _
    %p3968 = scmp.le.s32.totalorder 2, %s14
    // Predicated region
    $region57: #{gru_forward_packed.1} parent=5 // pred_check
      %p3969 = pneg %p3968
    $region58: #{gru_forward_packed.1} parent=5 // pred_check_branch
      %3971 = sbr.rel (%p3969) target = $region60
    $region59: #{gru_forward_packed.1} parent=5 // pred_region
      %s3972 = ssub.s32 %s14, 2
      // Predicated region
      $region61: #{gru_forward_packed.1} parent=59 // pred_check
        %p3973 = pneg %p216
      $region62: #{gru_forward_packed.1} parent=59 // pred_check_branch
        %3975 = sbr.rel (%p3973) target = $region64
      $region63: #{gru_forward_packed.1} parent=59 // pred_region
        %s3976 = smul.u32 2, %s20
        %p3977 = scmp.lt.s32.totalorder %s3976, 3
        %s3978 = scalar_select %p3977, %s3976, 3
        %s3979 = smul.addr %s3978, 8
        %s3980 = scalar_lea.vmem %s8, %s3979
      $region64: #{gru_forward_packed.1} parent=59 // pred_fallthru
        _
    $region60: #{gru_forward_packed.1} parent=5 // pred_fallthru
      _
  $region6: #{gru_forward_packed.1} parent=0 // loop_footer
    %s18 = sadd.s32 1, %s14
  $region7: #{gru_forward_packed.1} parent=0 // loop_footer_branch
    %13 = sbr.rel target = $region3
  $region8: #{gru_forward_packed.1} parent=0 // loop_exit
    _

</llo_original>
